<compile_context>
chip_gen: v5e
topology: v5e:2x2
jax: 0.10.0
libtpu: 0.0.40
codegen_flags: <defaults>
</compile_context>

<pallas_src>
import jax
import jax.numpy as jnp
from jax.experimental import pallas as pl
from jax.experimental.pallas import tpu as pltpu  # noqa: F401  (TPU backend)


# -----------------------------------------------------------------------------
# Pallas kernels
# -----------------------------------------------------------------------------
def conv_mm_kernel(p_ref, w_ref, b_ref, o_ref):
    # p_ref: (M, K) im2col patches, w_ref: (K, F), b_ref: (1, F), o_ref: (M, F)
    acc = jnp.dot(p_ref[...], w_ref[...], preferred_element_type=jnp.float32)
    o_ref[...] = jnp.maximum(acc + b_ref[...], 0.0)


def mlp_kernel(x_ref, w1_ref, b1_ref, w2_ref, b2_ref, o_ref):
    # x_ref: (B, fc_in); w1: (fc_in, H); b1: (1, H); w2: (H, out); b2: (1, out)
    h = jnp.dot(x_ref[...], w1_ref[...], preferred_element_type=jnp.float32)
    h = jnp.maximum(h + b1_ref[...], 0.0)
    y = jnp.dot(h, w2_ref[...], preferred_element_type=jnp.float32)
    o_ref[...] = y + b2_ref[...]


def _full_spec(shape):
    # grid=() single program: whole array as one VMEM-resident block.
    return pl.BlockSpec(shape, lambda: tuple(0 for _ in shape))


def conv_relu_pallas(patches, w, b):
    M, K = patches.shape
    F = w.shape[1]
    return pl.pallas_call(
        conv_mm_kernel,
        out_shape=jax.ShapeDtypeStruct((M, F), jnp.float32),
        grid=(),
        in_specs=[_full_spec((M, K)), _full_spec((K, F)), _full_spec((1, F))],
        out_specs=_full_spec((M, F)),
    )(patches, w, b)


def mlp_pallas(x, w1, b1, w2, b2):
    B, fc_in = x.shape
    H = w1.shape[1]
    out_dim = w2.shape[1]
    return pl.pallas_call(
        mlp_kernel,
        out_shape=jax.ShapeDtypeStruct((B, out_dim), jnp.float32),
        grid=(),
        in_specs=[
            _full_spec((B, fc_in)),
            _full_spec((fc_in, H)),
            _full_spec((1, H)),
            _full_spec((H, out_dim)),
            _full_spec((1, out_dim)),
        ],
        out_specs=_full_spec((B, out_dim)),
    )(x, w1, b1, w2, b2)


# -----------------------------------------------------------------------------
# Model wrapper (glue in plain JAX, fully jitted)
# -----------------------------------------------------------------------------
class CNNSmallPallas:
    """Pallas/TPU port of the PyTorch CNN_small module."""

    def __init__(self, in_dim, out_dim, key):
        # in_dim = (C, H, W) with C == 3, matching nn.Conv2d(3, 32, (4, 4)).
        self.in_dim = in_dim
        self.out_dim = out_dim
        self.filters = 32
        self.kh, self.kw = 4, 4
        self.hout = in_dim[1] - self.kh + 1
        self.wout = in_dim[2] - self.kw + 1
        self.hw = self.hout * self.wout
        self.fc_inputs = self.filters * self.hw
        self.hidden = 200

        k = jax.random.split(key, 6)

        def u(key, shape, fan_in):
            bound = 1.0 / jnp.sqrt(fan_in)
            return jax.random.uniform(key, shape, jnp.float32, -bound, bound)

        # conv1 weight in PyTorch layout (F, C, kh, kw), flattened to (C*kh*kw, F)
        conv_w = u(k[0], (self.filters, in_dim[0], self.kh, self.kw),
                   in_dim[0] * self.kh * self.kw)
        self.conv_w = conv_w.reshape(self.filters, -1).T          # (48, 32)
        self.conv_b = u(k[1], (1, self.filters), in_dim[0] * self.kh * self.kw)

        # lin1/lin2 in PyTorch row order (kept for the reference check) ...
        self.w1 = u(k[2], (self.fc_inputs, self.hidden), self.fc_inputs)
        self.b1 = u(k[3], (1, self.hidden), self.fc_inputs)
        self.w2 = u(k[4], (self.hidden, out_dim), self.hidden)
        self.b2 = u(k[5], (1, out_dim), self.hidden)

        # ... and with the NCHW flatten permutation baked in once at init:
        # the conv kernel emits rows (b, hw) x cols f; flattening that to
        # (B, hw*F) is contiguous/free, while PyTorch's .view() order is
        # (f, hw).  Permuting w1 rows (f, hw) -> (hw, f) makes both agree and
        # removes the XLA transpose between the two kernels.
        self.w1p = (self.w1.reshape(self.filters, self.hw, self.hidden)
                    .transpose(1, 0, 2)
                    .reshape(self.fc_inputs, self.hidden))

        self._jit_forward = jax.jit(self._forward)

    def _im2col(self, x):
        # x: (B, C, H, W) -> (B*Hout*Wout, C*kh*kw); patch-element order
        # (C, kh, kw) matches the flattened PyTorch conv weight.  Under jit
        # this fuses into one small copy feeding the conv kernel.
        B, C, _, _ = x.shape
        cols = []
        for di in range(self.kh):
            for dj in range(self.kw):
                cols.append(x[:, :, di:di + self.hout, dj:dj + self.wout])
        stk = jnp.stack(cols, axis=0).transpose(1, 3, 4, 2, 0)  # (B,Ho,Wo,C,kh*kw)
        return stk.reshape(B * self.hw, C * self.kh * self.kw)

    def _forward(self, x):
        B = x.shape[0]
        patches = self._im2col(x.astype(jnp.float32))                  # (B*HW, 48)
        conv_out = conv_relu_pallas(patches, self.conv_w, self.conv_b)  # (B*HW, 32)
        # Contiguous row-major reshape (b, hw) x f -> b x (hw, f): free bitcast.
        flat = conv_out.reshape(B, self.fc_inputs)                     # (B, 5408)
        return mlp_pallas(flat, self.w1p, self.b1, self.w2, self.b2)

    def __call__(self, x):
        return self._jit_forward(x)


if __name__ == "__main__":
    key = jax.random.PRNGKey(0)
    k_param, k_x = jax.random.split(key)

    in_dim = (3, 16, 16)   # (C, H, W) -> conv output 32 x 13 x 13
    out_dim = 10
    batch = 2

    model = CNNSmallPallas(in_dim, out_dim, k_param)
    x = jax.random.normal(k_x, (batch,) + in_dim, dtype=jnp.float32)

    y = jax.block_until_ready(model(x))
    assert y.shape == (batch, out_dim), y.shape

    # Pure-JAX reference of the same math (PyTorch semantics, original w1 order).
    ref_conv = jax.lax.conv_general_dilated(
        x, model.conv_w.T.reshape(model.filters, in_dim[0], model.kh, model.kw),
        (1, 1), "VALID", dimension_numbers=("NCHW", "OIHW", "NCHW"))
    ref_conv = jnp.maximum(
        ref_conv + model.conv_b.reshape(1, model.filters, 1, 1), 0.0)
    ref = ref_conv.reshape(batch, -1)          # PyTorch .view(B, -1): (f, h, w)
    ref = jnp.maximum(ref @ model.w1 + model.b1, 0.0)
    ref = ref @ model.w2 + model.b2
    err = float(jnp.max(jnp.abs(y - ref)))
    assert jnp.allclose(y, ref, atol=1e-3, rtol=1e-3), err

    print("KERNEL_OK")
</pallas_src>

<mosaic_0001>
module attributes {stable_mosaic.version = 11 : i64} {
  func.func @conv_mm_kernel(%arg0: memref<338x48xf32, #tpu.memory_space<vmem>>, %arg1: memref<48x32xf32, #tpu.memory_space<vmem>>, %arg2: memref<1x32xf32, #tpu.memory_space<vmem>>, %arg3: memref<338x32xf32, #tpu.memory_space<vmem>>) attributes {dimension_semantics = [], scalar_prefetch = 0 : i64, scratch_operands = 0 : i64, tpu.core_type = #tpu.core_type<tc>} {
    %c0 = arith.constant 0 : index
    %c0_0 = arith.constant 0 : index
    %0 = vector.load %arg0[%c0, %c0_0] : memref<338x48xf32, #tpu.memory_space<vmem>>, vector<338x48xf32>
    %c0_1 = arith.constant 0 : index
    %c0_2 = arith.constant 0 : index
    %1 = vector.load %arg1[%c0_1, %c0_2] : memref<48x32xf32, #tpu.memory_space<vmem>>, vector<48x32xf32>
    %cst = arith.constant dense<0.000000e+00> : vector<338x32xf32>
    %2 = tpu.matmul %0, %1, %cst {dimension_numbers = #tpu.dot_dimension_numbers<[1], [0], [0], [1], [0, 0, 1, 1], [], []>} : vector<338x48xf32>, vector<48x32xf32>, vector<338x32xf32> -> vector<338x32xf32>
    %c0_3 = arith.constant 0 : index
    %c0_4 = arith.constant 0 : index
    %3 = vector.load %arg2[%c0_3, %c0_4] : memref<1x32xf32, #tpu.memory_space<vmem>>, vector<1x32xf32>
    %4 = vector.broadcast %3 : vector<1x32xf32> to vector<338x32xf32>
    %5 = arith.addf %2, %4 : vector<338x32xf32>
    %cst_5 = arith.constant 0.000000e+00 : f32
    %6 = vector.broadcast %cst_5 : f32 to vector<338x32xf32>
    %7 = arith.maximumf %5, %6 : vector<338x32xf32>
    %c0_6 = arith.constant 0 : index
    %c0_7 = arith.constant 0 : index
    %8 = vector.load %arg3[%c0_6, %c0_7] : memref<338x32xf32, #tpu.memory_space<vmem>>, vector<338x32xf32>
    tpu.vector_store %arg3[%c0_6, %c0_7], %7 {strides = array<i32>} : memref<338x32xf32, #tpu.memory_space<vmem>>, vector<338x32xf32>,
    return
  }
}

module attributes {stable_mosaic.version = 11 : i64} {
  func.func @mlp_kernel(%arg0: memref<2x5408xf32, #tpu.memory_space<vmem>>, %arg1: memref<5408x200xf32, #tpu.memory_space<vmem>>, %arg2: memref<1x200xf32, #tpu.memory_space<vmem>>, %arg3: memref<200x10xf32, #tpu.memory_space<vmem>>, %arg4: memref<1x10xf32, #tpu.memory_space<vmem>>, %arg5: memref<2x10xf32, #tpu.memory_space<vmem>>) attributes {dimension_semantics = [], scalar_prefetch = 0 : i64, scratch_operands = 0 : i64, tpu.core_type = #tpu.core_type<tc>} {
    %c0 = arith.constant 0 : index
    %c0_0 = arith.constant 0 : index
    %0 = vector.load %arg0[%c0, %c0_0] : memref<2x5408xf32, #tpu.memory_space<vmem>>, vector<2x5408xf32>
    %c0_1 = arith.constant 0 : index
    %c0_2 = arith.constant 0 : index
    %1 = vector.load %arg1[%c0_1, %c0_2] : memref<5408x200xf32, #tpu.memory_space<vmem>>, vector<5408x200xf32>
    %cst = arith.constant dense<0.000000e+00> : vector<2x200xf32>
    %2 = tpu.matmul %0, %1, %cst {dimension_numbers = #tpu.dot_dimension_numbers<[1], [0], [0], [1], [0, 0, 1, 1], [], []>} : vector<2x5408xf32>, vector<5408x200xf32>, vector<2x200xf32> -> vector<2x200xf32>
    %c0_3 = arith.constant 0 : index
    %c0_4 = arith.constant 0 : index
    %3 = vector.load %arg2[%c0_3, %c0_4] : memref<1x200xf32, #tpu.memory_space<vmem>>, vector<1x200xf32>
    %4 = vector.broadcast %3 : vector<1x200xf32> to vector<2x200xf32>
    %5 = arith.addf %2, %4 : vector<2x200xf32>
    %cst_5 = arith.constant 0.000000e+00 : f32
    %6 = vector.broadcast %cst_5 : f32 to vector<2x200xf32>
    %7 = arith.maximumf %5, %6 : vector<2x200xf32>
    %c0_6 = arith.constant 0 : index
    %c0_7 = arith.constant 0 : index
    %8 = vector.load %arg3[%c0_6, %c0_7] : memref<200x10xf32, #tpu.memory_space<vmem>>, vector<200x10xf32>
    %cst_8 = arith.constant dense<0.000000e+00> : vector<2x10xf32>
    %9 = tpu.matmul %7, %8, %cst_8 {dimension_numbers = #tpu.dot_dimension_numbers<[1], [0], [0], [1], [0, 0, 1, 1], [], []>} : vector<2x200xf32>, vector<200x10xf32>, vector<2x10xf32> -> vector<2x10xf32>
    %c0_9 = arith.constant 0 : index
    %c0_10 = arith.constant 0 : index
    %10 = vector.load %arg4[%c0_9, %c0_10] : memref<1x10xf32, #tpu.memory_space<vmem>>, vector<1x10xf32>
    %11 = vector.broadcast %10 : vector<1x10xf32> to vector<2x10xf32>
    %12 = arith.addf %9, %11 : vector<2x10xf32>
    %c0_11 = arith.constant 0 : index
    %c0_12 = arith.constant 0 : index
    %13 = vector.load %arg5[%c0_11, %c0_12] : memref<2x10xf32, #tpu.memory_space<vmem>>, vector<2x10xf32>
    tpu.vector_store %arg5[%c0_11, %c0_12], %12 {strides = array<i32>} : memref<2x10xf32, #tpu.memory_space<vmem>>, vector<2x10xf32>,
    return
  }
}

</mosaic_0001>

<llo_original>
// kernel: _forward.2
$region0: #{_forward.2}
  #allocation0 [shape = 'u32[]', space=smem, size = 0x4, offset = 0x4, fixed_abs, tag = 'smem constant byte address 0x4 - core index']
  #allocation1 [shape = 'u32[72,128]{1,0:T(1,128)}', space=vmem, size = 0x9000, scoped, tag = 'internal scratch']
  %s0 = inlined_call_operand.vmem [shape: f32[338,48], index: 0, kind: input, shape index: {}]
  %s1 = inlined_call_operand.hbm [shape: f32[48,32], index: 1, kind: input, shape index: {}]
  %s2 = inlined_call_operand.hbm [shape: f32[1,32], index: 2, kind: input, shape index: {}]
  %s3 = inlined_call_operand.vmem [shape: f32[338,32], index: 3, kind: output, shape index: {}]
  %s4 = sld [smem:[#allocation0]]
  $region30: #{_forward.2} parent=0
    _
  %s6 = ssub.s32 1, %s4
  %s7 = scalar_select 0, %s6, %s4
  $region1: #{_forward.2} parent=0
    #allocation2 [shape = 'u8[24576]{0}', space=vmem, size = 0x6000, scoped, tag = 'input window, operand 1, single buffered']
    #allocation3 [shape = 's32[1]{0}', space=sflag, size = 0x4, scoped, tag = 'scoped memory for _forward.2']
    #allocation4 [shape = 'u8[512]{0}', space=vmem, size = 0x400, scoped, tag = 'input window, operand 2, single buffered']
    #allocation5 [shape = 's32[1]{0}', space=sflag, size = 0x4, scoped, tag = 'scoped memory for _forward.2']
    %8 = vsyncpa [#allocation3], 0
    %9 = vsyncpa [#allocation5], 0
    // Predicated region
    $region2: #{_forward.2} parent=1 // pred_check
      _
    $region3: #{_forward.2} parent=1 // pred_check_branch
      %11 = sbr.rel (0) target = $region5
    $region4: #{_forward.2} parent=1 // pred_region
      _
    $region5: #{_forward.2} parent=1 // pred_fallthru
      _
    // Predicated region
    $region6: #{_forward.2} parent=1 // pred_check
      _
    $region7: #{_forward.2} parent=1 // pred_check_branch
      %13 = sbr.rel (0) target = $region9
    $region8: #{_forward.2} parent=1 // pred_region
      %15 = vsyncadd [#allocation3], 0
      %s16 = sshll.u32 %s1, 4
      %s17 = int_to_ptr.hbm [resolvable:$true] %s16
      %s18 = sshll.u32 [#allocation2], 4
      %s19 = int_to_ptr.vmem [resolvable:$true] %s18
      %24 = dma.hbm_to_vmem [thread:$0]  %s17, 768, %s19, [#allocation3], 128, 128, 8
    $region9: #{_forward.2} parent=1 // pred_fallthru
      _
    // Predicated region
    $region10: #{_forward.2} parent=1 // pred_check
      _
    $region11: #{_forward.2} parent=1 // pred_check_branch
      %26 = sbr.rel (0) target = $region13
    $region12: #{_forward.2} parent=1 // pred_region
      %28 = vsyncadd [#allocation5], 0
      %s30 = sshll.u32 %s2, 4
      %s31 = int_to_ptr.hbm [resolvable:$true] %s30
      %s32 = sshll.u32 [#allocation4], 4
      %s33 = int_to_ptr.vmem [resolvable:$true] %s32
      %35 = dma.hbm_to_vmem [thread:$0]  %s31, 16, %s33, [#allocation5]
    $region13: #{_forward.2} parent=1 // pred_fallthru
      _
    // Predicated region
    $region14: #{_forward.2} parent=1 // pred_check
      _
    $region15: #{_forward.2} parent=1 // pred_check_branch
      %37 = sbr.rel (0) target = $region17
    $region16: #{_forward.2} parent=1 // pred_region
      %39 = dma.done [#allocation3], 768
    $region17: #{_forward.2} parent=1 // pred_fallthru
      _
    // Predicated region
    $region18: #{_forward.2} parent=1 // pred_check
      _
    $region19: #{_forward.2} parent=1 // pred_check_branch
      %41 = sbr.rel (0) target = $region21
    $region20: #{_forward.2} parent=1 // pred_region
      %43 = dma.done [#allocation5], 16
    $region21: #{_forward.2} parent=1 // pred_fallthru
      _
    %v44 = vld [vmem:[%s0] sm:$0xff]
    %v45 = vld [vmem:[%s0 + $0x8] sm:$0xff]
    %v46 = vld [vmem:[%s0 + $0x10] sm:$0xff]
    %v47 = vld [vmem:[%s0 + $0x18] sm:$0xff]
    %v48 = vld [vmem:[%s0 + $0x20] sm:$0xff]
    %v49 = vld [vmem:[%s0 + $0x28] sm:$0xff]
    %v50 = vld [vmem:[%s0 + $0x30] sm:$0xff]
    %v51 = vld [vmem:[%s0 + $0x38] sm:$0xff]
    %v52 = vld [vmem:[%s0 + $0x40] sm:$0xff]
    %v53 = vld [vmem:[%s0 + $0x48] sm:$0xff]
    %v54 = vld [vmem:[%s0 + $0x50] sm:$0xff]
    %v55 = vld [vmem:[%s0 + $0x58] sm:$0xff]
    %v56 = vld [vmem:[%s0 + $0x60] sm:$0xff]
    %v57 = vld [vmem:[%s0 + $0x68] sm:$0xff]
    %v58 = vld [vmem:[%s0 + $0x70] sm:$0xff]
    %v59 = vld [vmem:[%s0 + $0x78] sm:$0xff]
    %v60 = vld [vmem:[%s0 + $0x80] sm:$0xff]
    %v61 = vld [vmem:[%s0 + $0x88] sm:$0xff]
    %v62 = vld [vmem:[%s0 + $0x90] sm:$0xff]
    %v63 = vld [vmem:[%s0 + $0x98] sm:$0xff]
    %v64 = vld [vmem:[%s0 + $0xa0] sm:$0xff]
    %v65 = vld [vmem:[%s0 + $0xa8] sm:$0xff]
    %v66 = vld [vmem:[%s0 + $0xb0] sm:$0xff]
    %v67 = vld [vmem:[%s0 + $0xb8] sm:$0xff]
    %v68 = vld [vmem:[%s0 + $0xc0] sm:$0xff]
    %v69 = vld [vmem:[%s0 + $0xc8] sm:$0xff]
    %v70 = vld [vmem:[%s0 + $0xd0] sm:$0xff]
    %v71 = vld [vmem:[%s0 + $0xd8] sm:$0xff]
    %v72 = vld [vmem:[%s0 + $0xe0] sm:$0xff]
    %v73 = vld [vmem:[%s0 + $0xe8] sm:$0xff]
    %v74 = vld [vmem:[%s0 + $0xf0] sm:$0xff]
    %v75 = vld [vmem:[%s0 + $0xf8] sm:$0xff]
    %v76 = vld [vmem:[%s0 + $0x100] sm:$0xff]
    %v77 = vld [vmem:[%s0 + $0x108] sm:$0xff]
    %v78 = vld [vmem:[%s0 + $0x110] sm:$0xff]
    %v79 = vld [vmem:[%s0 + $0x118] sm:$0xff]
    %v80 = vld [vmem:[%s0 + $0x120] sm:$0xff]
    %v81 = vld [vmem:[%s0 + $0x128] sm:$0xff]
    %v82 = vld [vmem:[%s0 + $0x130] sm:$0xff]
    %v83 = vld [vmem:[%s0 + $0x138] sm:$0xff]
    %v84 = vld [vmem:[%s0 + $0x140] sm:$0xff]
    %v85 = vld [vmem:[%s0 + $0x148] sm:$0xff]
    %v86 = vld [vmem:[%s0 + $0x150] sm:$0x3]
    %v87 = vld [vmem:[#allocation2] sm:$0xff]
    %v88 = vld [vmem:[#allocation2 + $0x8] sm:$0xff]
    %v89 = vld [vmem:[#allocation2 + $0x10] sm:$0xff]
    %v90 = vld [vmem:[#allocation2 + $0x18] sm:$0xff]
    %v91 = vld [vmem:[#allocation2 + $0x20] sm:$0xff]
    %v92 = vld [vmem:[#allocation2 + $0x28] sm:$0xff]
    %v93 = vld [vmem:[#allocation4] sm:$0x1]
    %v95 = vperm.slane %v93, 0
    %vm97 = vcmask 392192
    %v99 = vsel %vm97, %v44, 0
    %v102 = vsel %vm97, %v45, 0
    %v105 = vsel %vm97, %v46, 0
    %v108 = vsel %vm97, %v47, 0
    %v111 = vsel %vm97, %v48, 0
    %v114 = vsel %vm97, %v49, 0
    %v117 = vsel %vm97, %v50, 0
    %v120 = vsel %vm97, %v51, 0
    %v123 = vsel %vm97, %v52, 0
    %v126 = vsel %vm97, %v53, 0
    %v129 = vsel %vm97, %v54, 0
    %v132 = vsel %vm97, %v55, 0
    %v135 = vsel %vm97, %v56, 0
    %v138 = vsel %vm97, %v57, 0
    %v141 = vsel %vm97, %v58, 0
    %v144 = vsel %vm97, %v59, 0
    %v147 = vsel %vm97, %v60, 0
    %v150 = vsel %vm97, %v61, 0
    %v153 = vsel %vm97, %v62, 0
    %v156 = vsel %vm97, %v63, 0
    %v159 = vsel %vm97, %v64, 0
    %v162 = vsel %vm97, %v65, 0
    %v165 = vsel %vm97, %v66, 0
    %v168 = vsel %vm97, %v67, 0
    %v171 = vsel %vm97, %v68, 0
    %v174 = vsel %vm97, %v69, 0
    %v177 = vsel %vm97, %v70, 0
    %v180 = vsel %vm97, %v71, 0
    %v183 = vsel %vm97, %v72, 0
    %v186 = vsel %vm97, %v73, 0
    %v189 = vsel %vm97, %v74, 0
    %v192 = vsel %vm97, %v75, 0
    %v195 = vsel %vm97, %v76, 0
    %v198 = vsel %vm97, %v77, 0
    %v201 = vsel %vm97, %v78, 0
    %v204 = vsel %vm97, %v79, 0
    %v207 = vsel %vm97, %v80, 0
    %v210 = vsel %vm97, %v81, 0
    %v213 = vsel %vm97, %v82, 0
    %v216 = vsel %vm97, %v83, 0
    %v219 = vsel %vm97, %v84, 0
    %v222 = vsel %vm97, %v85, 0
    %v225 = vsel %vm97, %v86, 0
    %227 = vmatpush.msra.mxu0 0.0
    %228 = vmatpush.msra.mxu0 0.0
    %229 = vmatpush.msra.mxu0 0.0
    %230 = vmatpush.msra.mxu0 0.0
    %231 = vmatpush.msra.mxu0 0.0
    %232 = vmatpush.msra.mxu0 0.0
    %233 = vmatpush.msra.mxu0 0.0
    %234 = vmatpush.msra.mxu0 0.0
    %235 = vmatpush.msra.mxu0 0.0
    %236 = vmatpush.msra.mxu0 0.0
    %237 = vmatpush.msra.mxu0 %v92
    %238 = vmatpush.msra.mxu0 %v91
    %239 = vmatpush.msra.mxu0 %v90
    %240 = vmatpush.msra.mxu0 %v89
    %241 = vmatpush.msra.mxu0 %v88
    %242 = vmatpush.msra.mxu0 %v87
    %243 = vmatmul.f32.gmra.mxu0 %v99
    %v244 = vpop.f32.mrf.mxu0
    %v245 = vadd.f32 %v95, %v244
    %246 = vmatmul.f32.gmra.mxu0 %v102
    %v247 = vpop.f32.mrf.mxu0
    %v248 = vadd.f32 %v95, %v247
    %249 = vmatmul.f32.gmra.mxu0 %v105
    %v250 = vpop.f32.mrf.mxu0
    %v251 = vadd.f32 %v95, %v250
    %252 = vmatmul.f32.gmra.mxu0 %v108
    %v253 = vpop.f32.mrf.mxu0
    %v254 = vadd.f32 %v95, %v253
    %255 = vmatmul.f32.gmra.mxu0 %v111
    %v256 = vpop.f32.mrf.mxu0
    %v257 = vadd.f32 %v95, %v256
    %258 = vmatmul.f32.gmra.mxu0 %v114
    %v259 = vpop.f32.mrf.mxu0
    %v260 = vadd.f32 %v95, %v259
    %261 = vmatmul.f32.gmra.mxu0 %v117
    %v262 = vpop.f32.mrf.mxu0
    %v263 = vadd.f32 %v95, %v262
    %264 = vmatmul.f32.gmra.mxu0 %v120
    %v265 = vpop.f32.mrf.mxu0
    %v266 = vadd.f32 %v95, %v265
    %267 = vmatmul.f32.gmra.mxu0 %v123
    %v268 = vpop.f32.mrf.mxu0
    %v269 = vadd.f32 %v95, %v268
    %270 = vmatmul.f32.gmra.mxu0 %v126
    %v271 = vpop.f32.mrf.mxu0
    %v272 = vadd.f32 %v95, %v271
    %273 = vmatmul.f32.gmra.mxu0 %v129
    %v274 = vpop.f32.mrf.mxu0
    %v275 = vadd.f32 %v95, %v274
    %276 = vmatmul.f32.gmra.mxu0 %v132
    %v277 = vpop.f32.mrf.mxu0
    %v278 = vadd.f32 %v95, %v277
    %279 = vmatmul.f32.gmra.mxu0 %v135
    %v280 = vpop.f32.mrf.mxu0
    %v281 = vadd.f32 %v95, %v280
    %282 = vmatmul.f32.gmra.mxu0 %v138
    %v283 = vpop.f32.mrf.mxu0
    %v284 = vadd.f32 %v95, %v283
    %285 = vmatmul.f32.gmra.mxu0 %v141
    %v286 = vpop.f32.mrf.mxu0
    %v287 = vadd.f32 %v95, %v286
    %288 = vmatmul.f32.gmra.mxu0 %v144
    %v289 = vpop.f32.mrf.mxu0
    %v290 = vadd.f32 %v95, %v289
    %291 = vmatmul.f32.gmra.mxu0 %v147
    %v292 = vpop.f32.mrf.mxu0
    %v293 = vadd.f32 %v95, %v292
    %294 = vmatmul.f32.gmra.mxu0 %v150
    %v295 = vpop.f32.mrf.mxu0
    %v296 = vadd.f32 %v95, %v295
    %297 = vmatmul.f32.gmra.mxu0 %v153
    %v298 = vpop.f32.mrf.mxu0
    %v299 = vadd.f32 %v95, %v298
    %300 = vmatmul.f32.gmra.mxu0 %v156
    %v301 = vpop.f32.mrf.mxu0
    %v302 = vadd.f32 %v95, %v301
    %303 = vmatmul.f32.gmra.mxu0 %v159
    %v304 = vpop.f32.mrf.mxu0
    %v305 = vadd.f32 %v95, %v304
    %306 = vmatmul.f32.gmra.mxu0 %v162
    %v307 = vpop.f32.mrf.mxu0
    %v308 = vadd.f32 %v95, %v307
    %309 = vmatmul.f32.gmra.mxu0 %v165
    %v310 = vpop.f32.mrf.mxu0
    %v311 = vadd.f32 %v95, %v310
    %312 = vmatmul.f32.gmra.mxu0 %v168
    %v313 = vpop.f32.mrf.mxu0
    %v314 = vadd.f32 %v95, %v313
    %315 = vmatmul.f32.gmra.mxu0 %v171
    %v316 = vpop.f32.mrf.mxu0
    %v317 = vadd.f32 %v95, %v316
    %318 = vmatmul.f32.gmra.mxu0 %v174
    %v319 = vpop.f32.mrf.mxu0
    %v320 = vadd.f32 %v95, %v319
    %321 = vmatmul.f32.gmra.mxu0 %v177
    %v322 = vpop.f32.mrf.mxu0
    %v323 = vadd.f32 %v95, %v322
    %324 = vmatmul.f32.gmra.mxu0 %v180
    %v325 = vpop.f32.mrf.mxu0
    %v326 = vadd.f32 %v95, %v325
    %327 = vmatmul.f32.gmra.mxu0 %v183
    %v328 = vpop.f32.mrf.mxu0
    %v329 = vadd.f32 %v95, %v328
    %330 = vmatmul.f32.gmra.mxu0 %v186
    %v331 = vpop.f32.mrf.mxu0
    %v332 = vadd.f32 %v95, %v331
    %333 = vmatmul.f32.gmra.mxu0 %v189
    %v334 = vpop.f32.mrf.mxu0
    %v335 = vadd.f32 %v95, %v334
    %336 = vmatmul.f32.gmra.mxu0 %v192
    %v337 = vpop.f32.mrf.mxu0
    %v338 = vadd.f32 %v95, %v337
    %339 = vmatmul.f32.gmra.mxu0 %v195
    %v340 = vpop.f32.mrf.mxu0
    %v341 = vadd.f32 %v95, %v340
    %342 = vmatmul.f32.gmra.mxu0 %v198
    %v343 = vpop.f32.mrf.mxu0
    %v344 = vadd.f32 %v95, %v343
    %345 = vmatmul.f32.gmra.mxu0 %v201
    %v346 = vpop.f32.mrf.mxu0
    %v347 = vadd.f32 %v95, %v346
    %348 = vmatmul.f32.gmra.mxu0 %v204
    %v349 = vpop.f32.mrf.mxu0
    %v350 = vadd.f32 %v95, %v349
    %351 = vmatmul.f32.gmra.mxu0 %v207
    %v352 = vpop.f32.mrf.mxu0
    %v353 = vadd.f32 %v95, %v352
    %354 = vmatmul.f32.gmra.mxu0 %v210
    %v355 = vpop.f32.mrf.mxu0
    %v356 = vadd.f32 %v95, %v355
    %357 = vmatmul.f32.gmra.mxu0 %v213
    %v358 = vpop.f32.mrf.mxu0
    %v359 = vadd.f32 %v95, %v358
    %360 = vmatmul.f32.gmra.mxu0 %v216
    %v361 = vpop.f32.mrf.mxu0
    %v362 = vadd.f32 %v95, %v361
    %363 = vmatmul.f32.gmra.mxu0 %v219
    %v364 = vpop.f32.mrf.mxu0
    %v365 = vadd.f32 %v95, %v364
    %366 = vmatmul.f32.gmra.mxu0 %v222
    %v367 = vpop.f32.mrf.mxu0
    %v368 = vadd.f32 %v95, %v367
    %369 = vmatmul.f32.gmra.mxu0 %v225
    %v370 = vpop.f32.mrf.mxu0
    %v371 = vadd.f32 %v95, %v370
    %372 = vdwg.mxu0
    %v373 = vmax.f32 %v245, 0.0
    %v374 = vmax.f32 %v248, 0.0
    %v375 = vmax.f32 %v251, 0.0
    %v376 = vmax.f32 %v254, 0.0
    %v377 = vmax.f32 %v257, 0.0
    %v378 = vmax.f32 %v260, 0.0
    %v379 = vmax.f32 %v263, 0.0
    %v380 = vmax.f32 %v266, 0.0
    %v381 = vmax.f32 %v269, 0.0
    %v382 = vmax.f32 %v272, 0.0
    %v383 = vmax.f32 %v275, 0.0
    %v384 = vmax.f32 %v278, 0.0
    %v385 = vmax.f32 %v281, 0.0
    %v386 = vmax.f32 %v284, 0.0
    %v387 = vmax.f32 %v287, 0.0
    %v388 = vmax.f32 %v290, 0.0
    %v389 = vmax.f32 %v293, 0.0
    %v390 = vmax.f32 %v296, 0.0
    %v391 = vmax.f32 %v299, 0.0
    %v392 = vmax.f32 %v302, 0.0
    %v393 = vmax.f32 %v305, 0.0
    %v394 = vmax.f32 %v308, 0.0
    %v395 = vmax.f32 %v311, 0.0
    %v396 = vmax.f32 %v314, 0.0
    %v397 = vmax.f32 %v317, 0.0
    %v398 = vmax.f32 %v320, 0.0
    %v399 = vmax.f32 %v323, 0.0
    %v400 = vmax.f32 %v326, 0.0
    %v401 = vmax.f32 %v329, 0.0
    %v402 = vmax.f32 %v332, 0.0
    %v403 = vmax.f32 %v335, 0.0
    %v404 = vmax.f32 %v338, 0.0
    %v405 = vmax.f32 %v341, 0.0
    %v406 = vmax.f32 %v344, 0.0
    %v407 = vmax.f32 %v347, 0.0
    %v408 = vmax.f32 %v350, 0.0
    %v409 = vmax.f32 %v353, 0.0
    %v410 = vmax.f32 %v356, 0.0
    %v411 = vmax.f32 %v359, 0.0
    %v412 = vmax.f32 %v362, 0.0
    %v413 = vmax.f32 %v365, 0.0
    %v414 = vmax.f32 %v368, 0.0
    %v415 = vmax.f32 %v371, 0.0
    %vm416 = vcmask 261120
    %417 = vst.msk [vmem:[%s3] sm:$0xff] %vm416, %v373
    %418 = vst.msk [vmem:[%s3 + $0x8] sm:$0xff] %vm416, %v374
    %419 = vst.msk [vmem:[%s3 + $0x10] sm:$0xff] %vm416, %v375
    %420 = vst.msk [vmem:[%s3 + $0x18] sm:$0xff] %vm416, %v376
    %421 = vst.msk [vmem:[%s3 + $0x20] sm:$0xff] %vm416, %v377
    %422 = vst.msk [vmem:[%s3 + $0x28] sm:$0xff] %vm416, %v378
    %423 = vst.msk [vmem:[%s3 + $0x30] sm:$0xff] %vm416, %v379
    %424 = vst.msk [vmem:[%s3 + $0x38] sm:$0xff] %vm416, %v380
    %425 = vst.msk [vmem:[%s3 + $0x40] sm:$0xff] %vm416, %v381
    %426 = vst.msk [vmem:[%s3 + $0x48] sm:$0xff] %vm416, %v382
    %427 = vst.msk [vmem:[%s3 + $0x50] sm:$0xff] %vm416, %v383
    %428 = vst.msk [vmem:[%s3 + $0x58] sm:$0xff] %vm416, %v384
    %429 = vst.msk [vmem:[%s3 + $0x60] sm:$0xff] %vm416, %v385
    %430 = vst.msk [vmem:[%s3 + $0x68] sm:$0xff] %vm416, %v386
    %431 = vst.msk [vmem:[%s3 + $0x70] sm:$0xff] %vm416, %v387
    %432 = vst.msk [vmem:[%s3 + $0x78] sm:$0xff] %vm416, %v388
    %433 = vst.msk [vmem:[%s3 + $0x80] sm:$0xff] %vm416, %v389
    %434 = vst.msk [vmem:[%s3 + $0x88] sm:$0xff] %vm416, %v390
    %435 = vst.msk [vmem:[%s3 + $0x90] sm:$0xff] %vm416, %v391
    %436 = vst.msk [vmem:[%s3 + $0x98] sm:$0xff] %vm416, %v392
    %437 = vst.msk [vmem:[%s3 + $0xa0] sm:$0xff] %vm416, %v393
    %438 = vst.msk [vmem:[%s3 + $0xa8] sm:$0xff] %vm416, %v394
    %439 = vst.msk [vmem:[%s3 + $0xb0] sm:$0xff] %vm416, %v395
    %440 = vst.msk [vmem:[%s3 + $0xb8] sm:$0xff] %vm416, %v396
    %441 = vst.msk [vmem:[%s3 + $0xc0] sm:$0xff] %vm416, %v397
    %442 = vst.msk [vmem:[%s3 + $0xc8] sm:$0xff] %vm416, %v398
    %443 = vst.msk [vmem:[%s3 + $0xd0] sm:$0xff] %vm416, %v399
    %444 = vst.msk [vmem:[%s3 + $0xd8] sm:$0xff] %vm416, %v400
    %445 = vst.msk [vmem:[%s3 + $0xe0] sm:$0xff] %vm416, %v401
    %446 = vst.msk [vmem:[%s3 + $0xe8] sm:$0xff] %vm416, %v402
    %447 = vst.msk [vmem:[%s3 + $0xf0] sm:$0xff] %vm416, %v403
    %448 = vst.msk [vmem:[%s3 + $0xf8] sm:$0xff] %vm416, %v404
    %449 = vst.msk [vmem:[%s3 + $0x100] sm:$0xff] %vm416, %v405
    %450 = vst.msk [vmem:[%s3 + $0x108] sm:$0xff] %vm416, %v406
    %451 = vst.msk [vmem:[%s3 + $0x110] sm:$0xff] %vm416, %v407
    %452 = vst.msk [vmem:[%s3 + $0x118] sm:$0xff] %vm416, %v408
    %453 = vst.msk [vmem:[%s3 + $0x120] sm:$0xff] %vm416, %v409
    %454 = vst.msk [vmem:[%s3 + $0x128] sm:$0xff] %vm416, %v410
    %455 = vst.msk [vmem:[%s3 + $0x130] sm:$0xff] %vm416, %v411
    %456 = vst.msk [vmem:[%s3 + $0x138] sm:$0xff] %vm416, %v412
    %457 = vst.msk [vmem:[%s3 + $0x140] sm:$0xff] %vm416, %v413
    %458 = vst.msk [vmem:[%s3 + $0x148] sm:$0xff] %vm416, %v414
    %vm459 = vcmask 254976
    %460 = vst.msk [vmem:[%s3 + $0x150] sm:$0x3] %vm459, %v415
    // Predicated region
    $region22: #{_forward.2} parent=1 // pred_check
      _
    $region23: #{_forward.2} parent=1 // pred_check_branch
      %462 = sbr.rel (0) target = $region25
    $region24: #{_forward.2} parent=1 // pred_region
      _
    $region25: #{_forward.2} parent=1 // pred_fallthru
      _
    // Predicated region
    $region26: #{_forward.2} parent=1 // pred_check
      _
    $region27: #{_forward.2} parent=1 // pred_check_branch
      %464 = sbr.rel (0) target = $region29
    $region28: #{_forward.2} parent=1 // pred_region
      _
    $region29: #{_forward.2} parent=1 // pred_fallthru
      _
    %465 = vsyncpa [#allocation3], 1
    %466 = vsyncpa [#allocation5], 1

// kernel: _forward.3
$region0: #{_forward.3}
  #allocation0 [shape = 'u32[]', space=smem, size = 0x4, offset = 0x4, fixed_abs, tag = 'smem constant byte address 0x4 - core index']
  #allocation1 [shape = 'u32[72,128]{1,0:T(1,128)}', space=vmem, size = 0x9000, scoped, tag = 'internal scratch']
  %s0 = inlined_call_operand.vmem [shape: f32[2,5408], index: 0, kind: input, shape index: {}]
  %s1 = inlined_call_operand.hbm [shape: f32[5408,200], index: 1, kind: input, shape index: {}]
  %s2 = inlined_call_operand.hbm [shape: f32[1,200], index: 2, kind: input, shape index: {}]
  %s3 = inlined_call_operand.hbm [shape: f32[200,10], index: 3, kind: input, shape index: {}]
  %s4 = inlined_call_operand.hbm [shape: f32[1,10], index: 4, kind: input, shape index: {}]
  %s5 = inlined_call_operand.hbm [shape: f32[2,10], index: 5, kind: output, shape index: {}]
  %s6 = sld [smem:[#allocation0]]
  $region46: #{_forward.3} parent=0
    _
  %s8 = ssub.s32 1, %s6
  %s9 = scalar_select 0, %s8, %s6
  $region1: #{_forward.3} parent=0
    #allocation2 [shape = 'u8[5537792]{0}', space=vmem, size = 0x548000, scoped, tag = 'input window, operand 1, single buffered']
    #allocation3 [shape = 's32[1]{0}', space=sflag, size = 0x4, scoped, tag = 'scoped memory for _forward.3']
    #allocation4 [shape = 's32[1]{0}', space=sflag, size = 0x4, scoped, tag = 'scoped memory for _forward.3']
    #allocation5 [shape = 'u8[1024]{0}', space=vmem, size = 0x400, scoped, tag = 'input window, operand 2, single buffered']
    #allocation6 [shape = 's32[1]{0}', space=sflag, size = 0x4, scoped, tag = 'scoped memory for _forward.3']
    #allocation7 [shape = 'u8[102400]{0}', space=vmem, size = 0x19000, scoped, tag = 'input window, operand 3, single buffered']
    #allocation8 [shape = 'u8[512]{0}', space=vmem, size = 0x400, scoped, tag = 'input window, operand 4, single buffered']
    #allocation9 [shape = 's32[1]{0}', space=sflag, size = 0x4, scoped, tag = 'scoped memory for _forward.3']
    #allocation10 [shape = 'u8[1024]{0}', space=vmem, size = 0x400, scoped, tag = 'output window, operand 0, single buffered']
    %10 = vsyncpa [#allocation3], 0
    %11 = vsyncpa [#allocation6], 0
    %12 = vsyncpa [#allocation9], 0
    %13 = vsyncpa [#allocation4], 0
    // Predicated region
    $region2: #{_forward.3} parent=1 // pred_check
      _
    $region3: #{_forward.3} parent=1 // pred_check_branch
      %15 = sbr.rel (0) target = $region5
    $region4: #{_forward.3} parent=1 // pred_region
      _
    $region5: #{_forward.3} parent=1 // pred_fallthru
      _
    // Predicated region
    $region6: #{_forward.3} parent=1 // pred_check
      _
    $region7: #{_forward.3} parent=1 // pred_check_branch
      %17 = sbr.rel (0) target = $region9
    $region8: #{_forward.3} parent=1 // pred_region
      %19 = vsyncadd [#allocation3], 0
      %s20 = sshll.u32 %s1, 4
      %s21 = int_to_ptr.hbm [resolvable:$true] %s20
      %s22 = sshll.u32 [#allocation2], 4
      %s23 = int_to_ptr.vmem [resolvable:$true] %s22
      %28 = dma.hbm_to_vmem [thread:$0]  %s21, 173056, %s23, [#allocation3], 256, 256, 16
    $region9: #{_forward.3} parent=1 // pred_fallthru
      _
    // Predicated region
    $region10: #{_forward.3} parent=1 // pred_check
      _
    $region11: #{_forward.3} parent=1 // pred_check_branch
      %30 = sbr.rel (0) target = $region13
    $region12: #{_forward.3} parent=1 // pred_region
      %32 = vsyncadd [#allocation6], 0
      %s34 = sshll.u32 %s2, 4
      %s35 = int_to_ptr.hbm [resolvable:$true] %s34
      %s36 = sshll.u32 [#allocation5], 4
      %s37 = int_to_ptr.vmem [resolvable:$true] %s36
      %39 = dma.hbm_to_vmem [thread:$0]  %s35, 32, %s37, [#allocation6]
    $region13: #{_forward.3} parent=1 // pred_fallthru
      _
    // Predicated region
    $region14: #{_forward.3} parent=1 // pred_check
      _
    $region15: #{_forward.3} parent=1 // pred_check_branch
      %41 = sbr.rel (0) target = $region17
    $region16: #{_forward.3} parent=1 // pred_region
      %43 = vsyncadd [#allocation6], 0
      %s44 = sshll.u32 %s3, 4
      %s45 = int_to_ptr.hbm [resolvable:$true] %s44
      %s46 = sshll.u32 [#allocation7], 4
      %s47 = int_to_ptr.vmem [resolvable:$true] %s46
      %52 = dma.hbm_to_vmem [thread:$0]  %s45, 3200, %s47, [#allocation6], 128, 128, 8
    $region17: #{_forward.3} parent=1 // pred_fallthru
      _
    // Predicated region
    $region18: #{_forward.3} parent=1 // pred_check
      _
    $region19: #{_forward.3} parent=1 // pred_check_branch
      %54 = sbr.rel (0) target = $region21
    $region20: #{_forward.3} parent=1 // pred_region
      %56 = vsyncadd [#allocation9], 0
      %s58 = sshll.u32 %s4, 4
      %s59 = int_to_ptr.hbm [resolvable:$true] %s58
      %s60 = sshll.u32 [#allocation8], 4
      %s61 = int_to_ptr.vmem [resolvable:$true] %s60
      %63 = dma.hbm_to_vmem [thread:$0]  %s59, 16, %s61, [#allocation9]
    $region21: #{_forward.3} parent=1 // pred_fallthru
      _
    // Predicated region
    $region22: #{_forward.3} parent=1 // pred_check
      _
    $region23: #{_forward.3} parent=1 // pred_check_branch
      %65 = sbr.rel (0) target = $region25
    $region24: #{_forward.3} parent=1 // pred_region
      %67 = dma.done [#allocation3], 173056
    $region25: #{_forward.3} parent=1 // pred_fallthru
      _
    // Predicated region
    $region26: #{_forward.3} parent=1 // pred_check
      _
    $region27: #{_forward.3} parent=1 // pred_check_branch
      %69 = sbr.rel (0) target = $region29
    $region28: #{_forward.3} parent=1 // pred_region
      %71 = dma.done [#allocation6], 32
    $region29: #{_forward.3} parent=1 // pred_fallthru
      _
    // Predicated region
    $region30: #{_forward.3} parent=1 // pred_check
      _
    $region31: #{_forward.3} parent=1 // pred_check_branch
      %73 = sbr.rel (0) target = $region33
    $region32: #{_forward.3} parent=1 // pred_region
      %75 = dma.done [#allocation6], 3200
    $region33: #{_forward.3} parent=1 // pred_fallthru
      _
    // Predicated region
    $region34: #{_forward.3} parent=1 // pred_check
      _
    $region35: #{_forward.3} parent=1 // pred_check_branch
      %77 = sbr.rel (0) target = $region37
    $region36: #{_forward.3} parent=1 // pred_region
      %79 = dma.done [#allocation9], 16
    $region37: #{_forward.3} parent=1 // pred_fallthru
      _
    %v80 = vld [vmem:[%s0] sm:$0xff]
    %v81 = vld [vmem:[%s0 + $0x8] sm:$0xff]
    %v82 = vld [vmem:[%s0 + $0x10] sm:$0xff]
    %v83 = vld [vmem:[%s0 + $0x18] sm:$0xff]
    %v84 = vld [vmem:[%s0 + $0x20] sm:$0xff]
    %v85 = vld [vmem:[%s0 + $0x28] sm:$0xff]
    %v86 = vld [vmem:[%s0 + $0x30] sm:$0xff]
    %v87 = vld [vmem:[%s0 + $0x38] sm:$0xff]
    %v88 = vld [vmem:[%s0 + $0x40] sm:$0xff]
    %v89 = vld [vmem:[%s0 + $0x48] sm:$0xff]
    %v90 = vld [vmem:[%s0 + $0x50] sm:$0x3f]
    %v91 = vld [vmem:[#allocation2] sm:$0xff]
    %v92 = vld [vmem:[#allocation2 + $0x8] sm:$0xff]
    %v93 = vld [vmem:[#allocation2 + $0x10] sm:$0xff]
    %v94 = vld [vmem:[#allocation2 + $0x18] sm:$0xff]
    %v95 = vld [vmem:[#allocation2 + $0x20] sm:$0xff]
    %v96 = vld [vmem:[#allocation2 + $0x28] sm:$0xff]
    %v97 = vld [vmem:[#allocation2 + $0x30] sm:$0xff]
    %v98 = vld [vmem:[#allocation2 + $0x38] sm:$0xff]
    %v99 = vld [vmem:[#allocation2 + $0x40] sm:$0xff]
    %v100 = vld [vmem:[#allocation2 + $0x48] sm:$0xff]
    %v101 = vld [vmem:[#allocation2 + $0x50] sm:$0xff]
    %v102 = vld [vmem:[#allocation2 + $0x58] sm:$0xff]
    %v103 = vld [vmem:[#allocation2 + $0x60] sm:$0xff]
    %v104 = vld [vmem:[#allocation2 + $0x68] sm:$0xff]
    %v105 = vld [vmem:[#allocation2 + $0x70] sm:$0xff]
    %v106 = vld [vmem:[#allocation2 + $0x78] sm:$0xff]
    %v107 = vld [vmem:[#allocation2 + $0x80] sm:$0xff]
    %v108 = vld [vmem:[#allocation2 + $0x88] sm:$0xff]
    %v109 = vld [vmem:[#allocation2 + $0x90] sm:$0xff]
    %v110 = vld [vmem:[#allocation2 + $0x98] sm:$0xff]
    %v111 = vld [vmem:[#allocation2 + $0xa0] sm:$0xff]
    %v112 = vld [vmem:[#allocation2 + $0xa8] sm:$0xff]
    %v113 = vld [vmem:[#allocation2 + $0xb0] sm:$0xff]
    %v114 = vld [vmem:[#allocation2 + $0xb8] sm:$0xff]
    %v115 = vld [vmem:[#allocation2 + $0xc0] sm:$0xff]
    %v116 = vld [vmem:[#allocation2 + $0xc8] sm:$0xff]
    %v117 = vld [vmem:[#allocation2 + $0xd0] sm:$0xff]
    %v118 = vld [vmem:[#allocation2 + $0xd8] sm:$0xff]
    %v119 = vld [vmem:[#allocation2 + $0xe0] sm:$0xff]
    %v120 = vld [vmem:[#allocation2 + $0xe8] sm:$0xff]
    %v121 = vld [vmem:[#allocation2 + $0xf0] sm:$0xff]
    %v122 = vld [vmem:[#allocation2 + $0xf8] sm:$0xff]
    %v123 = vld [vmem:[#allocation2 + $0x100] sm:$0xff]
    %v124 = vld [vmem:[#allocation2 + $0x108] sm:$0xff]
    %v125 = vld [vmem:[#allocation2 + $0x110] sm:$0xff]
    %v126 = vld [vmem:[#allocation2 + $0x118] sm:$0xff]
    %v127 = vld [vmem:[#allocation2 + $0x120] sm:$0xff]
    %v128 = vld [vmem:[#allocation2 + $0x128] sm:$0xff]
    %v129 = vld [vmem:[#allocation2 + $0x130] sm:$0xff]
    %v130 = vld [vmem:[#allocation2 + $0x138] sm:$0xff]
    %v131 = vld [vmem:[#allocation2 + $0x140] sm:$0xff]
    %v132 = vld [vmem:[#allocation2 + $0x148] sm:$0xff]
    %v133 = vld [vmem:[#allocation2 + $0x150] sm:$0xff]
    %v134 = vld [vmem:[#allocation2 + $0x158] sm:$0xff]
    %v135 = vld [vmem:[#allocation2 + $0x160] sm:$0xff]
    %v136 = vld [vmem:[#allocation2 + $0x168] sm:$0xff]
    %v137 = vld [vmem:[#allocation2 + $0x170] sm:$0xff]
    %v138 = vld [vmem:[#allocation2 + $0x178] sm:$0xff]
    %v139 = vld [vmem:[#allocation2 + $0x180] sm:$0xff]
    %v140 = vld [vmem:[#allocation2 + $0x188] sm:$0xff]
    %v141 = vld [vmem:[#allocation2 + $0x190] sm:$0xff]
    %v142 = vld [vmem:[#allocation2 + $0x198] sm:$0xff]
    %v143 = vld [vmem:[#allocation2 + $0x1a0] sm:$0xff]
    %v144 = vld [vmem:[#allocation2 + $0x1a8] sm:$0xff]
    %v145 = vld [vmem:[#allocation2 + $0x1b0] sm:$0xff]
    %v146 = vld [vmem:[#allocation2 + $0x1b8] sm:$0xff]
    %v147 = vld [vmem:[#allocation2 + $0x1c0] sm:$0xff]
    %v148 = vld [vmem:[#allocation2 + $0x1c8] sm:$0xff]
    %v149 = vld [vmem:[#allocation2 + $0x1d0] sm:$0xff]
    %v150 = vld [vmem:[#allocation2 + $0x1d8] sm:$0xff]
    %v151 = vld [vmem:[#allocation2 + $0x1e0] sm:$0xff]
    %v152 = vld [vmem:[#allocation2 + $0x1e8] sm:$0xff]
    %v153 = vld [vmem:[#allocation2 + $0x1f0] sm:$0xff]
    %v154 = vld [vmem:[#allocation2 + $0x1f8] sm:$0xff]
    %v155 = vld [vmem:[#allocation2 + $0x200] sm:$0xff]
    %v156 = vld [vmem:[#allocation2 + $0x208] sm:$0xff]
    %v157 = vld [vmem:[#allocation2 + $0x210] sm:$0xff]
    %v158 = vld [vmem:[#allocation2 + $0x218] sm:$0xff]
    %v159 = vld [vmem:[#allocation2 + $0x220] sm:$0xff]
    %v160 = vld [vmem:[#allocation2 + $0x228] sm:$0xff]
    %v161 = vld [vmem:[#allocation2 + $0x230] sm:$0xff]
    %v162 = vld [vmem:[#allocation2 + $0x238] sm:$0xff]
    %v163 = vld [vmem:[#allocation2 + $0x240] sm:$0xff]
    %v164 = vld [vmem:[#allocation2 + $0x248] sm:$0xff]
    %v165 = vld [vmem:[#allocation2 + $0x250] sm:$0xff]
    %v166 = vld [vmem:[#allocation2 + $0x258] sm:$0xff]
    %v167 = vld [vmem:[#allocation2 + $0x260] sm:$0xff]
    %v168 = vld [vmem:[#allocation2 + $0x268] sm:$0xff]
    %v169 = vld [vmem:[#allocation2 + $0x270] sm:$0xff]
    %v170 = vld [vmem:[#allocation2 + $0x278] sm:$0xff]
    %v171 = vld [vmem:[#allocation2 + $0x280] sm:$0xff]
    %v172 = vld [vmem:[#allocation2 + $0x288] sm:$0xff]
    %v173 = vld [vmem:[#allocation2 + $0x290] sm:$0xff]
    %v174 = vld [vmem:[#allocation2 + $0x298] sm:$0xff]
    %v175 = vld [vmem:[#allocation2 + $0x2a0] sm:$0xff]
    %v176 = vld [vmem:[#allocation2 + $0x2a8] sm:$0xff]
    %v177 = vld [vmem:[#allocation2 + $0x2b0] sm:$0xff]
    %v178 = vld [vmem:[#allocation2 + $0x2b8] sm:$0xff]
    %v179 = vld [vmem:[#allocation2 + $0x2c0] sm:$0xff]
    %v180 = vld [vmem:[#allocation2 + $0x2c8] sm:$0xff]
    %v181 = vld [vmem:[#allocation2 + $0x2d0] sm:$0xff]
    %v182 = vld [vmem:[#allocation2 + $0x2d8] sm:$0xff]
    %v183 = vld [vmem:[#allocation2 + $0x2e0] sm:$0xff]
    %v184 = vld [vmem:[#allocation2 + $0x2e8] sm:$0xff]
    %v185 = vld [vmem:[#allocation2 + $0x2f0] sm:$0xff]
    %v186 = vld [vmem:[#allocation2 + $0x2f8] sm:$0xff]
    %v187 = vld [vmem:[#allocation2 + $0x300] sm:$0xff]
    %v188 = vld [vmem:[#allocation2 + $0x308] sm:$0xff]
    %v189 = vld [vmem:[#allocation2 + $0x310] sm:$0xff]
    %v190 = vld [vmem:[#allocation2 + $0x318] sm:$0xff]
    %v191 = vld [vmem:[#allocation2 + $0x320] sm:$0xff]
    %v192 = vld [vmem:[#allocation2 + $0x328] sm:$0xff]
    %v193 = vld [vmem:[#allocation2 + $0x330] sm:$0xff]
    %v194 = vld [vmem:[#allocation2 + $0x338] sm:$0xff]
    %v195 = vld [vmem:[#allocation2 + $0x340] sm:$0xff]
    %v196 = vld [vmem:[#allocation2 + $0x348] sm:$0xff]
    %v197 = vld [vmem:[#allocation2 + $0x350] sm:$0xff]
    %v198 = vld [vmem:[#allocation2 + $0x358] sm:$0xff]
    %v199 = vld [vmem:[#allocation2 + $0x360] sm:$0xff]
    %v200 = vld [vmem:[#allocation2 + $0x368] sm:$0xff]
    %v201 = vld [vmem:[#allocation2 + $0x370] sm:$0xff]
    %v202 = vld [vmem:[#allocation2 + $0x378] sm:$0xff]
    %v203 = vld [vmem:[#allocation2 + $0x380] sm:$0xff]
    %v204 = vld [vmem:[#allocation2 + $0x388] sm:$0xff]
    %v205 = vld [vmem:[#allocation2 + $0x390] sm:$0xff]
    %v206 = vld [vmem:[#allocation2 + $0x398] sm:$0xff]
    %v207 = vld [vmem:[#allocation2 + $0x3a0] sm:$0xff]
    %v208 = vld [vmem:[#allocation2 + $0x3a8] sm:$0xff]
    %v209 = vld [vmem:[#allocation2 + $0x3b0] sm:$0xff]
    %v210 = vld [vmem:[#allocation2 + $0x3b8] sm:$0xff]
    %v211 = vld [vmem:[#allocation2 + $0x3c0] sm:$0xff]
    %v212 = vld [vmem:[#allocation2 + $0x3c8] sm:$0xff]
    %v213 = vld [vmem:[#allocation2 + $0x3d0] sm:$0xff]
    %v214 = vld [vmem:[#allocation2 + $0x3d8] sm:$0xff]
    %v215 = vld [vmem:[#allocation2 + $0x3e0] sm:$0xff]
    %v216 = vld [vmem:[#allocation2 + $0x3e8] sm:$0xff]
    %v217 = vld [vmem:[#allocation2 + $0x3f0] sm:$0xff]
    %v218 = vld [vmem:[#allocation2 + $0x3f8] sm:$0xff]
    %v219 = vld [vmem:[#allocation2 + $0x400] sm:$0xff]
    %v220 = vld [vmem:[#allocation2 + $0x408] sm:$0xff]
    %v221 = vld [vmem:[#allocation2 + $0x410] sm:$0xff]
    %v222 = vld [vmem:[#allocation2 + $0x418] sm:$0xff]
    %v223 = vld [vmem:[#allocation2 + $0x420] sm:$0xff]
    %v224 = vld [vmem:[#allocation2 + $0x428] sm:$0xff]
    %v225 = vld [vmem:[#allocation2 + $0x430] sm:$0xff]
    %v226 = vld [vmem:[#allocation2 + $0x438] sm:$0xff]
    %v227 = vld [vmem:[#allocation2 + $0x440] sm:$0xff]
    %v228 = vld [vmem:[#allocation2 + $0x448] sm:$0xff]
    %v229 = vld [vmem:[#allocation2 + $0x450] sm:$0xff]
    %v230 = vld [vmem:[#allocation2 + $0x458] sm:$0xff]
    %v231 = vld [vmem:[#allocation2 + $0x460] sm:$0xff]
    %v232 = vld [vmem:[#allocation2 + $0x468] sm:$0xff]
    %v233 = vld [vmem:[#allocation2 + $0x470] sm:$0xff]
    %v234 = vld [vmem:[#allocation2 + $0x478] sm:$0xff]
    %v235 = vld [vmem:[#allocation2 + $0x480] sm:$0xff]
    %v236 = vld [vmem:[#allocation2 + $0x488] sm:$0xff]
    %v237 = vld [vmem:[#allocation2 + $0x490] sm:$0xff]
    %v238 = vld [vmem:[#allocation2 + $0x498] sm:$0xff]
    %v239 = vld [vmem:[#allocation2 + $0x4a0] sm:$0xff]
    %v240 = vld [vmem:[#allocation2 + $0x4a8] sm:$0xff]
    %v241 = vld [vmem:[#allocation2 + $0x4b0] sm:$0xff]
    %v242 = vld [vmem:[#allocation2 + $0x4b8] sm:$0xff]
    %v243 = vld [vmem:[#allocation2 + $0x4c0] sm:$0xff]
    %v244 = vld [vmem:[#allocation2 + $0x4c8] sm:$0xff]
    %v245 = vld [vmem:[#allocation2 + $0x4d0] sm:$0xff]
    %v246 = vld [vmem:[#allocation2 + $0x4d8] sm:$0xff]
    %v247 = vld [vmem:[#allocation2 + $0x4e0] sm:$0xff]
    %v248 = vld [vmem:[#allocation2 + $0x4e8] sm:$0xff]
    %v249 = vld [vmem:[#allocation2 + $0x4f0] sm:$0xff]
    %v250 = vld [vmem:[#allocation2 + $0x4f8] sm:$0xff]
    %v251 = vld [vmem:[#allocation2 + $0x500] sm:$0xff]
    %v252 = vld [vmem:[#allocation2 + $0x508] sm:$0xff]
    %v253 = vld [vmem:[#allocation2 + $0x510] sm:$0xff]
    %v254 = vld [vmem:[#allocation2 + $0x518] sm:$0xff]
    %v255 = vld [vmem:[#allocation2 + $0x520] sm:$0xff]
    %v256 = vld [vmem:[#allocation2 + $0x528] sm:$0xff]
    %v257 = vld [vmem:[#allocation2 + $0x530] sm:$0xff]
    %v258 = vld [vmem:[#allocation2 + $0x538] sm:$0xff]
    %v259 = vld [vmem:[#allocation2 + $0x540] sm:$0xff]
    %v260 = vld [vmem:[#allocation2 + $0x548] sm:$0xff]
    %v261 = vld [vmem:[#allocation2 + $0x550] sm:$0xff]
    %v262 = vld [vmem:[#allocation2 + $0x558] sm:$0xff]
    %v263 = vld [vmem:[#allocation2 + $0x560] sm:$0xff]
    %v264 = vld [vmem:[#allocation2 + $0x568] sm:$0xff]
    %v265 = vld [vmem:[#allocation2 + $0x570] sm:$0xff]
    %v266 = vld [vmem:[#allocation2 + $0x578] sm:$0xff]
    %v267 = vld [vmem:[#allocation2 + $0x580] sm:$0xff]
    %v268 = vld [vmem:[#allocation2 + $0x588] sm:$0xff]
    %v269 = vld [vmem:[#allocation2 + $0x590] sm:$0xff]
    %v270 = vld [vmem:[#allocation2 + $0x598] sm:$0xff]
    %v271 = vld [vmem:[#allocation2 + $0x5a0] sm:$0xff]
    %v272 = vld [vmem:[#allocation2 + $0x5a8] sm:$0xff]
    %v273 = vld [vmem:[#allocation2 + $0x5b0] sm:$0xff]
    %v274 = vld [vmem:[#allocation2 + $0x5b8] sm:$0xff]
    %v275 = vld [vmem:[#allocation2 + $0x5c0] sm:$0xff]
    %v276 = vld [vmem:[#allocation2 + $0x5c8] sm:$0xff]
    %v277 = vld [vmem:[#allocation2 + $0x5d0] sm:$0xff]
    %v278 = vld [vmem:[#allocation2 + $0x5d8] sm:$0xff]
    %v279 = vld [vmem:[#allocation2 + $0x5e0] sm:$0xff]
    %v280 = vld [vmem:[#allocation2 + $0x5e8] sm:$0xff]
    %v281 = vld [vmem:[#allocation2 + $0x5f0] sm:$0xff]
    %v282 = vld [vmem:[#allocation2 + $0x5f8] sm:$0xff]
    %v283 = vld [vmem:[#allocation2 + $0x600] sm:$0xff]
    %v284 = vld [vmem:[#allocation2 + $0x608] sm:$0xff]
    %v285 = vld [vmem:[#allocation2 + $0x610] sm:$0xff]
    %v286 = vld [vmem:[#allocation2 + $0x618] sm:$0xff]
    %v287 = vld [vmem:[#allocation2 + $0x620] sm:$0xff]
    %v288 = vld [vmem:[#allocation2 + $0x628] sm:$0xff]
    %v289 = vld [vmem:[#allocation2 + $0x630] sm:$0xff]
    %v290 = vld [vmem:[#allocation2 + $0x638] sm:$0xff]
    %v291 = vld [vmem:[#allocation2 + $0x640] sm:$0xff]
    %v292 = vld [vmem:[#allocation2 + $0x648] sm:$0xff]
    %v293 = vld [vmem:[#allocation2 + $0x650] sm:$0xff]
    %v294 = vld [vmem:[#allocation2 + $0x658] sm:$0xff]
    %v295 = vld [vmem:[#allocation2 + $0x660] sm:$0xff]
    %v296 = vld [vmem:[#allocation2 + $0x668] sm:$0xff]
    %v297 = vld [vmem:[#allocation2 + $0x670] sm:$0xff]
    %v298 = vld [vmem:[#allocation2 + $0x678] sm:$0xff]
    %v299 = vld [vmem:[#allocation2 + $0x680] sm:$0xff]
    %v300 = vld [vmem:[#allocation2 + $0x688] sm:$0xff]
    %v301 = vld [vmem:[#allocation2 + $0x690] sm:$0xff]
    %v302 = vld [vmem:[#allocation2 + $0x698] sm:$0xff]
    %v303 = vld [vmem:[#allocation2 + $0x6a0] sm:$0xff]
    %v304 = vld [vmem:[#allocation2 + $0x6a8] sm:$0xff]
    %v305 = vld [vmem:[#allocation2 + $0x6b0] sm:$0xff]
    %v306 = vld [vmem:[#allocation2 + $0x6b8] sm:$0xff]
    %v307 = vld [vmem:[#allocation2 + $0x6c0] sm:$0xff]
    %v308 = vld [vmem:[#allocation2 + $0x6c8] sm:$0xff]
    %v309 = vld [vmem:[#allocation2 + $0x6d0] sm:$0xff]
    %v310 = vld [vmem:[#allocation2 + $0x6d8] sm:$0xff]
    %v311 = vld [vmem:[#allocation2 + $0x6e0] sm:$0xff]
    %v312 = vld [vmem:[#allocation2 + $0x6e8] sm:$0xff]
    %v313 = vld [vmem:[#allocation2 + $0x6f0] sm:$0xff]
    %v314 = vld [vmem:[#allocation2 + $0x6f8] sm:$0xff]
    %v315 = vld [vmem:[#allocation2 + $0x700] sm:$0xff]
    %v316 = vld [vmem:[#allocation2 + $0x708] sm:$0xff]
    %v317 = vld [vmem:[#allocation2 + $0x710] sm:$0xff]
    %v318 = vld [vmem:[#allocation2 + $0x718] sm:$0xff]
    %v319 = vld [vmem:[#allocation2 + $0x720] sm:$0xff]
    %v320 = vld [vmem:[#allocation2 + $0x728] sm:$0xff]
    %v321 = vld [vmem:[#allocation2 + $0x730] sm:$0xff]
    %v322 = vld [vmem:[#allocation2 + $0x738] sm:$0xff]
    %v323 = vld [vmem:[#allocation2 + $0x740] sm:$0xff]
    %v324 = vld [vmem:[#allocation2 + $0x748] sm:$0xff]
    %v325 = vld [vmem:[#allocation2 + $0x750] sm:$0xff]
    %v326 = vld [vmem:[#allocation2 + $0x758] sm:$0xff]
    %v327 = vld [vmem:[#allocation2 + $0x760] sm:$0xff]
    %v328 = vld [vmem:[#allocation2 + $0x768] sm:$0xff]
    %v329 = vld [vmem:[#allocation2 + $0x770] sm:$0xff]
    %v330 = vld [vmem:[#allocation2 + $0x778] sm:$0xff]
    %v331 = vld [vmem:[#allocation2 + $0x780] sm:$0xff]
    %v332 = vld [vmem:[#allocation2 + $0x788] sm:$0xff]
    %v333 = vld [vmem:[#allocation2 + $0x790] sm:$0xff]
    %v334 = vld [vmem:[#allocation2 + $0x798] sm:$0xff]
    %v335 = vld [vmem:[#allocation2 + $0x7a0] sm:$0xff]
    %v336 = vld [vmem:[#allocation2 + $0x7a8] sm:$0xff]
    %v337 = vld [vmem:[#allocation2 + $0x7b0] sm:$0xff]
    %v338 = vld [vmem:[#allocation2 + $0x7b8] sm:$0xff]
    %v339 = vld [vmem:[#allocation2 + $0x7c0] sm:$0xff]
    %v340 = vld [vmem:[#allocation2 + $0x7c8] sm:$0xff]
    %v341 = vld [vmem:[#allocation2 + $0x7d0] sm:$0xff]
    %v342 = vld [vmem:[#allocation2 + $0x7d8] sm:$0xff]
    %v343 = vld [vmem:[#allocation2 + $0x7e0] sm:$0xff]
    %v344 = vld [vmem:[#allocation2 + $0x7e8] sm:$0xff]
    %v345 = vld [vmem:[#allocation2 + $0x7f0] sm:$0xff]
    %v346 = vld [vmem:[#allocation2 + $0x7f8] sm:$0xff]
    %v347 = vld [vmem:[#allocation2 + $0x800] sm:$0xff]
    %v348 = vld [vmem:[#allocation2 + $0x808] sm:$0xff]
    %v349 = vld [vmem:[#allocation2 + $0x810] sm:$0xff]
    %v350 = vld [vmem:[#allocation2 + $0x818] sm:$0xff]
    %v351 = vld [vmem:[#allocation2 + $0x820] sm:$0xff]
    %v352 = vld [vmem:[#allocation2 + $0x828] sm:$0xff]
    %v353 = vld [vmem:[#allocation2 + $0x830] sm:$0xff]
    %v354 = vld [vmem:[#allocation2 + $0x838] sm:$0xff]
    %v355 = vld [vmem:[#allocation2 + $0x840] sm:$0xff]
    %v356 = vld [vmem:[#allocation2 + $0x848] sm:$0xff]
    %v357 = vld [vmem:[#allocation2 + $0x850] sm:$0xff]
    %v358 = vld [vmem:[#allocation2 + $0x858] sm:$0xff]
    %v359 = vld [vmem:[#allocation2 + $0x860] sm:$0xff]
    %v360 = vld [vmem:[#allocation2 + $0x868] sm:$0xff]
    %v361 = vld [vmem:[#allocation2 + $0x870] sm:$0xff]
    %v362 = vld [vmem:[#allocation2 + $0x878] sm:$0xff]
    %v363 = vld [vmem:[#allocation2 + $0x880] sm:$0xff]
    %v364 = vld [vmem:[#allocation2 + $0x888] sm:$0xff]
    %v365 = vld [vmem:[#allocation2 + $0x890] sm:$0xff]
    %v366 = vld [vmem:[#allocation2 + $0x898] sm:$0xff]
    %v367 = vld [vmem:[#allocation2 + $0x8a0] sm:$0xff]
    %v368 = vld [vmem:[#allocation2 + $0x8a8] sm:$0xff]
    %v369 = vld [vmem:[#allocation2 + $0x8b0] sm:$0xff]
    %v370 = vld [vmem:[#allocation2 + $0x8b8] sm:$0xff]
    %v371 = vld [vmem:[#allocation2 + $0x8c0] sm:$0xff]
    %v372 = vld [vmem:[#allocation2 + $0x8c8] sm:$0xff]
    %v373 = vld [vmem:[#allocation2 + $0x8d0] sm:$0xff]
    %v374 = vld [vmem:[#allocation2 + $0x8d8] sm:$0xff]
    %v375 = vld [vmem:[#allocation2 + $0x8e0] sm:$0xff]
    %v376 = vld [vmem:[#allocation2 + $0x8e8] sm:$0xff]
    %v377 = vld [vmem:[#allocation2 + $0x8f0] sm:$0xff]
    %v378 = vld [vmem:[#allocation2 + $0x8f8] sm:$0xff]
    %v379 = vld [vmem:[#allocation2 + $0x900] sm:$0xff]
    %v380 = vld [vmem:[#allocation2 + $0x908] sm:$0xff]
    %v381 = vld [vmem:[#allocation2 + $0x910] sm:$0xff]
    %v382 = vld [vmem:[#allocation2 + $0x918] sm:$0xff]
    %v383 = vld [vmem:[#allocation2 + $0x920] sm:$0xff]
    %v384 = vld [vmem:[#allocation2 + $0x928] sm:$0xff]
    %v385 = vld [vmem:[#allocation2 + $0x930] sm:$0xff]
    %v386 = vld [vmem:[#allocation2 + $0x938] sm:$0xff]
    %v387 = vld [vmem:[#allocation2 + $0x940] sm:$0xff]
    %v388 = vld [vmem:[#allocation2 + $0x948] sm:$0xff]
    %v389 = vld [vmem:[#allocation2 + $0x950] sm:$0xff]
    %v390 = vld [vmem:[#allocation2 + $0x958] sm:$0xff]
    %v391 = vld [vmem:[#allocation2 + $0x960] sm:$0xff]
    %v392 = vld [vmem:[#allocation2 + $0x968] sm:$0xff]
    %v393 = vld [vmem:[#allocation2 + $0x970] sm:$0xff]
    %v394 = vld [vmem:[#allocation2 + $0x978] sm:$0xff]
    %v395 = vld [vmem:[#allocation2 + $0x980] sm:$0xff]
    %v396 = vld [vmem:[#allocation2 + $0x988] sm:$0xff]
    %v397 = vld [vmem:[#allocation2 + $0x990] sm:$0xff]
    %v398 = vld [vmem:[#allocation2 + $0x998] sm:$0xff]
    %v399 = vld [vmem:[#allocation2 + $0x9a0] sm:$0xff]
    %v400 = vld [vmem:[#allocation2 + $0x9a8] sm:$0xff]
    %v401 = vld [vmem:[#allocation2 + $0x9b0] sm:$0xff]
    %v402 = vld [vmem:[#allocation2 + $0x9b8] sm:$0xff]
    %v403 = vld [vmem:[#allocation2 + $0x9c0] sm:$0xff]
    %v404 = vld [vmem:[#allocation2 + $0x9c8] sm:$0xff]
    %v405 = vld [vmem:[#allocation2 + $0x9d0] sm:$0xff]
    %v406 = vld [vmem:[#allocation2 + $0x9d8] sm:$0xff]
    %v407 = vld [vmem:[#allocation2 + $0x9e0] sm:$0xff]
    %v408 = vld [vmem:[#allocation2 + $0x9e8] sm:$0xff]
    %v409 = vld [vmem:[#allocation2 + $0x9f0] sm:$0xff]
    %v410 = vld [vmem:[#allocation2 + $0x9f8] sm:$0xff]
    %v411 = vld [vmem:[#allocation2 + $0xa00] sm:$0xff]
    %v412 = vld [vmem:[#allocation2 + $0xa08] sm:$0xff]
    %v413 = vld [vmem:[#allocation2 + $0xa10] sm:$0xff]
    %v414 = vld [vmem:[#allocation2 + $0xa18] sm:$0xff]
    %v415 = vld [vmem:[#allocation2 + $0xa20] sm:$0xff]
    %v416 = vld [vmem:[#allocation2 + $0xa28] sm:$0xff]
    %v417 = vld [vmem:[#allocation2 + $0xa30] sm:$0xff]
    %v418 = vld [vmem:[#allocation2 + $0xa38] sm:$0xff]
    %v419 = vld [vmem:[#allocation2 + $0xa40] sm:$0xff]
    %v420 = vld [vmem:[#allocation2 + $0xa48] sm:$0xff]
    %v421 = vld [vmem:[#allocation2 + $0xa50] sm:$0xff]
    %v422 = vld [vmem:[#allocation2 + $0xa58] sm:$0xff]
    %v423 = vld [vmem:[#allocation2 + $0xa60] sm:$0xff]
    %v424 = vld [vmem:[#allocation2 + $0xa68] sm:$0xff]
    %v425 = vld [vmem:[#allocation2 + $0xa70] sm:$0xff]
    %v426 = vld [vmem:[#allocation2 + $0xa78] sm:$0xff]
    %v427 = vld [vmem:[#allocation2 + $0xa80] sm:$0xff]
    %v428 = vld [vmem:[#allocation2 + $0xa88] sm:$0xff]
    %v429 = vld [vmem:[#allocation2 + $0xa90] sm:$0xff]
    %v430 = vld [vmem:[#allocation2 + $0xa98] sm:$0xff]
    %v431 = vld [vmem:[#allocation2 + $0xaa0] sm:$0xff]
    %v432 = vld [vmem:[#allocation2 + $0xaa8] sm:$0xff]
    %v433 = vld [vmem:[#allocation2 + $0xab0] sm:$0xff]
    %v434 = vld [vmem:[#allocation2 + $0xab8] sm:$0xff]
    %v435 = vld [vmem:[#allocation2 + $0xac0] sm:$0xff]
    %v436 = vld [vmem:[#allocation2 + $0xac8] sm:$0xff]
    %v437 = vld [vmem:[#allocation2 + $0xad0] sm:$0xff]
    %v438 = vld [vmem:[#allocation2 + $0xad8] sm:$0xff]
    %v439 = vld [vmem:[#allocation2 + $0xae0] sm:$0xff]
    %v440 = vld [vmem:[#allocation2 + $0xae8] sm:$0xff]
    %v441 = vld [vmem:[#allocation2 + $0xaf0] sm:$0xff]
    %v442 = vld [vmem:[#allocation2 + $0xaf8] sm:$0xff]
    %v443 = vld [vmem:[#allocation2 + $0xb00] sm:$0xff]
    %v444 = vld [vmem:[#allocation2 + $0xb08] sm:$0xff]
    %v445 = vld [vmem:[#allocation2 + $0xb10] sm:$0xff]
    %v446 = vld [vmem:[#allocation2 + $0xb18] sm:$0xff]
    %v447 = vld [vmem:[#allocation2 + $0xb20] sm:$0xff]
    %v448 = vld [vmem:[#allocation2 + $0xb28] sm:$0xff]
    %v449 = vld [vmem:[#allocation2 + $0xb30] sm:$0xff]
    %v450 = vld [vmem:[#allocation2 + $0xb38] sm:$0xff]
    %v451 = vld [vmem:[#allocation2 + $0xb40] sm:$0xff]
    %v452 = vld [vmem:[#allocation2 + $0xb48] sm:$0xff]
    %v453 = vld [vmem:[#allocation2 + $0xb50] sm:$0xff]
    %v454 = vld [vmem:[#allocation2 + $0xb58] sm:$0xff]
    %v455 = vld [vmem:[#allocation2 + $0xb60] sm:$0xff]
    %v456 = vld [vmem:[#allocation2 + $0xb68] sm:$0xff]
    %v457 = vld [vmem:[#allocation2 + $0xb70] sm:$0xff]
    %v458 = vld [vmem:[#allocation2 + $0xb78] sm:$0xff]
    %v459 = vld [vmem:[#allocation2 + $0xb80] sm:$0xff]
    %v460 = vld [vmem:[#allocation2 + $0xb88] sm:$0xff]
    %v461 = vld [vmem:[#allocation2 + $0xb90] sm:$0xff]
    %v462 = vld [vmem:[#allocation2 + $0xb98] sm:$0xff]
    %v463 = vld [vmem:[#allocation2 + $0xba0] sm:$0xff]
    %v464 = vld [vmem:[#allocation2 + $0xba8] sm:$0xff]
    %v465 = vld [vmem:[#allocation2 + $0xbb0] sm:$0xff]
    %v466 = vld [vmem:[#allocation2 + $0xbb8] sm:$0xff]
    %v467 = vld [vmem:[#allocation2 + $0xbc0] sm:$0xff]
    %v468 = vld [vmem:[#allocation2 + $0xbc8] sm:$0xff]
    %v469 = vld [vmem:[#allocation2 + $0xbd0] sm:$0xff]
    %v470 = vld [vmem:[#allocation2 + $0xbd8] sm:$0xff]
    %v471 = vld [vmem:[#allocation2 + $0xbe0] sm:$0xff]
    %v472 = vld [vmem:[#allocation2 + $0xbe8] sm:$0xff]
    %v473 = vld [vmem:[#allocation2 + $0xbf0] sm:$0xff]
    %v474 = vld [vmem:[#allocation2 + $0xbf8] sm:$0xff]
    %v475 = vld [vmem:[#allocation2 + $0xc00] sm:$0xff]
    %v476 = vld [vmem:[#allocation2 + $0xc08] sm:$0xff]
    %v477 = vld [vmem:[#allocation2 + $0xc10] sm:$0xff]
    %v478 = vld [vmem:[#allocation2 + $0xc18] sm:$0xff]
    %v479 = vld [vmem:[#allocation2 + $0xc20] sm:$0xff]
    %v480 = vld [vmem:[#allocation2 + $0xc28] sm:$0xff]
    %v481 = vld [vmem:[#allocation2 + $0xc30] sm:$0xff]
    %v482 = vld [vmem:[#allocation2 + $0xc38] sm:$0xff]
    %v483 = vld [vmem:[#allocation2 + $0xc40] sm:$0xff]
    %v484 = vld [vmem:[#allocation2 + $0xc48] sm:$0xff]
    %v485 = vld [vmem:[#allocation2 + $0xc50] sm:$0xff]
    %v486 = vld [vmem:[#allocation2 + $0xc58] sm:$0xff]
    %v487 = vld [vmem:[#allocation2 + $0xc60] sm:$0xff]
    %v488 = vld [vmem:[#allocation2 + $0xc68] sm:$0xff]
    %v489 = vld [vmem:[#allocation2 + $0xc70] sm:$0xff]
    %v490 = vld [vmem:[#allocation2 + $0xc78] sm:$0xff]
    %v491 = vld [vmem:[#allocation2 + $0xc80] sm:$0xff]
    %v492 = vld [vmem:[#allocation2 + $0xc88] sm:$0xff]
    %v493 = vld [vmem:[#allocation2 + $0xc90] sm:$0xff]
    %v494 = vld [vmem:[#allocation2 + $0xc98] sm:$0xff]
    %v495 = vld [vmem:[#allocation2 + $0xca0] sm:$0xff]
    %v496 = vld [vmem:[#allocation2 + $0xca8] sm:$0xff]
    %v497 = vld [vmem:[#allocation2 + $0xcb0] sm:$0xff]
    %v498 = vld [vmem:[#allocation2 + $0xcb8] sm:$0xff]
    %v499 = vld [vmem:[#allocation2 + $0xcc0] sm:$0xff]
    %v500 = vld [vmem:[#allocation2 + $0xcc8] sm:$0xff]
    %v501 = vld [vmem:[#allocation2 + $0xcd0] sm:$0xff]
    %v502 = vld [vmem:[#allocation2 + $0xcd8] sm:$0xff]
    %v503 = vld [vmem:[#allocation2 + $0xce0] sm:$0xff]
    %v504 = vld [vmem:[#allocation2 + $0xce8] sm:$0xff]
    %v505 = vld [vmem:[#allocation2 + $0xcf0] sm:$0xff]
    %v506 = vld [vmem:[#allocation2 + $0xcf8] sm:$0xff]
    %v507 = vld [vmem:[#allocation2 + $0xd00] sm:$0xff]
    %v508 = vld [vmem:[#allocation2 + $0xd08] sm:$0xff]
    %v509 = vld [vmem:[#allocation2 + $0xd10] sm:$0xff]
    %v510 = vld [vmem:[#allocation2 + $0xd18] sm:$0xff]
    %v511 = vld [vmem:[#allocation2 + $0xd20] sm:$0xff]
    %v512 = vld [vmem:[#allocation2 + $0xd28] sm:$0xff]
    %v513 = vld [vmem:[#allocation2 + $0xd30] sm:$0xff]
    %v514 = vld [vmem:[#allocation2 + $0xd38] sm:$0xff]
    %v515 = vld [vmem:[#allocation2 + $0xd40] sm:$0xff]
    %v516 = vld [vmem:[#allocation2 + $0xd48] sm:$0xff]
    %v517 = vld [vmem:[#allocation2 + $0xd50] sm:$0xff]
    %v518 = vld [vmem:[#allocation2 + $0xd58] sm:$0xff]
    %v519 = vld [vmem:[#allocation2 + $0xd60] sm:$0xff]
    %v520 = vld [vmem:[#allocation2 + $0xd68] sm:$0xff]
    %v521 = vld [vmem:[#allocation2 + $0xd70] sm:$0xff]
    %v522 = vld [vmem:[#allocation2 + $0xd78] sm:$0xff]
    %v523 = vld [vmem:[#allocation2 + $0xd80] sm:$0xff]
    %v524 = vld [vmem:[#allocation2 + $0xd88] sm:$0xff]
    %v525 = vld [vmem:[#allocation2 + $0xd90] sm:$0xff]
    %v526 = vld [vmem:[#allocation2 + $0xd98] sm:$0xff]
    %v527 = vld [vmem:[#allocation2 + $0xda0] sm:$0xff]
    %v528 = vld [vmem:[#allocation2 + $0xda8] sm:$0xff]
    %v529 = vld [vmem:[#allocation2 + $0xdb0] sm:$0xff]
    %v530 = vld [vmem:[#allocation2 + $0xdb8] sm:$0xff]
    %v531 = vld [vmem:[#allocation2 + $0xdc0] sm:$0xff]
    %v532 = vld [vmem:[#allocation2 + $0xdc8] sm:$0xff]
    %v533 = vld [vmem:[#allocation2 + $0xdd0] sm:$0xff]
    %v534 = vld [vmem:[#allocation2 + $0xdd8] sm:$0xff]
    %v535 = vld [vmem:[#allocation2 + $0xde0] sm:$0xff]
    %v536 = vld [vmem:[#allocation2 + $0xde8] sm:$0xff]
    %v537 = vld [vmem:[#allocation2 + $0xdf0] sm:$0xff]
    %v538 = vld [vmem:[#allocation2 + $0xdf8] sm:$0xff]
    %v539 = vld [vmem:[#allocation2 + $0xe00] sm:$0xff]
    %v540 = vld [vmem:[#allocation2 + $0xe08] sm:$0xff]
    %v541 = vld [vmem:[#allocation2 + $0xe10] sm:$0xff]
    %v542 = vld [vmem:[#allocation2 + $0xe18] sm:$0xff]
    %v543 = vld [vmem:[#allocation2 + $0xe20] sm:$0xff]
    %v544 = vld [vmem:[#allocation2 + $0xe28] sm:$0xff]
    %v545 = vld [vmem:[#allocation2 + $0xe30] sm:$0xff]
    %v546 = vld [vmem:[#allocation2 + $0xe38] sm:$0xff]
    %v547 = vld [vmem:[#allocation2 + $0xe40] sm:$0xff]
    %v548 = vld [vmem:[#allocation2 + $0xe48] sm:$0xff]
    %v549 = vld [vmem:[#allocation2 + $0xe50] sm:$0xff]
    %v550 = vld [vmem:[#allocation2 + $0xe58] sm:$0xff]
    %v551 = vld [vmem:[#allocation2 + $0xe60] sm:$0xff]
    %v552 = vld [vmem:[#allocation2 + $0xe68] sm:$0xff]
    %v553 = vld [vmem:[#allocation2 + $0xe70] sm:$0xff]
    %v554 = vld [vmem:[#allocation2 + $0xe78] sm:$0xff]
    %v555 = vld [vmem:[#allocation2 + $0xe80] sm:$0xff]
    %v556 = vld [vmem:[#allocation2 + $0xe88] sm:$0xff]
    %v557 = vld [vmem:[#allocation2 + $0xe90] sm:$0xff]
    %v558 = vld [vmem:[#allocation2 + $0xe98] sm:$0xff]
    %v559 = vld [vmem:[#allocation2 + $0xea0] sm:$0xff]
    %v560 = vld [vmem:[#allocation2 + $0xea8] sm:$0xff]
    %v561 = vld [vmem:[#allocation2 + $0xeb0] sm:$0xff]
    %v562 = vld [vmem:[#allocation2 + $0xeb8] sm:$0xff]
    %v563 = vld [vmem:[#allocation2 + $0xec0] sm:$0xff]
    %v564 = vld [vmem:[#allocation2 + $0xec8] sm:$0xff]
    %v565 = vld [vmem:[#allocation2 + $0xed0] sm:$0xff]
    %v566 = vld [vmem:[#allocation2 + $0xed8] sm:$0xff]
    %v567 = vld [vmem:[#allocation2 + $0xee0] sm:$0xff]
    %v568 = vld [vmem:[#allocation2 + $0xee8] sm:$0xff]
    %v569 = vld [vmem:[#allocation2 + $0xef0] sm:$0xff]
    %v570 = vld [vmem:[#allocation2 + $0xef8] sm:$0xff]
    %v571 = vld [vmem:[#allocation2 + $0xf00] sm:$0xff]
    %v572 = vld [vmem:[#allocation2 + $0xf08] sm:$0xff]
    %v573 = vld [vmem:[#allocation2 + $0xf10] sm:$0xff]
    %v574 = vld [vmem:[#allocation2 + $0xf18] sm:$0xff]
    %v575 = vld [vmem:[#allocation2 + $0xf20] sm:$0xff]
    %v576 = vld [vmem:[#allocation2 + $0xf28] sm:$0xff]
    %v577 = vld [vmem:[#allocation2 + $0xf30] sm:$0xff]
    %v578 = vld [vmem:[#allocation2 + $0xf38] sm:$0xff]
    %v579 = vld [vmem:[#allocation2 + $0xf40] sm:$0xff]
    %v580 = vld [vmem:[#allocation2 + $0xf48] sm:$0xff]
    %v581 = vld [vmem:[#allocation2 + $0xf50] sm:$0xff]
    %v582 = vld [vmem:[#allocation2 + $0xf58] sm:$0xff]
    %v583 = vld [vmem:[#allocation2 + $0xf60] sm:$0xff]
    %v584 = vld [vmem:[#allocation2 + $0xf68] sm:$0xff]
    %v585 = vld [vmem:[#allocation2 + $0xf70] sm:$0xff]
    %v586 = vld [vmem:[#allocation2 + $0xf78] sm:$0xff]
    %v587 = vld [vmem:[#allocation2 + $0xf80] sm:$0xff]
    %v588 = vld [vmem:[#allocation2 + $0xf88] sm:$0xff]
    %v589 = vld [vmem:[#allocation2 + $0xf90] sm:$0xff]
    %v590 = vld [vmem:[#allocation2 + $0xf98] sm:$0xff]
    %v591 = vld [vmem:[#allocation2 + $0xfa0] sm:$0xff]
    %v592 = vld [vmem:[#allocation2 + $0xfa8] sm:$0xff]
    %v593 = vld [vmem:[#allocation2 + $0xfb0] sm:$0xff]
    %v594 = vld [vmem:[#allocation2 + $0xfb8] sm:$0xff]
    %v595 = vld [vmem:[#allocation2 + $0xfc0] sm:$0xff]
    %v596 = vld [vmem:[#allocation2 + $0xfc8] sm:$0xff]
    %v597 = vld [vmem:[#allocation2 + $0xfd0] sm:$0xff]
    %v598 = vld [vmem:[#allocation2 + $0xfd8] sm:$0xff]
    %v599 = vld [vmem:[#allocation2 + $0xfe0] sm:$0xff]
    %v600 = vld [vmem:[#allocation2 + $0xfe8] sm:$0xff]
    %v601 = vld [vmem:[#allocation2 + $0xff0] sm:$0xff]
    %v602 = vld [vmem:[#allocation2 + $0xff8] sm:$0xff]
    %v603 = vld [vmem:[#allocation2 + $0x1000] sm:$0xff]
    %v604 = vld [vmem:[#allocation2 + $0x1008] sm:$0xff]
    %v605 = vld [vmem:[#allocation2 + $0x1010] sm:$0xff]
    %v606 = vld [vmem:[#allocation2 + $0x1018] sm:$0xff]
    %v607 = vld [vmem:[#allocation2 + $0x1020] sm:$0xff]
    %v608 = vld [vmem:[#allocation2 + $0x1028] sm:$0xff]
    %v609 = vld [vmem:[#allocation2 + $0x1030] sm:$0xff]
    %v610 = vld [vmem:[#allocation2 + $0x1038] sm:$0xff]
    %v611 = vld [vmem:[#allocation2 + $0x1040] sm:$0xff]
    %v612 = vld [vmem:[#allocation2 + $0x1048] sm:$0xff]
    %v613 = vld [vmem:[#allocation2 + $0x1050] sm:$0xff]
    %v614 = vld [vmem:[#allocation2 + $0x1058] sm:$0xff]
    %v615 = vld [vmem:[#allocation2 + $0x1060] sm:$0xff]
    %v616 = vld [vmem:[#allocation2 + $0x1068] sm:$0xff]
    %v617 = vld [vmem:[#allocation2 + $0x1070] sm:$0xff]
    %v618 = vld [vmem:[#allocation2 + $0x1078] sm:$0xff]
    %v619 = vld [vmem:[#allocation2 + $0x1080] sm:$0xff]
    %v620 = vld [vmem:[#allocation2 + $0x1088] sm:$0xff]
    %v621 = vld [vmem:[#allocation2 + $0x1090] sm:$0xff]
    %v622 = vld [vmem:[#allocation2 + $0x1098] sm:$0xff]
    %v623 = vld [vmem:[#allocation2 + $0x10a0] sm:$0xff]
    %v624 = vld [vmem:[#allocation2 + $0x10a8] sm:$0xff]
    %v625 = vld [vmem:[#allocation2 + $0x10b0] sm:$0xff]
    %v626 = vld [vmem:[#allocation2 + $0x10b8] sm:$0xff]
    %v627 = vld [vmem:[#allocation2 + $0x10c0] sm:$0xff]
    %v628 = vld [vmem:[#allocation2 + $0x10c8] sm:$0xff]
    %v629 = vld [vmem:[#allocation2 + $0x10d0] sm:$0xff]
    %v630 = vld [vmem:[#allocation2 + $0x10d8] sm:$0xff]
    %v631 = vld [vmem:[#allocation2 + $0x10e0] sm:$0xff]
    %v632 = vld [vmem:[#allocation2 + $0x10e8] sm:$0xff]
    %v633 = vld [vmem:[#allocation2 + $0x10f0] sm:$0xff]
    %v634 = vld [vmem:[#allocation2 + $0x10f8] sm:$0xff]
    %v635 = vld [vmem:[#allocation2 + $0x1100] sm:$0xff]
    %v636 = vld [vmem:[#allocation2 + $0x1108] sm:$0xff]
    %v637 = vld [vmem:[#allocation2 + $0x1110] sm:$0xff]
    %v638 = vld [vmem:[#allocation2 + $0x1118] sm:$0xff]
    %v639 = vld [vmem:[#allocation2 + $0x1120] sm:$0xff]
    %v640 = vld [vmem:[#allocation2 + $0x1128] sm:$0xff]
    %v641 = vld [vmem:[#allocation2 + $0x1130] sm:$0xff]
    %v642 = vld [vmem:[#allocation2 + $0x1138] sm:$0xff]
    %v643 = vld [vmem:[#allocation2 + $0x1140] sm:$0xff]
    %v644 = vld [vmem:[#allocation2 + $0x1148] sm:$0xff]
    %v645 = vld [vmem:[#allocation2 + $0x1150] sm:$0xff]
    %v646 = vld [vmem:[#allocation2 + $0x1158] sm:$0xff]
    %v647 = vld [vmem:[#allocation2 + $0x1160] sm:$0xff]
    %v648 = vld [vmem:[#allocation2 + $0x1168] sm:$0xff]
    %v649 = vld [vmem:[#allocation2 + $0x1170] sm:$0xff]
    %v650 = vld [vmem:[#allocation2 + $0x1178] sm:$0xff]
    %v651 = vld [vmem:[#allocation2 + $0x1180] sm:$0xff]
    %v652 = vld [vmem:[#allocation2 + $0x1188] sm:$0xff]
    %v653 = vld [vmem:[#allocation2 + $0x1190] sm:$0xff]
    %v654 = vld [vmem:[#allocation2 + $0x1198] sm:$0xff]
    %v655 = vld [vmem:[#allocation2 + $0x11a0] sm:$0xff]
    %v656 = vld [vmem:[#allocation2 + $0x11a8] sm:$0xff]
    %v657 = vld [vmem:[#allocation2 + $0x11b0] sm:$0xff]
    %v658 = vld [vmem:[#allocation2 + $0x11b8] sm:$0xff]
    %v659 = vld [vmem:[#allocation2 + $0x11c0] sm:$0xff]
    %v660 = vld [vmem:[#allocation2 + $0x11c8] sm:$0xff]
    %v661 = vld [vmem:[#allocation2 + $0x11d0] sm:$0xff]
    %v662 = vld [vmem:[#allocation2 + $0x11d8] sm:$0xff]
    %v663 = vld [vmem:[#allocation2 + $0x11e0] sm:$0xff]
    %v664 = vld [vmem:[#allocation2 + $0x11e8] sm:$0xff]
    %v665 = vld [vmem:[#allocation2 + $0x11f0] sm:$0xff]
    %v666 = vld [vmem:[#allocation2 + $0x11f8] sm:$0xff]
    %v667 = vld [vmem:[#allocation2 + $0x1200] sm:$0xff]
    %v668 = vld [vmem:[#allocation2 + $0x1208] sm:$0xff]
    %v669 = vld [vmem:[#allocation2 + $0x1210] sm:$0xff]
    %v670 = vld [vmem:[#allocation2 + $0x1218] sm:$0xff]
    %v671 = vld [vmem:[#allocation2 + $0x1220] sm:$0xff]
    %v672 = vld [vmem:[#allocation2 + $0x1228] sm:$0xff]
    %v673 = vld [vmem:[#allocation2 + $0x1230] sm:$0xff]
    %v674 = vld [vmem:[#allocation2 + $0x1238] sm:$0xff]
    %v675 = vld [vmem:[#allocation2 + $0x1240] sm:$0xff]
    %v676 = vld [vmem:[#allocation2 + $0x1248] sm:$0xff]
    %v677 = vld [vmem:[#allocation2 + $0x1250] sm:$0xff]
    %v678 = vld [vmem:[#allocation2 + $0x1258] sm:$0xff]
    %v679 = vld [vmem:[#allocation2 + $0x1260] sm:$0xff]
    %v680 = vld [vmem:[#allocation2 + $0x1268] sm:$0xff]
    %v681 = vld [vmem:[#allocation2 + $0x1270] sm:$0xff]
    %v682 = vld [vmem:[#allocation2 + $0x1278] sm:$0xff]
    %v683 = vld [vmem:[#allocation2 + $0x1280] sm:$0xff]
    %v684 = vld [vmem:[#allocation2 + $0x1288] sm:$0xff]
    %v685 = vld [vmem:[#allocation2 + $0x1290] sm:$0xff]
    %v686 = vld [vmem:[#allocation2 + $0x1298] sm:$0xff]
    %v687 = vld [vmem:[#allocation2 + $0x12a0] sm:$0xff]
    %v688 = vld [vmem:[#allocation2 + $0x12a8] sm:$0xff]
    %v689 = vld [vmem:[#allocation2 + $0x12b0] sm:$0xff]
    %v690 = vld [vmem:[#allocation2 + $0x12b8] sm:$0xff]
    %v691 = vld [vmem:[#allocation2 + $0x12c0] sm:$0xff]
    %v692 = vld [vmem:[#allocation2 + $0x12c8] sm:$0xff]
    %v693 = vld [vmem:[#allocation2 + $0x12d0] sm:$0xff]
    %v694 = vld [vmem:[#allocation2 + $0x12d8] sm:$0xff]
    %v695 = vld [vmem:[#allocation2 + $0x12e0] sm:$0xff]
    %v696 = vld [vmem:[#allocation2 + $0x12e8] sm:$0xff]
    %v697 = vld [vmem:[#allocation2 + $0x12f0] sm:$0xff]
    %v698 = vld [vmem:[#allocation2 + $0x12f8] sm:$0xff]
    %v699 = vld [vmem:[#allocation2 + $0x1300] sm:$0xff]
    %v700 = vld [vmem:[#allocation2 + $0x1308] sm:$0xff]
    %v701 = vld [vmem:[#allocation2 + $0x1310] sm:$0xff]
    %v702 = vld [vmem:[#allocation2 + $0x1318] sm:$0xff]
    %v703 = vld [vmem:[#allocation2 + $0x1320] sm:$0xff]
    %v704 = vld [vmem:[#allocation2 + $0x1328] sm:$0xff]
    %v705 = vld [vmem:[#allocation2 + $0x1330] sm:$0xff]
    %v706 = vld [vmem:[#allocation2 + $0x1338] sm:$0xff]
    %v707 = vld [vmem:[#allocation2 + $0x1340] sm:$0xff]
    %v708 = vld [vmem:[#allocation2 + $0x1348] sm:$0xff]
    %v709 = vld [vmem:[#allocation2 + $0x1350] sm:$0xff]
    %v710 = vld [vmem:[#allocation2 + $0x1358] sm:$0xff]
    %v711 = vld [vmem:[#allocation2 + $0x1360] sm:$0xff]
    %v712 = vld [vmem:[#allocation2 + $0x1368] sm:$0xff]
    %v713 = vld [vmem:[#allocation2 + $0x1370] sm:$0xff]
    %v714 = vld [vmem:[#allocation2 + $0x1378] sm:$0xff]
    %v715 = vld [vmem:[#allocation2 + $0x1380] sm:$0xff]
    %v716 = vld [vmem:[#allocation2 + $0x1388] sm:$0xff]
    %v717 = vld [vmem:[#allocation2 + $0x1390] sm:$0xff]
    %v718 = vld [vmem:[#allocation2 + $0x1398] sm:$0xff]
    %v719 = vld [vmem:[#allocation2 + $0x13a0] sm:$0xff]
    %v720 = vld [vmem:[#allocation2 + $0x13a8] sm:$0xff]
    %v721 = vld [vmem:[#allocation2 + $0x13b0] sm:$0xff]
    %v722 = vld [vmem:[#allocation2 + $0x13b8] sm:$0xff]
    %v723 = vld [vmem:[#allocation2 + $0x13c0] sm:$0xff]
    %v724 = vld [vmem:[#allocation2 + $0x13c8] sm:$0xff]
    %v725 = vld [vmem:[#allocation2 + $0x13d0] sm:$0xff]
    %v726 = vld [vmem:[#allocation2 + $0x13d8] sm:$0xff]
    %v727 = vld [vmem:[#allocation2 + $0x13e0] sm:$0xff]
    %v728 = vld [vmem:[#allocation2 + $0x13e8] sm:$0xff]
    %v729 = vld [vmem:[#allocation2 + $0x13f0] sm:$0xff]
    %v730 = vld [vmem:[#allocation2 + $0x13f8] sm:$0xff]
    %v731 = vld [vmem:[#allocation2 + $0x1400] sm:$0xff]
    %v732 = vld [vmem:[#allocation2 + $0x1408] sm:$0xff]
    %v733 = vld [vmem:[#allocation2 + $0x1410] sm:$0xff]
    %v734 = vld [vmem:[#allocation2 + $0x1418] sm:$0xff]
    %v735 = vld [vmem:[#allocation2 + $0x1420] sm:$0xff]
    %v736 = vld [vmem:[#allocation2 + $0x1428] sm:$0xff]
    %v737 = vld [vmem:[#allocation2 + $0x1430] sm:$0xff]
    %v738 = vld [vmem:[#allocation2 + $0x1438] sm:$0xff]
    %v739 = vld [vmem:[#allocation2 + $0x1440] sm:$0xff]
    %v740 = vld [vmem:[#allocation2 + $0x1448] sm:$0xff]
    %v741 = vld [vmem:[#allocation2 + $0x1450] sm:$0xff]
    %v742 = vld [vmem:[#allocation2 + $0x1458] sm:$0xff]
    %v743 = vld [vmem:[#allocation2 + $0x1460] sm:$0xff]
    %v744 = vld [vmem:[#allocation2 + $0x1468] sm:$0xff]
    %v745 = vld [vmem:[#allocation2 + $0x1470] sm:$0xff]
    %v746 = vld [vmem:[#allocation2 + $0x1478] sm:$0xff]
    %v747 = vld [vmem:[#allocation2 + $0x1480] sm:$0xff]
    %v748 = vld [vmem:[#allocation2 + $0x1488] sm:$0xff]
    %v749 = vld [vmem:[#allocation2 + $0x1490] sm:$0xff]
    %v750 = vld [vmem:[#allocation2 + $0x1498] sm:$0xff]
    %v751 = vld [vmem:[#allocation2 + $0x14a0] sm:$0xff]
    %v752 = vld [vmem:[#allocation2 + $0x14a8] sm:$0xff]
    %v753 = vld [vmem:[#allocation2 + $0x14b0] sm:$0xff]
    %v754 = vld [vmem:[#allocation2 + $0x14b8] sm:$0xff]
    %v755 = vld [vmem:[#allocation2 + $0x14c0] sm:$0xff]
    %v756 = vld [vmem:[#allocation2 + $0x14c8] sm:$0xff]
    %v757 = vld [vmem:[#allocation2 + $0x14d0] sm:$0xff]
    %v758 = vld [vmem:[#allocation2 + $0x14d8] sm:$0xff]
    %v759 = vld [vmem:[#allocation2 + $0x14e0] sm:$0xff]
    %v760 = vld [vmem:[#allocation2 + $0x14e8] sm:$0xff]
    %v761 = vld [vmem:[#allocation2 + $0x14f0] sm:$0xff]
    %v762 = vld [vmem:[#allocation2 + $0x14f8] sm:$0xff]
    %v763 = vld [vmem:[#allocation2 + $0x1500] sm:$0xff]
    %v764 = vld [vmem:[#allocation2 + $0x1508] sm:$0xff]
    %v765 = vld [vmem:[#allocation2 + $0x1510] sm:$0xff]
    %v766 = vld [vmem:[#allocation2 + $0x1518] sm:$0xff]
    %v767 = vld [vmem:[#allocation2 + $0x1520] sm:$0xff]
    %v768 = vld [vmem:[#allocation2 + $0x1528] sm:$0xff]
    %v769 = vld [vmem:[#allocation2 + $0x1530] sm:$0xff]
    %v770 = vld [vmem:[#allocation2 + $0x1538] sm:$0xff]
    %v771 = vld [vmem:[#allocation2 + $0x1540] sm:$0xff]
    %v772 = vld [vmem:[#allocation2 + $0x1548] sm:$0xff]
    %v773 = vld [vmem:[#allocation2 + $0x1550] sm:$0xff]
    %v774 = vld [vmem:[#allocation2 + $0x1558] sm:$0xff]
    %v775 = vld [vmem:[#allocation2 + $0x1560] sm:$0xff]
    %v776 = vld [vmem:[#allocation2 + $0x1568] sm:$0xff]
    %v777 = vld [vmem:[#allocation2 + $0x1570] sm:$0xff]
    %v778 = vld [vmem:[#allocation2 + $0x1578] sm:$0xff]
    %v779 = vld [vmem:[#allocation2 + $0x1580] sm:$0xff]
    %v780 = vld [vmem:[#allocation2 + $0x1588] sm:$0xff]
    %v781 = vld [vmem:[#allocation2 + $0x1590] sm:$0xff]
    %v782 = vld [vmem:[#allocation2 + $0x1598] sm:$0xff]
    %v783 = vld [vmem:[#allocation2 + $0x15a0] sm:$0xff]
    %v784 = vld [vmem:[#allocation2 + $0x15a8] sm:$0xff]
    %v785 = vld [vmem:[#allocation2 + $0x15b0] sm:$0xff]
    %v786 = vld [vmem:[#allocation2 + $0x15b8] sm:$0xff]
    %v787 = vld [vmem:[#allocation2 + $0x15c0] sm:$0xff]
    %v788 = vld [vmem:[#allocation2 + $0x15c8] sm:$0xff]
    %v789 = vld [vmem:[#allocation2 + $0x15d0] sm:$0xff]
    %v790 = vld [vmem:[#allocation2 + $0x15d8] sm:$0xff]
    %v791 = vld [vmem:[#allocation2 + $0x15e0] sm:$0xff]
    %v792 = vld [vmem:[#allocation2 + $0x15e8] sm:$0xff]
    %v793 = vld [vmem:[#allocation2 + $0x15f0] sm:$0xff]
    %v794 = vld [vmem:[#allocation2 + $0x15f8] sm:$0xff]
    %v795 = vld [vmem:[#allocation2 + $0x1600] sm:$0xff]
    %v796 = vld [vmem:[#allocation2 + $0x1608] sm:$0xff]
    %v797 = vld [vmem:[#allocation2 + $0x1610] sm:$0xff]
    %v798 = vld [vmem:[#allocation2 + $0x1618] sm:$0xff]
    %v799 = vld [vmem:[#allocation2 + $0x1620] sm:$0xff]
    %v800 = vld [vmem:[#allocation2 + $0x1628] sm:$0xff]
    %v801 = vld [vmem:[#allocation2 + $0x1630] sm:$0xff]
    %v802 = vld [vmem:[#allocation2 + $0x1638] sm:$0xff]
    %v803 = vld [vmem:[#allocation2 + $0x1640] sm:$0xff]
    %v804 = vld [vmem:[#allocation2 + $0x1648] sm:$0xff]
    %v805 = vld [vmem:[#allocation2 + $0x1650] sm:$0xff]
    %v806 = vld [vmem:[#allocation2 + $0x1658] sm:$0xff]
    %v807 = vld [vmem:[#allocation2 + $0x1660] sm:$0xff]
    %v808 = vld [vmem:[#allocation2 + $0x1668] sm:$0xff]
    %v809 = vld [vmem:[#allocation2 + $0x1670] sm:$0xff]
    %v810 = vld [vmem:[#allocation2 + $0x1678] sm:$0xff]
    %v811 = vld [vmem:[#allocation2 + $0x1680] sm:$0xff]
    %v812 = vld [vmem:[#allocation2 + $0x1688] sm:$0xff]
    %v813 = vld [vmem:[#allocation2 + $0x1690] sm:$0xff]
    %v814 = vld [vmem:[#allocation2 + $0x1698] sm:$0xff]
    %v815 = vld [vmem:[#allocation2 + $0x16a0] sm:$0xff]
    %v816 = vld [vmem:[#allocation2 + $0x16a8] sm:$0xff]
    %v817 = vld [vmem:[#allocation2 + $0x16b0] sm:$0xff]
    %v818 = vld [vmem:[#allocation2 + $0x16b8] sm:$0xff]
    %v819 = vld [vmem:[#allocation2 + $0x16c0] sm:$0xff]
    %v820 = vld [vmem:[#allocation2 + $0x16c8] sm:$0xff]
    %v821 = vld [vmem:[#allocation2 + $0x16d0] sm:$0xff]
    %v822 = vld [vmem:[#allocation2 + $0x16d8] sm:$0xff]
    %v823 = vld [vmem:[#allocation2 + $0x16e0] sm:$0xff]
    %v824 = vld [vmem:[#allocation2 + $0x16e8] sm:$0xff]
    %v825 = vld [vmem:[#allocation2 + $0x16f0] sm:$0xff]
    %v826 = vld [vmem:[#allocation2 + $0x16f8] sm:$0xff]
    %v827 = vld [vmem:[#allocation2 + $0x1700] sm:$0xff]
    %v828 = vld [vmem:[#allocation2 + $0x1708] sm:$0xff]
    %v829 = vld [vmem:[#allocation2 + $0x1710] sm:$0xff]
    %v830 = vld [vmem:[#allocation2 + $0x1718] sm:$0xff]
    %v831 = vld [vmem:[#allocation2 + $0x1720] sm:$0xff]
    %v832 = vld [vmem:[#allocation2 + $0x1728] sm:$0xff]
    %v833 = vld [vmem:[#allocation2 + $0x1730] sm:$0xff]
    %v834 = vld [vmem:[#allocation2 + $0x1738] sm:$0xff]
    %v835 = vld [vmem:[#allocation2 + $0x1740] sm:$0xff]
    %v836 = vld [vmem:[#allocation2 + $0x1748] sm:$0xff]
    %v837 = vld [vmem:[#allocation2 + $0x1750] sm:$0xff]
    %v838 = vld [vmem:[#allocation2 + $0x1758] sm:$0xff]
    %v839 = vld [vmem:[#allocation2 + $0x1760] sm:$0xff]
    %v840 = vld [vmem:[#allocation2 + $0x1768] sm:$0xff]
    %v841 = vld [vmem:[#allocation2 + $0x1770] sm:$0xff]
    %v842 = vld [vmem:[#allocation2 + $0x1778] sm:$0xff]
    %v843 = vld [vmem:[#allocation2 + $0x1780] sm:$0xff]
    %v844 = vld [vmem:[#allocation2 + $0x1788] sm:$0xff]
    %v845 = vld [vmem:[#allocation2 + $0x1790] sm:$0xff]
    %v846 = vld [vmem:[#allocation2 + $0x1798] sm:$0xff]
    %v847 = vld [vmem:[#allocation2 + $0x17a0] sm:$0xff]
    %v848 = vld [vmem:[#allocation2 + $0x17a8] sm:$0xff]
    %v849 = vld [vmem:[#allocation2 + $0x17b0] sm:$0xff]
    %v850 = vld [vmem:[#allocation2 + $0x17b8] sm:$0xff]
    %v851 = vld [vmem:[#allocation2 + $0x17c0] sm:$0xff]
    %v852 = vld [vmem:[#allocation2 + $0x17c8] sm:$0xff]
    %v853 = vld [vmem:[#allocation2 + $0x17d0] sm:$0xff]
    %v854 = vld [vmem:[#allocation2 + $0x17d8] sm:$0xff]
    %v855 = vld [vmem:[#allocation2 + $0x17e0] sm:$0xff]
    %v856 = vld [vmem:[#allocation2 + $0x17e8] sm:$0xff]
    %v857 = vld [vmem:[#allocation2 + $0x17f0] sm:$0xff]
    %v858 = vld [vmem:[#allocation2 + $0x17f8] sm:$0xff]
    %v859 = vld [vmem:[#allocation2 + $0x1800] sm:$0xff]
    %v860 = vld [vmem:[#allocation2 + $0x1808] sm:$0xff]
    %v861 = vld [vmem:[#allocation2 + $0x1810] sm:$0xff]
    %v862 = vld [vmem:[#allocation2 + $0x1818] sm:$0xff]
    %v863 = vld [vmem:[#allocation2 + $0x1820] sm:$0xff]
    %v864 = vld [vmem:[#allocation2 + $0x1828] sm:$0xff]
    %v865 = vld [vmem:[#allocation2 + $0x1830] sm:$0xff]
    %v866 = vld [vmem:[#allocation2 + $0x1838] sm:$0xff]
    %v867 = vld [vmem:[#allocation2 + $0x1840] sm:$0xff]
    %v868 = vld [vmem:[#allocation2 + $0x1848] sm:$0xff]
    %v869 = vld [vmem:[#allocation2 + $0x1850] sm:$0xff]
    %v870 = vld [vmem:[#allocation2 + $0x1858] sm:$0xff]
    %v871 = vld [vmem:[#allocation2 + $0x1860] sm:$0xff]
    %v872 = vld [vmem:[#allocation2 + $0x1868] sm:$0xff]
    %v873 = vld [vmem:[#allocation2 + $0x1870] sm:$0xff]
    %v874 = vld [vmem:[#allocation2 + $0x1878] sm:$0xff]
    %v875 = vld [vmem:[#allocation2 + $0x1880] sm:$0xff]
    %v876 = vld [vmem:[#allocation2 + $0x1888] sm:$0xff]
    %v877 = vld [vmem:[#allocation2 + $0x1890] sm:$0xff]
    %v878 = vld [vmem:[#allocation2 + $0x1898] sm:$0xff]
    %v879 = vld [vmem:[#allocation2 + $0x18a0] sm:$0xff]
    %v880 = vld [vmem:[#allocation2 + $0x18a8] sm:$0xff]
    %v881 = vld [vmem:[#allocation2 + $0x18b0] sm:$0xff]
    %v882 = vld [vmem:[#allocation2 + $0x18b8] sm:$0xff]
    %v883 = vld [vmem:[#allocation2 + $0x18c0] sm:$0xff]
    %v884 = vld [vmem:[#allocation2 + $0x18c8] sm:$0xff]
    %v885 = vld [vmem:[#allocation2 + $0x18d0] sm:$0xff]
    %v886 = vld [vmem:[#allocation2 + $0x18d8] sm:$0xff]
    %v887 = vld [vmem:[#allocation2 + $0x18e0] sm:$0xff]
    %v888 = vld [vmem:[#allocation2 + $0x18e8] sm:$0xff]
    %v889 = vld [vmem:[#allocation2 + $0x18f0] sm:$0xff]
    %v890 = vld [vmem:[#allocation2 + $0x18f8] sm:$0xff]
    %v891 = vld [vmem:[#allocation2 + $0x1900] sm:$0xff]
    %v892 = vld [vmem:[#allocation2 + $0x1908] sm:$0xff]
    %v893 = vld [vmem:[#allocation2 + $0x1910] sm:$0xff]
    %v894 = vld [vmem:[#allocation2 + $0x1918] sm:$0xff]
    %v895 = vld [vmem:[#allocation2 + $0x1920] sm:$0xff]
    %v896 = vld [vmem:[#allocation2 + $0x1928] sm:$0xff]
    %v897 = vld [vmem:[#allocation2 + $0x1930] sm:$0xff]
    %v898 = vld [vmem:[#allocation2 + $0x1938] sm:$0xff]
    %v899 = vld [vmem:[#allocation2 + $0x1940] sm:$0xff]
    %v900 = vld [vmem:[#allocation2 + $0x1948] sm:$0xff]
    %v901 = vld [vmem:[#allocation2 + $0x1950] sm:$0xff]
    %v902 = vld [vmem:[#allocation2 + $0x1958] sm:$0xff]
    %v903 = vld [vmem:[#allocation2 + $0x1960] sm:$0xff]
    %v904 = vld [vmem:[#allocation2 + $0x1968] sm:$0xff]
    %v905 = vld [vmem:[#allocation2 + $0x1970] sm:$0xff]
    %v906 = vld [vmem:[#allocation2 + $0x1978] sm:$0xff]
    %v907 = vld [vmem:[#allocation2 + $0x1980] sm:$0xff]
    %v908 = vld [vmem:[#allocation2 + $0x1988] sm:$0xff]
    %v909 = vld [vmem:[#allocation2 + $0x1990] sm:$0xff]
    %v910 = vld [vmem:[#allocation2 + $0x1998] sm:$0xff]
    %v911 = vld [vmem:[#allocation2 + $0x19a0] sm:$0xff]
    %v912 = vld [vmem:[#allocation2 + $0x19a8] sm:$0xff]
    %v913 = vld [vmem:[#allocation2 + $0x19b0] sm:$0xff]
    %v914 = vld [vmem:[#allocation2 + $0x19b8] sm:$0xff]
    %v915 = vld [vmem:[#allocation2 + $0x19c0] sm:$0xff]
    %v916 = vld [vmem:[#allocation2 + $0x19c8] sm:$0xff]
    %v917 = vld [vmem:[#allocation2 + $0x19d0] sm:$0xff]
    %v918 = vld [vmem:[#allocation2 + $0x19d8] sm:$0xff]
    %v919 = vld [vmem:[#allocation2 + $0x19e0] sm:$0xff]
    %v920 = vld [vmem:[#allocation2 + $0x19e8] sm:$0xff]
    %v921 = vld [vmem:[#allocation2 + $0x19f0] sm:$0xff]
    %v922 = vld [vmem:[#allocation2 + $0x19f8] sm:$0xff]
    %v923 = vld [vmem:[#allocation2 + $0x1a00] sm:$0xff]
    %v924 = vld [vmem:[#allocation2 + $0x1a08] sm:$0xff]
    %v925 = vld [vmem:[#allocation2 + $0x1a10] sm:$0xff]
    %v926 = vld [vmem:[#allocation2 + $0x1a18] sm:$0xff]
    %v927 = vld [vmem:[#allocation2 + $0x1a20] sm:$0xff]
    %v928 = vld [vmem:[#allocation2 + $0x1a28] sm:$0xff]
    %v929 = vld [vmem:[#allocation2 + $0x1a30] sm:$0xff]
    %v930 = vld [vmem:[#allocation2 + $0x1a38] sm:$0xff]
    %v931 = vld [vmem:[#allocation2 + $0x1a40] sm:$0xff]
    %v932 = vld [vmem:[#allocation2 + $0x1a48] sm:$0xff]
    %v933 = vld [vmem:[#allocation2 + $0x1a50] sm:$0xff]
    %v934 = vld [vmem:[#allocation2 + $0x1a58] sm:$0xff]
    %v935 = vld [vmem:[#allocation2 + $0x1a60] sm:$0xff]
    %v936 = vld [vmem:[#allocation2 + $0x1a68] sm:$0xff]
    %v937 = vld [vmem:[#allocation2 + $0x1a70] sm:$0xff]
    %v938 = vld [vmem:[#allocation2 + $0x1a78] sm:$0xff]
    %v939 = vld [vmem:[#allocation2 + $0x1a80] sm:$0xff]
    %v940 = vld [vmem:[#allocation2 + $0x1a88] sm:$0xff]
    %v941 = vld [vmem:[#allocation2 + $0x1a90] sm:$0xff]
    %v942 = vld [vmem:[#allocation2 + $0x1a98] sm:$0xff]
    %v943 = vld [vmem:[#allocation2 + $0x1aa0] sm:$0xff]
    %v944 = vld [vmem:[#allocation2 + $0x1aa8] sm:$0xff]
    %v945 = vld [vmem:[#allocation2 + $0x1ab0] sm:$0xff]
    %v946 = vld [vmem:[#allocation2 + $0x1ab8] sm:$0xff]
    %v947 = vld [vmem:[#allocation2 + $0x1ac0] sm:$0xff]
    %v948 = vld [vmem:[#allocation2 + $0x1ac8] sm:$0xff]
    %v949 = vld [vmem:[#allocation2 + $0x1ad0] sm:$0xff]
    %v950 = vld [vmem:[#allocation2 + $0x1ad8] sm:$0xff]
    %v951 = vld [vmem:[#allocation2 + $0x1ae0] sm:$0xff]
    %v952 = vld [vmem:[#allocation2 + $0x1ae8] sm:$0xff]
    %v953 = vld [vmem:[#allocation2 + $0x1af0] sm:$0xff]
    %v954 = vld [vmem:[#allocation2 + $0x1af8] sm:$0xff]
    %v955 = vld [vmem:[#allocation2 + $0x1b00] sm:$0xff]
    %v956 = vld [vmem:[#allocation2 + $0x1b08] sm:$0xff]
    %v957 = vld [vmem:[#allocation2 + $0x1b10] sm:$0xff]
    %v958 = vld [vmem:[#allocation2 + $0x1b18] sm:$0xff]
    %v959 = vld [vmem:[#allocation2 + $0x1b20] sm:$0xff]
    %v960 = vld [vmem:[#allocation2 + $0x1b28] sm:$0xff]
    %v961 = vld [vmem:[#allocation2 + $0x1b30] sm:$0xff]
    %v962 = vld [vmem:[#allocation2 + $0x1b38] sm:$0xff]
    %v963 = vld [vmem:[#allocation2 + $0x1b40] sm:$0xff]
    %v964 = vld [vmem:[#allocation2 + $0x1b48] sm:$0xff]
    %v965 = vld [vmem:[#allocation2 + $0x1b50] sm:$0xff]
    %v966 = vld [vmem:[#allocation2 + $0x1b58] sm:$0xff]
    %v967 = vld [vmem:[#allocation2 + $0x1b60] sm:$0xff]
    %v968 = vld [vmem:[#allocation2 + $0x1b68] sm:$0xff]
    %v969 = vld [vmem:[#allocation2 + $0x1b70] sm:$0xff]
    %v970 = vld [vmem:[#allocation2 + $0x1b78] sm:$0xff]
    %v971 = vld [vmem:[#allocation2 + $0x1b80] sm:$0xff]
    %v972 = vld [vmem:[#allocation2 + $0x1b88] sm:$0xff]
    %v973 = vld [vmem:[#allocation2 + $0x1b90] sm:$0xff]
    %v974 = vld [vmem:[#allocation2 + $0x1b98] sm:$0xff]
    %v975 = vld [vmem:[#allocation2 + $0x1ba0] sm:$0xff]
    %v976 = vld [vmem:[#allocation2 + $0x1ba8] sm:$0xff]
    %v977 = vld [vmem:[#allocation2 + $0x1bb0] sm:$0xff]
    %v978 = vld [vmem:[#allocation2 + $0x1bb8] sm:$0xff]
    %v979 = vld [vmem:[#allocation2 + $0x1bc0] sm:$0xff]
    %v980 = vld [vmem:[#allocation2 + $0x1bc8] sm:$0xff]
    %v981 = vld [vmem:[#allocation2 + $0x1bd0] sm:$0xff]
    %v982 = vld [vmem:[#allocation2 + $0x1bd8] sm:$0xff]
    %v983 = vld [vmem:[#allocation2 + $0x1be0] sm:$0xff]
    %v984 = vld [vmem:[#allocation2 + $0x1be8] sm:$0xff]
    %v985 = vld [vmem:[#allocation2 + $0x1bf0] sm:$0xff]
    %v986 = vld [vmem:[#allocation2 + $0x1bf8] sm:$0xff]
    %v987 = vld [vmem:[#allocation2 + $0x1c00] sm:$0xff]
    %v988 = vld [vmem:[#allocation2 + $0x1c08] sm:$0xff]
    %v989 = vld [vmem:[#allocation2 + $0x1c10] sm:$0xff]
    %v990 = vld [vmem:[#allocation2 + $0x1c18] sm:$0xff]
    %v991 = vld [vmem:[#allocation2 + $0x1c20] sm:$0xff]
    %v992 = vld [vmem:[#allocation2 + $0x1c28] sm:$0xff]
    %v993 = vld [vmem:[#allocation2 + $0x1c30] sm:$0xff]
    %v994 = vld [vmem:[#allocation2 + $0x1c38] sm:$0xff]
    %v995 = vld [vmem:[#allocation2 + $0x1c40] sm:$0xff]
    %v996 = vld [vmem:[#allocation2 + $0x1c48] sm:$0xff]
    %v997 = vld [vmem:[#allocation2 + $0x1c50] sm:$0xff]
    %v998 = vld [vmem:[#allocation2 + $0x1c58] sm:$0xff]
    %v999 = vld [vmem:[#allocation2 + $0x1c60] sm:$0xff]
    %v1000 = vld [vmem:[#allocation2 + $0x1c68] sm:$0xff]
    %v1001 = vld [vmem:[#allocation2 + $0x1c70] sm:$0xff]
    %v1002 = vld [vmem:[#allocation2 + $0x1c78] sm:$0xff]
    %v1003 = vld [vmem:[#allocation2 + $0x1c80] sm:$0xff]
    %v1004 = vld [vmem:[#allocation2 + $0x1c88] sm:$0xff]
    %v1005 = vld [vmem:[#allocation2 + $0x1c90] sm:$0xff]
    %v1006 = vld [vmem:[#allocation2 + $0x1c98] sm:$0xff]
    %v1007 = vld [vmem:[#allocation2 + $0x1ca0] sm:$0xff]
    %v1008 = vld [vmem:[#allocation2 + $0x1ca8] sm:$0xff]
    %v1009 = vld [vmem:[#allocation2 + $0x1cb0] sm:$0xff]
    %v1010 = vld [vmem:[#allocation2 + $0x1cb8] sm:$0xff]
    %v1011 = vld [vmem:[#allocation2 + $0x1cc0] sm:$0xff]
    %v1012 = vld [vmem:[#allocation2 + $0x1cc8] sm:$0xff]
    %v1013 = vld [vmem:[#allocation2 + $0x1cd0] sm:$0xff]
    %v1014 = vld [vmem:[#allocation2 + $0x1cd8] sm:$0xff]
    %v1015 = vld [vmem:[#allocation2 + $0x1ce0] sm:$0xff]
    %v1016 = vld [vmem:[#allocation2 + $0x1ce8] sm:$0xff]
    %v1017 = vld [vmem:[#allocation2 + $0x1cf0] sm:$0xff]
    %v1018 = vld [vmem:[#allocation2 + $0x1cf8] sm:$0xff]
    %v1019 = vld [vmem:[#allocation2 + $0x1d00] sm:$0xff]
    %v1020 = vld [vmem:[#allocation2 + $0x1d08] sm:$0xff]
    %v1021 = vld [vmem:[#allocation2 + $0x1d10] sm:$0xff]
    %v1022 = vld [vmem:[#allocation2 + $0x1d18] sm:$0xff]
    %v1023 = vld [vmem:[#allocation2 + $0x1d20] sm:$0xff]
    %v1024 = vld [vmem:[#allocation2 + $0x1d28] sm:$0xff]
    %v1025 = vld [vmem:[#allocation2 + $0x1d30] sm:$0xff]
    %v1026 = vld [vmem:[#allocation2 + $0x1d38] sm:$0xff]
    %v1027 = vld [vmem:[#allocation2 + $0x1d40] sm:$0xff]
    %v1028 = vld [vmem:[#allocation2 + $0x1d48] sm:$0xff]
    %v1029 = vld [vmem:[#allocation2 + $0x1d50] sm:$0xff]
    %v1030 = vld [vmem:[#allocation2 + $0x1d58] sm:$0xff]
    %v1031 = vld [vmem:[#allocation2 + $0x1d60] sm:$0xff]
    %v1032 = vld [vmem:[#allocation2 + $0x1d68] sm:$0xff]
    %v1033 = vld [vmem:[#allocation2 + $0x1d70] sm:$0xff]
    %v1034 = vld [vmem:[#allocation2 + $0x1d78] sm:$0xff]
    %v1035 = vld [vmem:[#allocation2 + $0x1d80] sm:$0xff]
    %v1036 = vld [vmem:[#allocation2 + $0x1d88] sm:$0xff]
    %v1037 = vld [vmem:[#allocation2 + $0x1d90] sm:$0xff]
    %v1038 = vld [vmem:[#allocation2 + $0x1d98] sm:$0xff]
    %v1039 = vld [vmem:[#allocation2 + $0x1da0] sm:$0xff]
    %v1040 = vld [vmem:[#allocation2 + $0x1da8] sm:$0xff]
    %v1041 = vld [vmem:[#allocation2 + $0x1db0] sm:$0xff]
    %v1042 = vld [vmem:[#allocation2 + $0x1db8] sm:$0xff]
    %v1043 = vld [vmem:[#allocation2 + $0x1dc0] sm:$0xff]
    %v1044 = vld [vmem:[#allocation2 + $0x1dc8] sm:$0xff]
    %v1045 = vld [vmem:[#allocation2 + $0x1dd0] sm:$0xff]
    %v1046 = vld [vmem:[#allocation2 + $0x1dd8] sm:$0xff]
    %v1047 = vld [vmem:[#allocation2 + $0x1de0] sm:$0xff]
    %v1048 = vld [vmem:[#allocation2 + $0x1de8] sm:$0xff]
    %v1049 = vld [vmem:[#allocation2 + $0x1df0] sm:$0xff]
    %v1050 = vld [vmem:[#allocation2 + $0x1df8] sm:$0xff]
    %v1051 = vld [vmem:[#allocation2 + $0x1e00] sm:$0xff]
    %v1052 = vld [vmem:[#allocation2 + $0x1e08] sm:$0xff]
    %v1053 = vld [vmem:[#allocation2 + $0x1e10] sm:$0xff]
    %v1054 = vld [vmem:[#allocation2 + $0x1e18] sm:$0xff]
    %v1055 = vld [vmem:[#allocation2 + $0x1e20] sm:$0xff]
    %v1056 = vld [vmem:[#allocation2 + $0x1e28] sm:$0xff]
    %v1057 = vld [vmem:[#allocation2 + $0x1e30] sm:$0xff]
    %v1058 = vld [vmem:[#allocation2 + $0x1e38] sm:$0xff]
    %v1059 = vld [vmem:[#allocation2 + $0x1e40] sm:$0xff]
    %v1060 = vld [vmem:[#allocation2 + $0x1e48] sm:$0xff]
    %v1061 = vld [vmem:[#allocation2 + $0x1e50] sm:$0xff]
    %v1062 = vld [vmem:[#allocation2 + $0x1e58] sm:$0xff]
    %v1063 = vld [vmem:[#allocation2 + $0x1e60] sm:$0xff]
    %v1064 = vld [vmem:[#allocation2 + $0x1e68] sm:$0xff]
    %v1065 = vld [vmem:[#allocation2 + $0x1e70] sm:$0xff]
    %v1066 = vld [vmem:[#allocation2 + $0x1e78] sm:$0xff]
    %v1067 = vld [vmem:[#allocation2 + $0x1e80] sm:$0xff]
    %v1068 = vld [vmem:[#allocation2 + $0x1e88] sm:$0xff]
    %v1069 = vld [vmem:[#allocation2 + $0x1e90] sm:$0xff]
    %v1070 = vld [vmem:[#allocation2 + $0x1e98] sm:$0xff]
    %v1071 = vld [vmem:[#allocation2 + $0x1ea0] sm:$0xff]
    %v1072 = vld [vmem:[#allocation2 + $0x1ea8] sm:$0xff]
    %v1073 = vld [vmem:[#allocation2 + $0x1eb0] sm:$0xff]
    %v1074 = vld [vmem:[#allocation2 + $0x1eb8] sm:$0xff]
    %v1075 = vld [vmem:[#allocation2 + $0x1ec0] sm:$0xff]
    %v1076 = vld [vmem:[#allocation2 + $0x1ec8] sm:$0xff]
    %v1077 = vld [vmem:[#allocation2 + $0x1ed0] sm:$0xff]
    %v1078 = vld [vmem:[#allocation2 + $0x1ed8] sm:$0xff]
    %v1079 = vld [vmem:[#allocation2 + $0x1ee0] sm:$0xff]
    %v1080 = vld [vmem:[#allocation2 + $0x1ee8] sm:$0xff]
    %v1081 = vld [vmem:[#allocation2 + $0x1ef0] sm:$0xff]
    %v1082 = vld [vmem:[#allocation2 + $0x1ef8] sm:$0xff]
    %v1083 = vld [vmem:[#allocation2 + $0x1f00] sm:$0xff]
    %v1084 = vld [vmem:[#allocation2 + $0x1f08] sm:$0xff]
    %v1085 = vld [vmem:[#allocation2 + $0x1f10] sm:$0xff]
    %v1086 = vld [vmem:[#allocation2 + $0x1f18] sm:$0xff]
    %v1087 = vld [vmem:[#allocation2 + $0x1f20] sm:$0xff]
    %v1088 = vld [vmem:[#allocation2 + $0x1f28] sm:$0xff]
    %v1089 = vld [vmem:[#allocation2 + $0x1f30] sm:$0xff]
    %v1090 = vld [vmem:[#allocation2 + $0x1f38] sm:$0xff]
    %v1091 = vld [vmem:[#allocation2 + $0x1f40] sm:$0xff]
    %v1092 = vld [vmem:[#allocation2 + $0x1f48] sm:$0xff]
    %v1093 = vld [vmem:[#allocation2 + $0x1f50] sm:$0xff]
    %v1094 = vld [vmem:[#allocation2 + $0x1f58] sm:$0xff]
    %v1095 = vld [vmem:[#allocation2 + $0x1f60] sm:$0xff]
    %v1096 = vld [vmem:[#allocation2 + $0x1f68] sm:$0xff]
    %v1097 = vld [vmem:[#allocation2 + $0x1f70] sm:$0xff]
    %v1098 = vld [vmem:[#allocation2 + $0x1f78] sm:$0xff]
    %v1099 = vld [vmem:[#allocation2 + $0x1f80] sm:$0xff]
    %v1100 = vld [vmem:[#allocation2 + $0x1f88] sm:$0xff]
    %v1101 = vld [vmem:[#allocation2 + $0x1f90] sm:$0xff]
    %v1102 = vld [vmem:[#allocation2 + $0x1f98] sm:$0xff]
    %v1103 = vld [vmem:[#allocation2 + $0x1fa0] sm:$0xff]
    %v1104 = vld [vmem:[#allocation2 + $0x1fa8] sm:$0xff]
    %v1105 = vld [vmem:[#allocation2 + $0x1fb0] sm:$0xff]
    %v1106 = vld [vmem:[#allocation2 + $0x1fb8] sm:$0xff]
    %v1107 = vld [vmem:[#allocation2 + $0x1fc0] sm:$0xff]
    %v1108 = vld [vmem:[#allocation2 + $0x1fc8] sm:$0xff]
    %v1109 = vld [vmem:[#allocation2 + $0x1fd0] sm:$0xff]
    %v1110 = vld [vmem:[#allocation2 + $0x1fd8] sm:$0xff]
    %v1111 = vld [vmem:[#allocation2 + $0x1fe0] sm:$0xff]
    %v1112 = vld [vmem:[#allocation2 + $0x1fe8] sm:$0xff]
    %v1113 = vld [vmem:[#allocation2 + $0x1ff0] sm:$0xff]
    %v1114 = vld [vmem:[#allocation2 + $0x1ff8] sm:$0xff]
    %v1115 = vld [vmem:[#allocation2 + $0x2000] sm:$0xff]
    %v1116 = vld [vmem:[#allocation2 + $0x2008] sm:$0xff]
    %v1117 = vld [vmem:[#allocation2 + $0x2010] sm:$0xff]
    %v1118 = vld [vmem:[#allocation2 + $0x2018] sm:$0xff]
    %v1119 = vld [vmem:[#allocation2 + $0x2020] sm:$0xff]
    %v1120 = vld [vmem:[#allocation2 + $0x2028] sm:$0xff]
    %v1121 = vld [vmem:[#allocation2 + $0x2030] sm:$0xff]
    %v1122 = vld [vmem:[#allocation2 + $0x2038] sm:$0xff]
    %v1123 = vld [vmem:[#allocation2 + $0x2040] sm:$0xff]
    %v1124 = vld [vmem:[#allocation2 + $0x2048] sm:$0xff]
    %v1125 = vld [vmem:[#allocation2 + $0x2050] sm:$0xff]
    %v1126 = vld [vmem:[#allocation2 + $0x2058] sm:$0xff]
    %v1127 = vld [vmem:[#allocation2 + $0x2060] sm:$0xff]
    %v1128 = vld [vmem:[#allocation2 + $0x2068] sm:$0xff]
    %v1129 = vld [vmem:[#allocation2 + $0x2070] sm:$0xff]
    %v1130 = vld [vmem:[#allocation2 + $0x2078] sm:$0xff]
    %v1131 = vld [vmem:[#allocation2 + $0x2080] sm:$0xff]
    %v1132 = vld [vmem:[#allocation2 + $0x2088] sm:$0xff]
    %v1133 = vld [vmem:[#allocation2 + $0x2090] sm:$0xff]
    %v1134 = vld [vmem:[#allocation2 + $0x2098] sm:$0xff]
    %v1135 = vld [vmem:[#allocation2 + $0x20a0] sm:$0xff]
    %v1136 = vld [vmem:[#allocation2 + $0x20a8] sm:$0xff]
    %v1137 = vld [vmem:[#allocation2 + $0x20b0] sm:$0xff]
    %v1138 = vld [vmem:[#allocation2 + $0x20b8] sm:$0xff]
    %v1139 = vld [vmem:[#allocation2 + $0x20c0] sm:$0xff]
    %v1140 = vld [vmem:[#allocation2 + $0x20c8] sm:$0xff]
    %v1141 = vld [vmem:[#allocation2 + $0x20d0] sm:$0xff]
    %v1142 = vld [vmem:[#allocation2 + $0x20d8] sm:$0xff]
    %v1143 = vld [vmem:[#allocation2 + $0x20e0] sm:$0xff]
    %v1144 = vld [vmem:[#allocation2 + $0x20e8] sm:$0xff]
    %v1145 = vld [vmem:[#allocation2 + $0x20f0] sm:$0xff]
    %v1146 = vld [vmem:[#allocation2 + $0x20f8] sm:$0xff]
    %v1147 = vld [vmem:[#allocation2 + $0x2100] sm:$0xff]
    %v1148 = vld [vmem:[#allocation2 + $0x2108] sm:$0xff]
    %v1149 = vld [vmem:[#allocation2 + $0x2110] sm:$0xff]
    %v1150 = vld [vmem:[#allocation2 + $0x2118] sm:$0xff]
    %v1151 = vld [vmem:[#allocation2 + $0x2120] sm:$0xff]
    %v1152 = vld [vmem:[#allocation2 + $0x2128] sm:$0xff]
    %v1153 = vld [vmem:[#allocation2 + $0x2130] sm:$0xff]
    %v1154 = vld [vmem:[#allocation2 + $0x2138] sm:$0xff]
    %v1155 = vld [vmem:[#allocation2 + $0x2140] sm:$0xff]
    %v1156 = vld [vmem:[#allocation2 + $0x2148] sm:$0xff]
    %v1157 = vld [vmem:[#allocation2 + $0x2150] sm:$0xff]
    %v1158 = vld [vmem:[#allocation2 + $0x2158] sm:$0xff]
    %v1159 = vld [vmem:[#allocation2 + $0x2160] sm:$0xff]
    %v1160 = vld [vmem:[#allocation2 + $0x2168] sm:$0xff]
    %v1161 = vld [vmem:[#allocation2 + $0x2170] sm:$0xff]
    %v1162 = vld [vmem:[#allocation2 + $0x2178] sm:$0xff]
    %v1163 = vld [vmem:[#allocation2 + $0x2180] sm:$0xff]
    %v1164 = vld [vmem:[#allocation2 + $0x2188] sm:$0xff]
    %v1165 = vld [vmem:[#allocation2 + $0x2190] sm:$0xff]
    %v1166 = vld [vmem:[#allocation2 + $0x2198] sm:$0xff]
    %v1167 = vld [vmem:[#allocation2 + $0x21a0] sm:$0xff]
    %v1168 = vld [vmem:[#allocation2 + $0x21a8] sm:$0xff]
    %v1169 = vld [vmem:[#allocation2 + $0x21b0] sm:$0xff]
    %v1170 = vld [vmem:[#allocation2 + $0x21b8] sm:$0xff]
    %v1171 = vld [vmem:[#allocation2 + $0x21c0] sm:$0xff]
    %v1172 = vld [vmem:[#allocation2 + $0x21c8] sm:$0xff]
    %v1173 = vld [vmem:[#allocation2 + $0x21d0] sm:$0xff]
    %v1174 = vld [vmem:[#allocation2 + $0x21d8] sm:$0xff]
    %v1175 = vld [vmem:[#allocation2 + $0x21e0] sm:$0xff]
    %v1176 = vld [vmem:[#allocation2 + $0x21e8] sm:$0xff]
    %v1177 = vld [vmem:[#allocation2 + $0x21f0] sm:$0xff]
    %v1178 = vld [vmem:[#allocation2 + $0x21f8] sm:$0xff]
    %v1179 = vld [vmem:[#allocation2 + $0x2200] sm:$0xff]
    %v1180 = vld [vmem:[#allocation2 + $0x2208] sm:$0xff]
    %v1181 = vld [vmem:[#allocation2 + $0x2210] sm:$0xff]
    %v1182 = vld [vmem:[#allocation2 + $0x2218] sm:$0xff]
    %v1183 = vld [vmem:[#allocation2 + $0x2220] sm:$0xff]
    %v1184 = vld [vmem:[#allocation2 + $0x2228] sm:$0xff]
    %v1185 = vld [vmem:[#allocation2 + $0x2230] sm:$0xff]
    %v1186 = vld [vmem:[#allocation2 + $0x2238] sm:$0xff]
    %v1187 = vld [vmem:[#allocation2 + $0x2240] sm:$0xff]
    %v1188 = vld [vmem:[#allocation2 + $0x2248] sm:$0xff]
    %v1189 = vld [vmem:[#allocation2 + $0x2250] sm:$0xff]
    %v1190 = vld [vmem:[#allocation2 + $0x2258] sm:$0xff]
    %v1191 = vld [vmem:[#allocation2 + $0x2260] sm:$0xff]
    %v1192 = vld [vmem:[#allocation2 + $0x2268] sm:$0xff]
    %v1193 = vld [vmem:[#allocation2 + $0x2270] sm:$0xff]
    %v1194 = vld [vmem:[#allocation2 + $0x2278] sm:$0xff]
    %v1195 = vld [vmem:[#allocation2 + $0x2280] sm:$0xff]
    %v1196 = vld [vmem:[#allocation2 + $0x2288] sm:$0xff]
    %v1197 = vld [vmem:[#allocation2 + $0x2290] sm:$0xff]
    %v1198 = vld [vmem:[#allocation2 + $0x2298] sm:$0xff]
    %v1199 = vld [vmem:[#allocation2 + $0x22a0] sm:$0xff]
    %v1200 = vld [vmem:[#allocation2 + $0x22a8] sm:$0xff]
    %v1201 = vld [vmem:[#allocation2 + $0x22b0] sm:$0xff]
    %v1202 = vld [vmem:[#allocation2 + $0x22b8] sm:$0xff]
    %v1203 = vld [vmem:[#allocation2 + $0x22c0] sm:$0xff]
    %v1204 = vld [vmem:[#allocation2 + $0x22c8] sm:$0xff]
    %v1205 = vld [vmem:[#allocation2 + $0x22d0] sm:$0xff]
    %v1206 = vld [vmem:[#allocation2 + $0x22d8] sm:$0xff]
    %v1207 = vld [vmem:[#allocation2 + $0x22e0] sm:$0xff]
    %v1208 = vld [vmem:[#allocation2 + $0x22e8] sm:$0xff]
    %v1209 = vld [vmem:[#allocation2 + $0x22f0] sm:$0xff]
    %v1210 = vld [vmem:[#allocation2 + $0x22f8] sm:$0xff]
    %v1211 = vld [vmem:[#allocation2 + $0x2300] sm:$0xff]
    %v1212 = vld [vmem:[#allocation2 + $0x2308] sm:$0xff]
    %v1213 = vld [vmem:[#allocation2 + $0x2310] sm:$0xff]
    %v1214 = vld [vmem:[#allocation2 + $0x2318] sm:$0xff]
    %v1215 = vld [vmem:[#allocation2 + $0x2320] sm:$0xff]
    %v1216 = vld [vmem:[#allocation2 + $0x2328] sm:$0xff]
    %v1217 = vld [vmem:[#allocation2 + $0x2330] sm:$0xff]
    %v1218 = vld [vmem:[#allocation2 + $0x2338] sm:$0xff]
    %v1219 = vld [vmem:[#allocation2 + $0x2340] sm:$0xff]
    %v1220 = vld [vmem:[#allocation2 + $0x2348] sm:$0xff]
    %v1221 = vld [vmem:[#allocation2 + $0x2350] sm:$0xff]
    %v1222 = vld [vmem:[#allocation2 + $0x2358] sm:$0xff]
    %v1223 = vld [vmem:[#allocation2 + $0x2360] sm:$0xff]
    %v1224 = vld [vmem:[#allocation2 + $0x2368] sm:$0xff]
    %v1225 = vld [vmem:[#allocation2 + $0x2370] sm:$0xff]
    %v1226 = vld [vmem:[#allocation2 + $0x2378] sm:$0xff]
    %v1227 = vld [vmem:[#allocation2 + $0x2380] sm:$0xff]
    %v1228 = vld [vmem:[#allocation2 + $0x2388] sm:$0xff]
    %v1229 = vld [vmem:[#allocation2 + $0x2390] sm:$0xff]
    %v1230 = vld [vmem:[#allocation2 + $0x2398] sm:$0xff]
    %v1231 = vld [vmem:[#allocation2 + $0x23a0] sm:$0xff]
    %v1232 = vld [vmem:[#allocation2 + $0x23a8] sm:$0xff]
    %v1233 = vld [vmem:[#allocation2 + $0x23b0] sm:$0xff]
    %v1234 = vld [vmem:[#allocation2 + $0x23b8] sm:$0xff]
    %v1235 = vld [vmem:[#allocation2 + $0x23c0] sm:$0xff]
    %v1236 = vld [vmem:[#allocation2 + $0x23c8] sm:$0xff]
    %v1237 = vld [vmem:[#allocation2 + $0x23d0] sm:$0xff]
    %v1238 = vld [vmem:[#allocation2 + $0x23d8] sm:$0xff]
    %v1239 = vld [vmem:[#allocation2 + $0x23e0] sm:$0xff]
    %v1240 = vld [vmem:[#allocation2 + $0x23e8] sm:$0xff]
    %v1241 = vld [vmem:[#allocation2 + $0x23f0] sm:$0xff]
    %v1242 = vld [vmem:[#allocation2 + $0x23f8] sm:$0xff]
    %v1243 = vld [vmem:[#allocation2 + $0x2400] sm:$0xff]
    %v1244 = vld [vmem:[#allocation2 + $0x2408] sm:$0xff]
    %v1245 = vld [vmem:[#allocation2 + $0x2410] sm:$0xff]
    %v1246 = vld [vmem:[#allocation2 + $0x2418] sm:$0xff]
    %v1247 = vld [vmem:[#allocation2 + $0x2420] sm:$0xff]
    %v1248 = vld [vmem:[#allocation2 + $0x2428] sm:$0xff]
    %v1249 = vld [vmem:[#allocation2 + $0x2430] sm:$0xff]
    %v1250 = vld [vmem:[#allocation2 + $0x2438] sm:$0xff]
    %v1251 = vld [vmem:[#allocation2 + $0x2440] sm:$0xff]
    %v1252 = vld [vmem:[#allocation2 + $0x2448] sm:$0xff]
    %v1253 = vld [vmem:[#allocation2 + $0x2450] sm:$0xff]
    %v1254 = vld [vmem:[#allocation2 + $0x2458] sm:$0xff]
    %v1255 = vld [vmem:[#allocation2 + $0x2460] sm:$0xff]
    %v1256 = vld [vmem:[#allocation2 + $0x2468] sm:$0xff]
    %v1257 = vld [vmem:[#allocation2 + $0x2470] sm:$0xff]
    %v1258 = vld [vmem:[#allocation2 + $0x2478] sm:$0xff]
    %v1259 = vld [vmem:[#allocation2 + $0x2480] sm:$0xff]
    %v1260 = vld [vmem:[#allocation2 + $0x2488] sm:$0xff]
    %v1261 = vld [vmem:[#allocation2 + $0x2490] sm:$0xff]
    %v1262 = vld [vmem:[#allocation2 + $0x2498] sm:$0xff]
    %v1263 = vld [vmem:[#allocation2 + $0x24a0] sm:$0xff]
    %v1264 = vld [vmem:[#allocation2 + $0x24a8] sm:$0xff]
    %v1265 = vld [vmem:[#allocation2 + $0x24b0] sm:$0xff]
    %v1266 = vld [vmem:[#allocation2 + $0x24b8] sm:$0xff]
    %v1267 = vld [vmem:[#allocation2 + $0x24c0] sm:$0xff]
    %v1268 = vld [vmem:[#allocation2 + $0x24c8] sm:$0xff]
    %v1269 = vld [vmem:[#allocation2 + $0x24d0] sm:$0xff]
    %v1270 = vld [vmem:[#allocation2 + $0x24d8] sm:$0xff]
    %v1271 = vld [vmem:[#allocation2 + $0x24e0] sm:$0xff]
    %v1272 = vld [vmem:[#allocation2 + $0x24e8] sm:$0xff]
    %v1273 = vld [vmem:[#allocation2 + $0x24f0] sm:$0xff]
    %v1274 = vld [vmem:[#allocation2 + $0x24f8] sm:$0xff]
    %v1275 = vld [vmem:[#allocation2 + $0x2500] sm:$0xff]
    %v1276 = vld [vmem:[#allocation2 + $0x2508] sm:$0xff]
    %v1277 = vld [vmem:[#allocation2 + $0x2510] sm:$0xff]
    %v1278 = vld [vmem:[#allocation2 + $0x2518] sm:$0xff]
    %v1279 = vld [vmem:[#allocation2 + $0x2520] sm:$0xff]
    %v1280 = vld [vmem:[#allocation2 + $0x2528] sm:$0xff]
    %v1281 = vld [vmem:[#allocation2 + $0x2530] sm:$0xff]
    %v1282 = vld [vmem:[#allocation2 + $0x2538] sm:$0xff]
    %v1283 = vld [vmem:[#allocation2 + $0x2540] sm:$0xff]
    %v1284 = vld [vmem:[#allocation2 + $0x2548] sm:$0xff]
    %v1285 = vld [vmem:[#allocation2 + $0x2550] sm:$0xff]
    %v1286 = vld [vmem:[#allocation2 + $0x2558] sm:$0xff]
    %v1287 = vld [vmem:[#allocation2 + $0x2560] sm:$0xff]
    %v1288 = vld [vmem:[#allocation2 + $0x2568] sm:$0xff]
    %v1289 = vld [vmem:[#allocation2 + $0x2570] sm:$0xff]
    %v1290 = vld [vmem:[#allocation2 + $0x2578] sm:$0xff]
    %v1291 = vld [vmem:[#allocation2 + $0x2580] sm:$0xff]
    %v1292 = vld [vmem:[#allocation2 + $0x2588] sm:$0xff]
    %v1293 = vld [vmem:[#allocation2 + $0x2590] sm:$0xff]
    %v1294 = vld [vmem:[#allocation2 + $0x2598] sm:$0xff]
    %v1295 = vld [vmem:[#allocation2 + $0x25a0] sm:$0xff]
    %v1296 = vld [vmem:[#allocation2 + $0x25a8] sm:$0xff]
    %v1297 = vld [vmem:[#allocation2 + $0x25b0] sm:$0xff]
    %v1298 = vld [vmem:[#allocation2 + $0x25b8] sm:$0xff]
    %v1299 = vld [vmem:[#allocation2 + $0x25c0] sm:$0xff]
    %v1300 = vld [vmem:[#allocation2 + $0x25c8] sm:$0xff]
    %v1301 = vld [vmem:[#allocation2 + $0x25d0] sm:$0xff]
    %v1302 = vld [vmem:[#allocation2 + $0x25d8] sm:$0xff]
    %v1303 = vld [vmem:[#allocation2 + $0x25e0] sm:$0xff]
    %v1304 = vld [vmem:[#allocation2 + $0x25e8] sm:$0xff]
    %v1305 = vld [vmem:[#allocation2 + $0x25f0] sm:$0xff]
    %v1306 = vld [vmem:[#allocation2 + $0x25f8] sm:$0xff]
    %v1307 = vld [vmem:[#allocation2 + $0x2600] sm:$0xff]
    %v1308 = vld [vmem:[#allocation2 + $0x2608] sm:$0xff]
    %v1309 = vld [vmem:[#allocation2 + $0x2610] sm:$0xff]
    %v1310 = vld [vmem:[#allocation2 + $0x2618] sm:$0xff]
    %v1311 = vld [vmem:[#allocation2 + $0x2620] sm:$0xff]
    %v1312 = vld [vmem:[#allocation2 + $0x2628] sm:$0xff]
    %v1313 = vld [vmem:[#allocation2 + $0x2630] sm:$0xff]
    %v1314 = vld [vmem:[#allocation2 + $0x2638] sm:$0xff]
    %v1315 = vld [vmem:[#allocation2 + $0x2640] sm:$0xff]
    %v1316 = vld [vmem:[#allocation2 + $0x2648] sm:$0xff]
    %v1317 = vld [vmem:[#allocation2 + $0x2650] sm:$0xff]
    %v1318 = vld [vmem:[#allocation2 + $0x2658] sm:$0xff]
    %v1319 = vld [vmem:[#allocation2 + $0x2660] sm:$0xff]
    %v1320 = vld [vmem:[#allocation2 + $0x2668] sm:$0xff]
    %v1321 = vld [vmem:[#allocation2 + $0x2670] sm:$0xff]
    %v1322 = vld [vmem:[#allocation2 + $0x2678] sm:$0xff]
    %v1323 = vld [vmem:[#allocation2 + $0x2680] sm:$0xff]
    %v1324 = vld [vmem:[#allocation2 + $0x2688] sm:$0xff]
    %v1325 = vld [vmem:[#allocation2 + $0x2690] sm:$0xff]
    %v1326 = vld [vmem:[#allocation2 + $0x2698] sm:$0xff]
    %v1327 = vld [vmem:[#allocation2 + $0x26a0] sm:$0xff]
    %v1328 = vld [vmem:[#allocation2 + $0x26a8] sm:$0xff]
    %v1329 = vld [vmem:[#allocation2 + $0x26b0] sm:$0xff]
    %v1330 = vld [vmem:[#allocation2 + $0x26b8] sm:$0xff]
    %v1331 = vld [vmem:[#allocation2 + $0x26c0] sm:$0xff]
    %v1332 = vld [vmem:[#allocation2 + $0x26c8] sm:$0xff]
    %v1333 = vld [vmem:[#allocation2 + $0x26d0] sm:$0xff]
    %v1334 = vld [vmem:[#allocation2 + $0x26d8] sm:$0xff]
    %v1335 = vld [vmem:[#allocation2 + $0x26e0] sm:$0xff]
    %v1336 = vld [vmem:[#allocation2 + $0x26e8] sm:$0xff]
    %v1337 = vld [vmem:[#allocation2 + $0x26f0] sm:$0xff]
    %v1338 = vld [vmem:[#allocation2 + $0x26f8] sm:$0xff]
    %v1339 = vld [vmem:[#allocation2 + $0x2700] sm:$0xff]
    %v1340 = vld [vmem:[#allocation2 + $0x2708] sm:$0xff]
    %v1341 = vld [vmem:[#allocation2 + $0x2710] sm:$0xff]
    %v1342 = vld [vmem:[#allocation2 + $0x2718] sm:$0xff]
    %v1343 = vld [vmem:[#allocation2 + $0x2720] sm:$0xff]
    %v1344 = vld [vmem:[#allocation2 + $0x2728] sm:$0xff]
    %v1345 = vld [vmem:[#allocation2 + $0x2730] sm:$0xff]
    %v1346 = vld [vmem:[#allocation2 + $0x2738] sm:$0xff]
    %v1347 = vld [vmem:[#allocation2 + $0x2740] sm:$0xff]
    %v1348 = vld [vmem:[#allocation2 + $0x2748] sm:$0xff]
    %v1349 = vld [vmem:[#allocation2 + $0x2750] sm:$0xff]
    %v1350 = vld [vmem:[#allocation2 + $0x2758] sm:$0xff]
    %v1351 = vld [vmem:[#allocation2 + $0x2760] sm:$0xff]
    %v1352 = vld [vmem:[#allocation2 + $0x2768] sm:$0xff]
    %v1353 = vld [vmem:[#allocation2 + $0x2770] sm:$0xff]
    %v1354 = vld [vmem:[#allocation2 + $0x2778] sm:$0xff]
    %v1355 = vld [vmem:[#allocation2 + $0x2780] sm:$0xff]
    %v1356 = vld [vmem:[#allocation2 + $0x2788] sm:$0xff]
    %v1357 = vld [vmem:[#allocation2 + $0x2790] sm:$0xff]
    %v1358 = vld [vmem:[#allocation2 + $0x2798] sm:$0xff]
    %v1359 = vld [vmem:[#allocation2 + $0x27a0] sm:$0xff]
    %v1360 = vld [vmem:[#allocation2 + $0x27a8] sm:$0xff]
    %v1361 = vld [vmem:[#allocation2 + $0x27b0] sm:$0xff]
    %v1362 = vld [vmem:[#allocation2 + $0x27b8] sm:$0xff]
    %v1363 = vld [vmem:[#allocation2 + $0x27c0] sm:$0xff]
    %v1364 = vld [vmem:[#allocation2 + $0x27c8] sm:$0xff]
    %v1365 = vld [vmem:[#allocation2 + $0x27d0] sm:$0xff]
    %v1366 = vld [vmem:[#allocation2 + $0x27d8] sm:$0xff]
    %v1367 = vld [vmem:[#allocation2 + $0x27e0] sm:$0xff]
    %v1368 = vld [vmem:[#allocation2 + $0x27e8] sm:$0xff]
    %v1369 = vld [vmem:[#allocation2 + $0x27f0] sm:$0xff]
    %v1370 = vld [vmem:[#allocation2 + $0x27f8] sm:$0xff]
    %v1371 = vld [vmem:[#allocation2 + $0x2800] sm:$0xff]
    %v1372 = vld [vmem:[#allocation2 + $0x2808] sm:$0xff]
    %v1373 = vld [vmem:[#allocation2 + $0x2810] sm:$0xff]
    %v1374 = vld [vmem:[#allocation2 + $0x2818] sm:$0xff]
    %v1375 = vld [vmem:[#allocation2 + $0x2820] sm:$0xff]
    %v1376 = vld [vmem:[#allocation2 + $0x2828] sm:$0xff]
    %v1377 = vld [vmem:[#allocation2 + $0x2830] sm:$0xff]
    %v1378 = vld [vmem:[#allocation2 + $0x2838] sm:$0xff]
    %v1379 = vld [vmem:[#allocation2 + $0x2840] sm:$0xff]
    %v1380 = vld [vmem:[#allocation2 + $0x2848] sm:$0xff]
    %v1381 = vld [vmem:[#allocation2 + $0x2850] sm:$0xff]
    %v1382 = vld [vmem:[#allocation2 + $0x2858] sm:$0xff]
    %v1383 = vld [vmem:[#allocation2 + $0x2860] sm:$0xff]
    %v1384 = vld [vmem:[#allocation2 + $0x2868] sm:$0xff]
    %v1385 = vld [vmem:[#allocation2 + $0x2870] sm:$0xff]
    %v1386 = vld [vmem:[#allocation2 + $0x2878] sm:$0xff]
    %v1387 = vld [vmem:[#allocation2 + $0x2880] sm:$0xff]
    %v1388 = vld [vmem:[#allocation2 + $0x2888] sm:$0xff]
    %v1389 = vld [vmem:[#allocation2 + $0x2890] sm:$0xff]
    %v1390 = vld [vmem:[#allocation2 + $0x2898] sm:$0xff]
    %v1391 = vld [vmem:[#allocation2 + $0x28a0] sm:$0xff]
    %v1392 = vld [vmem:[#allocation2 + $0x28a8] sm:$0xff]
    %v1393 = vld [vmem:[#allocation2 + $0x28b0] sm:$0xff]
    %v1394 = vld [vmem:[#allocation2 + $0x28b8] sm:$0xff]
    %v1395 = vld [vmem:[#allocation2 + $0x28c0] sm:$0xff]
    %v1396 = vld [vmem:[#allocation2 + $0x28c8] sm:$0xff]
    %v1397 = vld [vmem:[#allocation2 + $0x28d0] sm:$0xff]
    %v1398 = vld [vmem:[#allocation2 + $0x28d8] sm:$0xff]
    %v1399 = vld [vmem:[#allocation2 + $0x28e0] sm:$0xff]
    %v1400 = vld [vmem:[#allocation2 + $0x28e8] sm:$0xff]
    %v1401 = vld [vmem:[#allocation2 + $0x28f0] sm:$0xff]
    %v1402 = vld [vmem:[#allocation2 + $0x28f8] sm:$0xff]
    %v1403 = vld [vmem:[#allocation2 + $0x2900] sm:$0xff]
    %v1404 = vld [vmem:[#allocation2 + $0x2908] sm:$0xff]
    %v1405 = vld [vmem:[#allocation2 + $0x2910] sm:$0xff]
    %v1406 = vld [vmem:[#allocation2 + $0x2918] sm:$0xff]
    %v1407 = vld [vmem:[#allocation2 + $0x2920] sm:$0xff]
    %v1408 = vld [vmem:[#allocation2 + $0x2928] sm:$0xff]
    %v1409 = vld [vmem:[#allocation2 + $0x2930] sm:$0xff]
    %v1410 = vld [vmem:[#allocation2 + $0x2938] sm:$0xff]
    %v1411 = vld [vmem:[#allocation2 + $0x2940] sm:$0xff]
    %v1412 = vld [vmem:[#allocation2 + $0x2948] sm:$0xff]
    %v1413 = vld [vmem:[#allocation2 + $0x2950] sm:$0xff]
    %v1414 = vld [vmem:[#allocation2 + $0x2958] sm:$0xff]
    %v1415 = vld [vmem:[#allocation2 + $0x2960] sm:$0xff]
    %v1416 = vld [vmem:[#allocation2 + $0x2968] sm:$0xff]
    %v1417 = vld [vmem:[#allocation2 + $0x2970] sm:$0xff]
    %v1418 = vld [vmem:[#allocation2 + $0x2978] sm:$0xff]
    %v1419 = vld [vmem:[#allocation2 + $0x2980] sm:$0xff]
    %v1420 = vld [vmem:[#allocation2 + $0x2988] sm:$0xff]
    %v1421 = vld [vmem:[#allocation2 + $0x2990] sm:$0xff]
    %v1422 = vld [vmem:[#allocation2 + $0x2998] sm:$0xff]
    %v1423 = vld [vmem:[#allocation2 + $0x29a0] sm:$0xff]
    %v1424 = vld [vmem:[#allocation2 + $0x29a8] sm:$0xff]
    %v1425 = vld [vmem:[#allocation2 + $0x29b0] sm:$0xff]
    %v1426 = vld [vmem:[#allocation2 + $0x29b8] sm:$0xff]
    %v1427 = vld [vmem:[#allocation2 + $0x29c0] sm:$0xff]
    %v1428 = vld [vmem:[#allocation2 + $0x29c8] sm:$0xff]
    %v1429 = vld [vmem:[#allocation2 + $0x29d0] sm:$0xff]
    %v1430 = vld [vmem:[#allocation2 + $0x29d8] sm:$0xff]
    %v1431 = vld [vmem:[#allocation2 + $0x29e0] sm:$0xff]
    %v1432 = vld [vmem:[#allocation2 + $0x29e8] sm:$0xff]
    %v1433 = vld [vmem:[#allocation2 + $0x29f0] sm:$0xff]
    %v1434 = vld [vmem:[#allocation2 + $0x29f8] sm:$0xff]
    %v1435 = vld [vmem:[#allocation2 + $0x2a00] sm:$0xff]
    %v1436 = vld [vmem:[#allocation2 + $0x2a08] sm:$0xff]
    %v1437 = vld [vmem:[#allocation2 + $0x2a10] sm:$0xff]
    %v1438 = vld [vmem:[#allocation2 + $0x2a18] sm:$0xff]
    %v1439 = vld [vmem:[#allocation2 + $0x2a20] sm:$0xff]
    %v1440 = vld [vmem:[#allocation2 + $0x2a28] sm:$0xff]
    %v1441 = vld [vmem:[#allocation2 + $0x2a30] sm:$0xff]
    %v1442 = vld [vmem:[#allocation2 + $0x2a38] sm:$0xff]
    %v1443 = vld [vmem:[#allocation5] sm:$0x3]
    %v1445 = vperm.slane %v1443, 0
    %v1446 = vperm.slane %v1443, 1
    %1460 = vst [vmem:[#allocation1] ss:$4 sm:$0xff] %v80
    %s1461 = scalar_lea.vmem [#allocation1], 32
    %1462 = vst [vmem:[%s1461] ss:$4 sm:$0xff] %v81
    %v1463 = vld.sshfl [vmem:[#allocation1] sm:$0xff pattern:$0x73625140]
    %v1464 = vld.sshfl [vmem:[#allocation1 + $0x8] sm:$0xff pattern:$0x73625140]
    %v1465 = vld.sshfl [vmem:[#allocation1 + $0x10] sm:$0xff pattern:$0x73625140]
    %v1466 = vld.sshfl [vmem:[#allocation1 + $0x18] sm:$0xff pattern:$0x73625140]
    %v1467 = vld.sshfl [vmem:[#allocation1 + $0x20] sm:$0xff pattern:$0x73625140]
    %v1468 = vld.sshfl [vmem:[#allocation1 + $0x28] sm:$0xff pattern:$0x73625140]
    %v1469 = vld.sshfl [vmem:[#allocation1 + $0x30] sm:$0xff pattern:$0x73625140]
    %v1470 = vld.sshfl [vmem:[#allocation1 + $0x38] sm:$0xff pattern:$0x73625140]
    %1471 = vst [vmem:[#allocation1] ss:$4 sm:$0xff] %v82
    %1472 = vst [vmem:[%s1461] ss:$4 sm:$0xff] %v83
    %v1473 = vld.sshfl [vmem:[#allocation1] sm:$0xff pattern:$0x73625140]
    %v1474 = vld.sshfl [vmem:[#allocation1 + $0x8] sm:$0xff pattern:$0x73625140]
    %v1475 = vld.sshfl [vmem:[#allocation1 + $0x10] sm:$0xff pattern:$0x73625140]
    %v1476 = vld.sshfl [vmem:[#allocation1 + $0x18] sm:$0xff pattern:$0x73625140]
    %v1477 = vld.sshfl [vmem:[#allocation1 + $0x20] sm:$0xff pattern:$0x73625140]
    %v1478 = vld.sshfl [vmem:[#allocation1 + $0x28] sm:$0xff pattern:$0x73625140]
    %v1479 = vld.sshfl [vmem:[#allocation1 + $0x30] sm:$0xff pattern:$0x73625140]
    %v1480 = vld.sshfl [vmem:[#allocation1 + $0x38] sm:$0xff pattern:$0x73625140]
    %1481 = vst [vmem:[#allocation1] ss:$4 sm:$0xff] %v84
    %1482 = vst [vmem:[%s1461] ss:$4 sm:$0xff] %v85
    %v1483 = vld.sshfl [vmem:[#allocation1] sm:$0xff pattern:$0x73625140]
    %v1484 = vld.sshfl [vmem:[#allocation1 + $0x8] sm:$0xff pattern:$0x73625140]
    %v1485 = vld.sshfl [vmem:[#allocation1 + $0x10] sm:$0xff pattern:$0x73625140]
    %v1486 = vld.sshfl [vmem:[#allocation1 + $0x18] sm:$0xff pattern:$0x73625140]
    %v1487 = vld.sshfl [vmem:[#allocation1 + $0x20] sm:$0xff pattern:$0x73625140]
    %v1488 = vld.sshfl [vmem:[#allocation1 + $0x28] sm:$0xff pattern:$0x73625140]
    %v1489 = vld.sshfl [vmem:[#allocation1 + $0x30] sm:$0xff pattern:$0x73625140]
    %v1490 = vld.sshfl [vmem:[#allocation1 + $0x38] sm:$0xff pattern:$0x73625140]
    %1491 = vst [vmem:[#allocation1] ss:$4 sm:$0xff] %v86
    %1492 = vst [vmem:[%s1461] ss:$4 sm:$0xff] %v87
    %v1493 = vld.sshfl [vmem:[#allocation1] sm:$0xff pattern:$0x73625140]
    %v1494 = vld.sshfl [vmem:[#allocation1 + $0x8] sm:$0xff pattern:$0x73625140]
    %v1495 = vld.sshfl [vmem:[#allocation1 + $0x10] sm:$0xff pattern:$0x73625140]
    %v1496 = vld.sshfl [vmem:[#allocation1 + $0x18] sm:$0xff pattern:$0x73625140]
    %v1497 = vld.sshfl [vmem:[#allocation1 + $0x20] sm:$0xff pattern:$0x73625140]
    %v1498 = vld.sshfl [vmem:[#allocation1 + $0x28] sm:$0xff pattern:$0x73625140]
    %v1499 = vld.sshfl [vmem:[#allocation1 + $0x30] sm:$0xff pattern:$0x73625140]
    %v1500 = vld.sshfl [vmem:[#allocation1 + $0x38] sm:$0xff pattern:$0x73625140]
    %1501 = vst [vmem:[#allocation1] ss:$4 sm:$0xff] %v88
    %1502 = vst [vmem:[%s1461] ss:$4 sm:$0xff] %v89
    %v1503 = vld.sshfl [vmem:[#allocation1] sm:$0xff pattern:$0x73625140]
    %v1504 = vld.sshfl [vmem:[#allocation1 + $0x8] sm:$0xff pattern:$0x73625140]
    %v1505 = vld.sshfl [vmem:[#allocation1 + $0x10] sm:$0xff pattern:$0x73625140]
    %v1506 = vld.sshfl [vmem:[#allocation1 + $0x18] sm:$0xff pattern:$0x73625140]
    %v1507 = vld.sshfl [vmem:[#allocation1 + $0x20] sm:$0xff pattern:$0x73625140]
    %v1508 = vld.sshfl [vmem:[#allocation1 + $0x28] sm:$0xff pattern:$0x73625140]
    %v1509 = vld.sshfl [vmem:[#allocation1 + $0x30] sm:$0xff pattern:$0x73625140]
    %v1510 = vld.sshfl [vmem:[#allocation1 + $0x38] sm:$0xff pattern:$0x73625140]
    %1511 = vst [vmem:[#allocation1] ss:$4 sm:$0xff] %v90
    %v1512 = vld.sshfl [vmem:[#allocation1] sm:$0xff pattern:$0x73625140]
    %v1513 = vld.sshfl [vmem:[#allocation1 + $0x8] sm:$0xff pattern:$0x73625140]
    %v1514 = vld.sshfl [vmem:[#allocation1 + $0x10] sm:$0xff pattern:$0x73625140]
    %vm1557 = vcmask 261120
    %v1558 = vsel %vm1557, %v1514, 0
    %1560 = vmatpush.msra.mxu0 %v121
    %1561 = vmatpush.msra.mxu0 %v119
    %1562 = vmatpush.msra.mxu0 %v117
    %1563 = vmatpush.msra.mxu0 %v115
    %1564 = vmatpush.msra.mxu0 %v113
    %1565 = vmatpush.msra.mxu0 %v111
    %1566 = vmatpush.msra.mxu0 %v109
    %1567 = vmatpush.msra.mxu0 %v107
    %1568 = vmatpush.msra.mxu0 %v105
    %1569 = vmatpush.msra.mxu0 %v103
    %1570 = vmatpush.msra.mxu0 %v101
    %1571 = vmatpush.msra.mxu0 %v99
    %1572 = vmatpush.msra.mxu0 %v97
    %1573 = vmatpush.msra.mxu0 %v95
    %1574 = vmatpush.msra.mxu0 %v93
    %1575 = vmatpush.msra.mxu0 %v91
    %1576 = vmatmul.f32.gmra.mxu0 %v1463
    %v1577 = vpop.f32.mrf.mxu0
    %v1578 = vadd.f32 %v1445, %v1577
    %1579 = vdwg.mxu0
    %1580 = vmatpush.msra.mxu0 %v153
    %1581 = vmatpush.msra.mxu0 %v151
    %1582 = vmatpush.msra.mxu0 %v149
    %1583 = vmatpush.msra.mxu0 %v147
    %1584 = vmatpush.msra.mxu0 %v145
    %1585 = vmatpush.msra.mxu0 %v143
    %1586 = vmatpush.msra.mxu0 %v141
    %1587 = vmatpush.msra.mxu0 %v139
    %1588 = vmatpush.msra.mxu0 %v137
    %1589 = vmatpush.msra.mxu0 %v135
    %1590 = vmatpush.msra.mxu0 %v133
    %1591 = vmatpush.msra.mxu0 %v131
    %1592 = vmatpush.msra.mxu0 %v129
    %1593 = vmatpush.msra.mxu0 %v127
    %1594 = vmatpush.msra.mxu0 %v125
    %1595 = vmatpush.msra.mxu0 %v123
    %1596 = vmatmul.f32.gmra.mxu0 %v1464
    %v1597 = vpop.f32.mrf.mxu0
    %v1598 = vadd.f32 %v1578, %v1597
    %1599 = vdwg.mxu0
    %1600 = vmatpush.msra.mxu0 %v185
    %1601 = vmatpush.msra.mxu0 %v183
    %1602 = vmatpush.msra.mxu0 %v181
    %1603 = vmatpush.msra.mxu0 %v179
    %1604 = vmatpush.msra.mxu0 %v177
    %1605 = vmatpush.msra.mxu0 %v175
    %1606 = vmatpush.msra.mxu0 %v173
    %1607 = vmatpush.msra.mxu0 %v171
    %1608 = vmatpush.msra.mxu0 %v169
    %1609 = vmatpush.msra.mxu0 %v167
    %1610 = vmatpush.msra.mxu0 %v165
    %1611 = vmatpush.msra.mxu0 %v163
    %1612 = vmatpush.msra.mxu0 %v161
    %1613 = vmatpush.msra.mxu0 %v159
    %1614 = vmatpush.msra.mxu0 %v157
    %1615 = vmatpush.msra.mxu0 %v155
    %1616 = vmatmul.f32.gmra.mxu0 %v1465
    %v1617 = vpop.f32.mrf.mxu0
    %v1618 = vadd.f32 %v1598, %v1617
    %1619 = vdwg.mxu0
    %1620 = vmatpush.msra.mxu0 %v217
    %1621 = vmatpush.msra.mxu0 %v215
    %1622 = vmatpush.msra.mxu0 %v213
    %1623 = vmatpush.msra.mxu0 %v211
    %1624 = vmatpush.msra.mxu0 %v209
    %1625 = vmatpush.msra.mxu0 %v207
    %1626 = vmatpush.msra.mxu0 %v205
    %1627 = vmatpush.msra.mxu0 %v203
    %1628 = vmatpush.msra.mxu0 %v201
    %1629 = vmatpush.msra.mxu0 %v199
    %1630 = vmatpush.msra.mxu0 %v197
    %1631 = vmatpush.msra.mxu0 %v195
    %1632 = vmatpush.msra.mxu0 %v193
    %1633 = vmatpush.msra.mxu0 %v191
    %1634 = vmatpush.msra.mxu0 %v189
    %1635 = vmatpush.msra.mxu0 %v187
    %1636 = vmatmul.f32.gmra.mxu0 %v1466
    %v1637 = vpop.f32.mrf.mxu0
    %v1638 = vadd.f32 %v1618, %v1637
    %1639 = vdwg.mxu0
    %1640 = vmatpush.msra.mxu0 %v249
    %1641 = vmatpush.msra.mxu0 %v247
    %1642 = vmatpush.msra.mxu0 %v245
    %1643 = vmatpush.msra.mxu0 %v243
    %1644 = vmatpush.msra.mxu0 %v241
    %1645 = vmatpush.msra.mxu0 %v239
    %1646 = vmatpush.msra.mxu0 %v237
    %1647 = vmatpush.msra.mxu0 %v235
    %1648 = vmatpush.msra.mxu0 %v233
    %1649 = vmatpush.msra.mxu0 %v231
    %1650 = vmatpush.msra.mxu0 %v229
    %1651 = vmatpush.msra.mxu0 %v227
    %1652 = vmatpush.msra.mxu0 %v225
    %1653 = vmatpush.msra.mxu0 %v223
    %1654 = vmatpush.msra.mxu0 %v221
    %1655 = vmatpush.msra.mxu0 %v219
    %1656 = vmatmul.f32.gmra.mxu0 %v1467
    %v1657 = vpop.f32.mrf.mxu0
    %v1658 = vadd.f32 %v1638, %v1657
    %1659 = vdwg.mxu0
    %1660 = vmatpush.msra.mxu0 %v281
    %1661 = vmatpush.msra.mxu0 %v279
    %1662 = vmatpush.msra.mxu0 %v277
    %1663 = vmatpush.msra.mxu0 %v275
    %1664 = vmatpush.msra.mxu0 %v273
    %1665 = vmatpush.msra.mxu0 %v271
    %1666 = vmatpush.msra.mxu0 %v269
    %1667 = vmatpush.msra.mxu0 %v267
    %1668 = vmatpush.msra.mxu0 %v265
    %1669 = vmatpush.msra.mxu0 %v263
    %1670 = vmatpush.msra.mxu0 %v261
    %1671 = vmatpush.msra.mxu0 %v259
    %1672 = vmatpush.msra.mxu0 %v257
    %1673 = vmatpush.msra.mxu0 %v255
    %1674 = vmatpush.msra.mxu0 %v253
    %1675 = vmatpush.msra.mxu0 %v251
    %1676 = vmatmul.f32.gmra.mxu0 %v1468
    %v1677 = vpop.f32.mrf.mxu0
    %v1678 = vadd.f32 %v1658, %v1677
    %1679 = vdwg.mxu0
    %1680 = vmatpush.msra.mxu0 %v313
    %1681 = vmatpush.msra.mxu0 %v311
    %1682 = vmatpush.msra.mxu0 %v309
    %1683 = vmatpush.msra.mxu0 %v307
    %1684 = vmatpush.msra.mxu0 %v305
    %1685 = vmatpush.msra.mxu0 %v303
    %1686 = vmatpush.msra.mxu0 %v301
    %1687 = vmatpush.msra.mxu0 %v299
    %1688 = vmatpush.msra.mxu0 %v297
    %1689 = vmatpush.msra.mxu0 %v295
    %1690 = vmatpush.msra.mxu0 %v293
    %1691 = vmatpush.msra.mxu0 %v291
    %1692 = vmatpush.msra.mxu0 %v289
    %1693 = vmatpush.msra.mxu0 %v287
    %1694 = vmatpush.msra.mxu0 %v285
    %1695 = vmatpush.msra.mxu0 %v283
    %1696 = vmatmul.f32.gmra.mxu0 %v1469
    %v1697 = vpop.f32.mrf.mxu0
    %v1698 = vadd.f32 %v1678, %v1697
    %1699 = vdwg.mxu0
    %1700 = vmatpush.msra.mxu0 %v345
    %1701 = vmatpush.msra.mxu0 %v343
    %1702 = vmatpush.msra.mxu0 %v341
    %1703 = vmatpush.msra.mxu0 %v339
    %1704 = vmatpush.msra.mxu0 %v337
    %1705 = vmatpush.msra.mxu0 %v335
    %1706 = vmatpush.msra.mxu0 %v333
    %1707 = vmatpush.msra.mxu0 %v331
    %1708 = vmatpush.msra.mxu0 %v329
    %1709 = vmatpush.msra.mxu0 %v327
    %1710 = vmatpush.msra.mxu0 %v325
    %1711 = vmatpush.msra.mxu0 %v323
    %1712 = vmatpush.msra.mxu0 %v321
    %1713 = vmatpush.msra.mxu0 %v319
    %1714 = vmatpush.msra.mxu0 %v317
    %1715 = vmatpush.msra.mxu0 %v315
    %1716 = vmatmul.f32.gmra.mxu0 %v1470
    %v1717 = vpop.f32.mrf.mxu0
    %v1718 = vadd.f32 %v1698, %v1717
    %1719 = vdwg.mxu0
    %1720 = vmatpush.msra.mxu0 %v377
    %1721 = vmatpush.msra.mxu0 %v375
    %1722 = vmatpush.msra.mxu0 %v373
    %1723 = vmatpush.msra.mxu0 %v371
    %1724 = vmatpush.msra.mxu0 %v369
    %1725 = vmatpush.msra.mxu0 %v367
    %1726 = vmatpush.msra.mxu0 %v365
    %1727 = vmatpush.msra.mxu0 %v363
    %1728 = vmatpush.msra.mxu0 %v361
    %1729 = vmatpush.msra.mxu0 %v359
    %1730 = vmatpush.msra.mxu0 %v357
    %1731 = vmatpush.msra.mxu0 %v355
    %1732 = vmatpush.msra.mxu0 %v353
    %1733 = vmatpush.msra.mxu0 %v351
    %1734 = vmatpush.msra.mxu0 %v349
    %1735 = vmatpush.msra.mxu0 %v347
    %1736 = vmatmul.f32.gmra.mxu0 %v1473
    %v1737 = vpop.f32.mrf.mxu0
    %v1738 = vadd.f32 %v1718, %v1737
    %1739 = vdwg.mxu0
    %1740 = vmatpush.msra.mxu0 %v409
    %1741 = vmatpush.msra.mxu0 %v407
    %1742 = vmatpush.msra.mxu0 %v405
    %1743 = vmatpush.msra.mxu0 %v403
    %1744 = vmatpush.msra.mxu0 %v401
    %1745 = vmatpush.msra.mxu0 %v399
    %1746 = vmatpush.msra.mxu0 %v397
    %1747 = vmatpush.msra.mxu0 %v395
    %1748 = vmatpush.msra.mxu0 %v393
    %1749 = vmatpush.msra.mxu0 %v391
    %1750 = vmatpush.msra.mxu0 %v389
    %1751 = vmatpush.msra.mxu0 %v387
    %1752 = vmatpush.msra.mxu0 %v385
    %1753 = vmatpush.msra.mxu0 %v383
    %1754 = vmatpush.msra.mxu0 %v381
    %1755 = vmatpush.msra.mxu0 %v379
    %1756 = vmatmul.f32.gmra.mxu0 %v1474
    %v1757 = vpop.f32.mrf.mxu0
    %v1758 = vadd.f32 %v1738, %v1757
    %1759 = vdwg.mxu0
    %1760 = vmatpush.msra.mxu0 %v441
    %1761 = vmatpush.msra.mxu0 %v439
    %1762 = vmatpush.msra.mxu0 %v437
    %1763 = vmatpush.msra.mxu0 %v435
    %1764 = vmatpush.msra.mxu0 %v433
    %1765 = vmatpush.msra.mxu0 %v431
    %1766 = vmatpush.msra.mxu0 %v429
    %1767 = vmatpush.msra.mxu0 %v427
    %1768 = vmatpush.msra.mxu0 %v425
    %1769 = vmatpush.msra.mxu0 %v423
    %1770 = vmatpush.msra.mxu0 %v421
    %1771 = vmatpush.msra.mxu0 %v419
    %1772 = vmatpush.msra.mxu0 %v417
    %1773 = vmatpush.msra.mxu0 %v415
    %1774 = vmatpush.msra.mxu0 %v413
    %1775 = vmatpush.msra.mxu0 %v411
    %1776 = vmatmul.f32.gmra.mxu0 %v1475
    %v1777 = vpop.f32.mrf.mxu0
    %v1778 = vadd.f32 %v1758, %v1777
    %1779 = vdwg.mxu0
    %1780 = vmatpush.msra.mxu0 %v473
    %1781 = vmatpush.msra.mxu0 %v471
    %1782 = vmatpush.msra.mxu0 %v469
    %1783 = vmatpush.msra.mxu0 %v467
    %1784 = vmatpush.msra.mxu0 %v465
    %1785 = vmatpush.msra.mxu0 %v463
    %1786 = vmatpush.msra.mxu0 %v461
    %1787 = vmatpush.msra.mxu0 %v459
    %1788 = vmatpush.msra.mxu0 %v457
    %1789 = vmatpush.msra.mxu0 %v455
    %1790 = vmatpush.msra.mxu0 %v453
    %1791 = vmatpush.msra.mxu0 %v451
    %1792 = vmatpush.msra.mxu0 %v449
    %1793 = vmatpush.msra.mxu0 %v447
    %1794 = vmatpush.msra.mxu0 %v445
    %1795 = vmatpush.msra.mxu0 %v443
    %1796 = vmatmul.f32.gmra.mxu0 %v1476
    %v1797 = vpop.f32.mrf.mxu0
    %v1798 = vadd.f32 %v1778, %v1797
    %1799 = vdwg.mxu0
    %1800 = vmatpush.msra.mxu0 %v505
    %1801 = vmatpush.msra.mxu0 %v503
    %1802 = vmatpush.msra.mxu0 %v501
    %1803 = vmatpush.msra.mxu0 %v499
    %1804 = vmatpush.msra.mxu0 %v497
    %1805 = vmatpush.msra.mxu0 %v495
    %1806 = vmatpush.msra.mxu0 %v493
    %1807 = vmatpush.msra.mxu0 %v491
    %1808 = vmatpush.msra.mxu0 %v489
    %1809 = vmatpush.msra.mxu0 %v487
    %1810 = vmatpush.msra.mxu0 %v485
    %1811 = vmatpush.msra.mxu0 %v483
    %1812 = vmatpush.msra.mxu0 %v481
    %1813 = vmatpush.msra.mxu0 %v479
    %1814 = vmatpush.msra.mxu0 %v477
    %1815 = vmatpush.msra.mxu0 %v475
    %1816 = vmatmul.f32.gmra.mxu0 %v1477
    %v1817 = vpop.f32.mrf.mxu0
    %v1818 = vadd.f32 %v1798, %v1817
    %1819 = vdwg.mxu0
    %1820 = vmatpush.msra.mxu0 %v537
    %1821 = vmatpush.msra.mxu0 %v535
    %1822 = vmatpush.msra.mxu0 %v533
    %1823 = vmatpush.msra.mxu0 %v531
    %1824 = vmatpush.msra.mxu0 %v529
    %1825 = vmatpush.msra.mxu0 %v527
    %1826 = vmatpush.msra.mxu0 %v525
    %1827 = vmatpush.msra.mxu0 %v523
    %1828 = vmatpush.msra.mxu0 %v521
    %1829 = vmatpush.msra.mxu0 %v519
    %1830 = vmatpush.msra.mxu0 %v517
    %1831 = vmatpush.msra.mxu0 %v515
    %1832 = vmatpush.msra.mxu0 %v513
    %1833 = vmatpush.msra.mxu0 %v511
    %1834 = vmatpush.msra.mxu0 %v509
    %1835 = vmatpush.msra.mxu0 %v507
    %1836 = vmatmul.f32.gmra.mxu0 %v1478
    %v1837 = vpop.f32.mrf.mxu0
    %v1838 = vadd.f32 %v1818, %v1837
    %1839 = vdwg.mxu0
    %1840 = vmatpush.msra.mxu0 %v569
    %1841 = vmatpush.msra.mxu0 %v567
    %1842 = vmatpush.msra.mxu0 %v565
    %1843 = vmatpush.msra.mxu0 %v563
    %1844 = vmatpush.msra.mxu0 %v561
    %1845 = vmatpush.msra.mxu0 %v559
    %1846 = vmatpush.msra.mxu0 %v557
    %1847 = vmatpush.msra.mxu0 %v555
    %1848 = vmatpush.msra.mxu0 %v553
    %1849 = vmatpush.msra.mxu0 %v551
    %1850 = vmatpush.msra.mxu0 %v549
    %1851 = vmatpush.msra.mxu0 %v547
    %1852 = vmatpush.msra.mxu0 %v545
    %1853 = vmatpush.msra.mxu0 %v543
    %1854 = vmatpush.msra.mxu0 %v541
    %1855 = vmatpush.msra.mxu0 %v539
    %1856 = vmatmul.f32.gmra.mxu0 %v1479
    %v1857 = vpop.f32.mrf.mxu0
    %v1858 = vadd.f32 %v1838, %v1857
    %1859 = vdwg.mxu0
    %1860 = vmatpush.msra.mxu0 %v601
    %1861 = vmatpush.msra.mxu0 %v599
    %1862 = vmatpush.msra.mxu0 %v597
    %1863 = vmatpush.msra.mxu0 %v595
    %1864 = vmatpush.msra.mxu0 %v593
    %1865 = vmatpush.msra.mxu0 %v591
    %1866 = vmatpush.msra.mxu0 %v589
    %1867 = vmatpush.msra.mxu0 %v587
    %1868 = vmatpush.msra.mxu0 %v585
    %1869 = vmatpush.msra.mxu0 %v583
    %1870 = vmatpush.msra.mxu0 %v581
    %1871 = vmatpush.msra.mxu0 %v579
    %1872 = vmatpush.msra.mxu0 %v577
    %1873 = vmatpush.msra.mxu0 %v575
    %1874 = vmatpush.msra.mxu0 %v573
    %1875 = vmatpush.msra.mxu0 %v571
    %1876 = vmatmul.f32.gmra.mxu0 %v1480
    %v1877 = vpop.f32.mrf.mxu0
    %v1878 = vadd.f32 %v1858, %v1877
    %1879 = vdwg.mxu0
    %1880 = vmatpush.msra.mxu0 %v633
    %1881 = vmatpush.msra.mxu0 %v631
    %1882 = vmatpush.msra.mxu0 %v629
    %1883 = vmatpush.msra.mxu0 %v627
    %1884 = vmatpush.msra.mxu0 %v625
    %1885 = vmatpush.msra.mxu0 %v623
    %1886 = vmatpush.msra.mxu0 %v621
    %1887 = vmatpush.msra.mxu0 %v619
    %1888 = vmatpush.msra.mxu0 %v617
    %1889 = vmatpush.msra.mxu0 %v615
    %1890 = vmatpush.msra.mxu0 %v613
    %1891 = vmatpush.msra.mxu0 %v611
    %1892 = vmatpush.msra.mxu0 %v609
    %1893 = vmatpush.msra.mxu0 %v607
    %1894 = vmatpush.msra.mxu0 %v605
    %1895 = vmatpush.msra.mxu0 %v603
    %1896 = vmatmul.f32.gmra.mxu0 %v1483
    %v1897 = vpop.f32.mrf.mxu0
    %v1898 = vadd.f32 %v1878, %v1897
    %1899 = vdwg.mxu0
    %1900 = vmatpush.msra.mxu0 %v665
    %1901 = vmatpush.msra.mxu0 %v663
    %1902 = vmatpush.msra.mxu0 %v661
    %1903 = vmatpush.msra.mxu0 %v659
    %1904 = vmatpush.msra.mxu0 %v657
    %1905 = vmatpush.msra.mxu0 %v655
    %1906 = vmatpush.msra.mxu0 %v653
    %1907 = vmatpush.msra.mxu0 %v651
    %1908 = vmatpush.msra.mxu0 %v649
    %1909 = vmatpush.msra.mxu0 %v647
    %1910 = vmatpush.msra.mxu0 %v645
    %1911 = vmatpush.msra.mxu0 %v643
    %1912 = vmatpush.msra.mxu0 %v641
    %1913 = vmatpush.msra.mxu0 %v639
    %1914 = vmatpush.msra.mxu0 %v637
    %1915 = vmatpush.msra.mxu0 %v635
    %1916 = vmatmul.f32.gmra.mxu0 %v1484
    %v1917 = vpop.f32.mrf.mxu0
    %v1918 = vadd.f32 %v1898, %v1917
    %1919 = vdwg.mxu0
    %1920 = vmatpush.msra.mxu0 %v697
    %1921 = vmatpush.msra.mxu0 %v695
    %1922 = vmatpush.msra.mxu0 %v693
    %1923 = vmatpush.msra.mxu0 %v691
    %1924 = vmatpush.msra.mxu0 %v689
    %1925 = vmatpush.msra.mxu0 %v687
    %1926 = vmatpush.msra.mxu0 %v685
    %1927 = vmatpush.msra.mxu0 %v683
    %1928 = vmatpush.msra.mxu0 %v681
    %1929 = vmatpush.msra.mxu0 %v679
    %1930 = vmatpush.msra.mxu0 %v677
    %1931 = vmatpush.msra.mxu0 %v675
    %1932 = vmatpush.msra.mxu0 %v673
    %1933 = vmatpush.msra.mxu0 %v671
    %1934 = vmatpush.msra.mxu0 %v669
    %1935 = vmatpush.msra.mxu0 %v667
    %1936 = vmatmul.f32.gmra.mxu0 %v1485
    %v1937 = vpop.f32.mrf.mxu0
    %v1938 = vadd.f32 %v1918, %v1937
    %1939 = vdwg.mxu0
    %1940 = vmatpush.msra.mxu0 %v729
    %1941 = vmatpush.msra.mxu0 %v727
    %1942 = vmatpush.msra.mxu0 %v725
    %1943 = vmatpush.msra.mxu0 %v723
    %1944 = vmatpush.msra.mxu0 %v721
    %1945 = vmatpush.msra.mxu0 %v719
    %1946 = vmatpush.msra.mxu0 %v717
    %1947 = vmatpush.msra.mxu0 %v715
    %1948 = vmatpush.msra.mxu0 %v713
    %1949 = vmatpush.msra.mxu0 %v711
    %1950 = vmatpush.msra.mxu0 %v709
    %1951 = vmatpush.msra.mxu0 %v707
    %1952 = vmatpush.msra.mxu0 %v705
    %1953 = vmatpush.msra.mxu0 %v703
    %1954 = vmatpush.msra.mxu0 %v701
    %1955 = vmatpush.msra.mxu0 %v699
    %1956 = vmatmul.f32.gmra.mxu0 %v1486
    %v1957 = vpop.f32.mrf.mxu0
    %v1958 = vadd.f32 %v1938, %v1957
    %1959 = vdwg.mxu0
    %1960 = vmatpush.msra.mxu0 %v761
    %1961 = vmatpush.msra.mxu0 %v759
    %1962 = vmatpush.msra.mxu0 %v757
    %1963 = vmatpush.msra.mxu0 %v755
    %1964 = vmatpush.msra.mxu0 %v753
    %1965 = vmatpush.msra.mxu0 %v751
    %1966 = vmatpush.msra.mxu0 %v749
    %1967 = vmatpush.msra.mxu0 %v747
    %1968 = vmatpush.msra.mxu0 %v745
    %1969 = vmatpush.msra.mxu0 %v743
    %1970 = vmatpush.msra.mxu0 %v741
    %1971 = vmatpush.msra.mxu0 %v739
    %1972 = vmatpush.msra.mxu0 %v737
    %1973 = vmatpush.msra.mxu0 %v735
    %1974 = vmatpush.msra.mxu0 %v733
    %1975 = vmatpush.msra.mxu0 %v731
    %1976 = vmatmul.f32.gmra.mxu0 %v1487
    %v1977 = vpop.f32.mrf.mxu0
    %v1978 = vadd.f32 %v1958, %v1977
    %1979 = vdwg.mxu0
    %1980 = vmatpush.msra.mxu0 %v793
    %1981 = vmatpush.msra.mxu0 %v791
    %1982 = vmatpush.msra.mxu0 %v789
    %1983 = vmatpush.msra.mxu0 %v787
    %1984 = vmatpush.msra.mxu0 %v785
    %1985 = vmatpush.msra.mxu0 %v783
    %1986 = vmatpush.msra.mxu0 %v781
    %1987 = vmatpush.msra.mxu0 %v779
    %1988 = vmatpush.msra.mxu0 %v777
    %1989 = vmatpush.msra.mxu0 %v775
    %1990 = vmatpush.msra.mxu0 %v773
    %1991 = vmatpush.msra.mxu0 %v771
    %1992 = vmatpush.msra.mxu0 %v769
    %1993 = vmatpush.msra.mxu0 %v767
    %1994 = vmatpush.msra.mxu0 %v765
    %1995 = vmatpush.msra.mxu0 %v763
    %1996 = vmatmul.f32.gmra.mxu0 %v1488
    %v1997 = vpop.f32.mrf.mxu0
    %v1998 = vadd.f32 %v1978, %v1997
    %1999 = vdwg.mxu0
    %2000 = vmatpush.msra.mxu0 %v825
    %2001 = vmatpush.msra.mxu0 %v823
    %2002 = vmatpush.msra.mxu0 %v821
    %2003 = vmatpush.msra.mxu0 %v819
    %2004 = vmatpush.msra.mxu0 %v817
    %2005 = vmatpush.msra.mxu0 %v815
    %2006 = vmatpush.msra.mxu0 %v813
    %2007 = vmatpush.msra.mxu0 %v811
    %2008 = vmatpush.msra.mxu0 %v809
    %2009 = vmatpush.msra.mxu0 %v807
    %2010 = vmatpush.msra.mxu0 %v805
    %2011 = vmatpush.msra.mxu0 %v803
    %2012 = vmatpush.msra.mxu0 %v801
    %2013 = vmatpush.msra.mxu0 %v799
    %2014 = vmatpush.msra.mxu0 %v797
    %2015 = vmatpush.msra.mxu0 %v795
    %2016 = vmatmul.f32.gmra.mxu0 %v1489
    %v2017 = vpop.f32.mrf.mxu0
    %v2018 = vadd.f32 %v1998, %v2017
    %2019 = vdwg.mxu0
    %2020 = vmatpush.msra.mxu0 %v857
    %2021 = vmatpush.msra.mxu0 %v855
    %2022 = vmatpush.msra.mxu0 %v853
    %2023 = vmatpush.msra.mxu0 %v851
    %2024 = vmatpush.msra.mxu0 %v849
    %2025 = vmatpush.msra.mxu0 %v847
    %2026 = vmatpush.msra.mxu0 %v845
    %2027 = vmatpush.msra.mxu0 %v843
    %2028 = vmatpush.msra.mxu0 %v841
    %2029 = vmatpush.msra.mxu0 %v839
    %2030 = vmatpush.msra.mxu0 %v837
    %2031 = vmatpush.msra.mxu0 %v835
    %2032 = vmatpush.msra.mxu0 %v833
    %2033 = vmatpush.msra.mxu0 %v831
    %2034 = vmatpush.msra.mxu0 %v829
    %2035 = vmatpush.msra.mxu0 %v827
    %2036 = vmatmul.f32.gmra.mxu0 %v1490
    %v2037 = vpop.f32.mrf.mxu0
    %v2038 = vadd.f32 %v2018, %v2037
    %2039 = vdwg.mxu0
    %2040 = vmatpush.msra.mxu0 %v889
    %2041 = vmatpush.msra.mxu0 %v887
    %2042 = vmatpush.msra.mxu0 %v885
    %2043 = vmatpush.msra.mxu0 %v883
    %2044 = vmatpush.msra.mxu0 %v881
    %2045 = vmatpush.msra.mxu0 %v879
    %2046 = vmatpush.msra.mxu0 %v877
    %2047 = vmatpush.msra.mxu0 %v875
    %2048 = vmatpush.msra.mxu0 %v873
    %2049 = vmatpush.msra.mxu0 %v871
    %2050 = vmatpush.msra.mxu0 %v869
    %2051 = vmatpush.msra.mxu0 %v867
    %2052 = vmatpush.msra.mxu0 %v865
    %2053 = vmatpush.msra.mxu0 %v863
    %2054 = vmatpush.msra.mxu0 %v861
    %2055 = vmatpush.msra.mxu0 %v859
    %2056 = vmatmul.f32.gmra.mxu0 %v1493
    %v2057 = vpop.f32.mrf.mxu0
    %v2058 = vadd.f32 %v2038, %v2057
    %2059 = vdwg.mxu0
    %2060 = vmatpush.msra.mxu0 %v921
    %2061 = vmatpush.msra.mxu0 %v919
    %2062 = vmatpush.msra.mxu0 %v917
    %2063 = vmatpush.msra.mxu0 %v915
    %2064 = vmatpush.msra.mxu0 %v913
    %2065 = vmatpush.msra.mxu0 %v911
    %2066 = vmatpush.msra.mxu0 %v909
    %2067 = vmatpush.msra.mxu0 %v907
    %2068 = vmatpush.msra.mxu0 %v905
    %2069 = vmatpush.msra.mxu0 %v903
    %2070 = vmatpush.msra.mxu0 %v901
    %2071 = vmatpush.msra.mxu0 %v899
    %2072 = vmatpush.msra.mxu0 %v897
    %2073 = vmatpush.msra.mxu0 %v895
    %2074 = vmatpush.msra.mxu0 %v893
    %2075 = vmatpush.msra.mxu0 %v891
    %2076 = vmatmul.f32.gmra.mxu0 %v1494
    %v2077 = vpop.f32.mrf.mxu0
    %v2078 = vadd.f32 %v2058, %v2077
    %2079 = vdwg.mxu0
    %2080 = vmatpush.msra.mxu0 %v953
    %2081 = vmatpush.msra.mxu0 %v951
    %2082 = vmatpush.msra.mxu0 %v949
    %2083 = vmatpush.msra.mxu0 %v947
    %2084 = vmatpush.msra.mxu0 %v945
    %2085 = vmatpush.msra.mxu0 %v943
    %2086 = vmatpush.msra.mxu0 %v941
    %2087 = vmatpush.msra.mxu0 %v939
    %2088 = vmatpush.msra.mxu0 %v937
    %2089 = vmatpush.msra.mxu0 %v935
    %2090 = vmatpush.msra.mxu0 %v933
    %2091 = vmatpush.msra.mxu0 %v931
    %2092 = vmatpush.msra.mxu0 %v929
    %2093 = vmatpush.msra.mxu0 %v927
    %2094 = vmatpush.msra.mxu0 %v925
    %2095 = vmatpush.msra.mxu0 %v923
    %2096 = vmatmul.f32.gmra.mxu0 %v1495
    %v2097 = vpop.f32.mrf.mxu0
    %v2098 = vadd.f32 %v2078, %v2097
    %2099 = vdwg.mxu0
    %2100 = vmatpush.msra.mxu0 %v985
    %2101 = vmatpush.msra.mxu0 %v983
    %2102 = vmatpush.msra.mxu0 %v981
    %2103 = vmatpush.msra.mxu0 %v979
    %2104 = vmatpush.msra.mxu0 %v977
    %2105 = vmatpush.msra.mxu0 %v975
    %2106 = vmatpush.msra.mxu0 %v973
    %2107 = vmatpush.msra.mxu0 %v971
    %2108 = vmatpush.msra.mxu0 %v969
    %2109 = vmatpush.msra.mxu0 %v967
    %2110 = vmatpush.msra.mxu0 %v965
    %2111 = vmatpush.msra.mxu0 %v963
    %2112 = vmatpush.msra.mxu0 %v961
    %2113 = vmatpush.msra.mxu0 %v959
    %2114 = vmatpush.msra.mxu0 %v957
    %2115 = vmatpush.msra.mxu0 %v955
    %2116 = vmatmul.f32.gmra.mxu0 %v1496
    %v2117 = vpop.f32.mrf.mxu0
    %v2118 = vadd.f32 %v2098, %v2117
    %2119 = vdwg.mxu0
    %2120 = vmatpush.msra.mxu0 %v1017
    %2121 = vmatpush.msra.mxu0 %v1015
    %2122 = vmatpush.msra.mxu0 %v1013
    %2123 = vmatpush.msra.mxu0 %v1011
    %2124 = vmatpush.msra.mxu0 %v1009
    %2125 = vmatpush.msra.mxu0 %v1007
    %2126 = vmatpush.msra.mxu0 %v1005
    %2127 = vmatpush.msra.mxu0 %v1003
    %2128 = vmatpush.msra.mxu0 %v1001
    %2129 = vmatpush.msra.mxu0 %v999
    %2130 = vmatpush.msra.mxu0 %v997
    %2131 = vmatpush.msra.mxu0 %v995
    %2132 = vmatpush.msra.mxu0 %v993
    %2133 = vmatpush.msra.mxu0 %v991
    %2134 = vmatpush.msra.mxu0 %v989
    %2135 = vmatpush.msra.mxu0 %v987
    %2136 = vmatmul.f32.gmra.mxu0 %v1497
    %v2137 = vpop.f32.mrf.mxu0
    %v2138 = vadd.f32 %v2118, %v2137
    %2139 = vdwg.mxu0
    %2140 = vmatpush.msra.mxu0 %v1049
    %2141 = vmatpush.msra.mxu0 %v1047
    %2142 = vmatpush.msra.mxu0 %v1045
    %2143 = vmatpush.msra.mxu0 %v1043
    %2144 = vmatpush.msra.mxu0 %v1041
    %2145 = vmatpush.msra.mxu0 %v1039
    %2146 = vmatpush.msra.mxu0 %v1037
    %2147 = vmatpush.msra.mxu0 %v1035
    %2148 = vmatpush.msra.mxu0 %v1033
    %2149 = vmatpush.msra.mxu0 %v1031
    %2150 = vmatpush.msra.mxu0 %v1029
    %2151 = vmatpush.msra.mxu0 %v1027
    %2152 = vmatpush.msra.mxu0 %v1025
    %2153 = vmatpush.msra.mxu0 %v1023
    %2154 = vmatpush.msra.mxu0 %v1021
    %2155 = vmatpush.msra.mxu0 %v1019
    %2156 = vmatmul.f32.gmra.mxu0 %v1498
    %v2157 = vpop.f32.mrf.mxu0
    %v2158 = vadd.f32 %v2138, %v2157
    %2159 = vdwg.mxu0
    %2160 = vmatpush.msra.mxu0 %v1081
    %2161 = vmatpush.msra.mxu0 %v1079
    %2162 = vmatpush.msra.mxu0 %v1077
    %2163 = vmatpush.msra.mxu0 %v1075
    %2164 = vmatpush.msra.mxu0 %v1073
    %2165 = vmatpush.msra.mxu0 %v1071
    %2166 = vmatpush.msra.mxu0 %v1069
    %2167 = vmatpush.msra.mxu0 %v1067
    %2168 = vmatpush.msra.mxu0 %v1065
    %2169 = vmatpush.msra.mxu0 %v1063
    %2170 = vmatpush.msra.mxu0 %v1061
    %2171 = vmatpush.msra.mxu0 %v1059
    %2172 = vmatpush.msra.mxu0 %v1057
    %2173 = vmatpush.msra.mxu0 %v1055
    %2174 = vmatpush.msra.mxu0 %v1053
    %2175 = vmatpush.msra.mxu0 %v1051
    %2176 = vmatmul.f32.gmra.mxu0 %v1499
    %v2177 = vpop.f32.mrf.mxu0
    %v2178 = vadd.f32 %v2158, %v2177
    %2179 = vdwg.mxu0
    %2180 = vmatpush.msra.mxu0 %v1113
    %2181 = vmatpush.msra.mxu0 %v1111
    %2182 = vmatpush.msra.mxu0 %v1109
    %2183 = vmatpush.msra.mxu0 %v1107
    %2184 = vmatpush.msra.mxu0 %v1105
    %2185 = vmatpush.msra.mxu0 %v1103
    %2186 = vmatpush.msra.mxu0 %v1101
    %2187 = vmatpush.msra.mxu0 %v1099
    %2188 = vmatpush.msra.mxu0 %v1097
    %2189 = vmatpush.msra.mxu0 %v1095
    %2190 = vmatpush.msra.mxu0 %v1093
    %2191 = vmatpush.msra.mxu0 %v1091
    %2192 = vmatpush.msra.mxu0 %v1089
    %2193 = vmatpush.msra.mxu0 %v1087
    %2194 = vmatpush.msra.mxu0 %v1085
    %2195 = vmatpush.msra.mxu0 %v1083
    %2196 = vmatmul.f32.gmra.mxu0 %v1500
    %v2197 = vpop.f32.mrf.mxu0
    %v2198 = vadd.f32 %v2178, %v2197
    %2199 = vdwg.mxu0
    %2200 = vmatpush.msra.mxu0 %v1145
    %2201 = vmatpush.msra.mxu0 %v1143
    %2202 = vmatpush.msra.mxu0 %v1141
    %2203 = vmatpush.msra.mxu0 %v1139
    %2204 = vmatpush.msra.mxu0 %v1137
    %2205 = vmatpush.msra.mxu0 %v1135
    %2206 = vmatpush.msra.mxu0 %v1133
    %2207 = vmatpush.msra.mxu0 %v1131
    %2208 = vmatpush.msra.mxu0 %v1129
    %2209 = vmatpush.msra.mxu0 %v1127
    %2210 = vmatpush.msra.mxu0 %v1125
    %2211 = vmatpush.msra.mxu0 %v1123
    %2212 = vmatpush.msra.mxu0 %v1121
    %2213 = vmatpush.msra.mxu0 %v1119
    %2214 = vmatpush.msra.mxu0 %v1117
    %2215 = vmatpush.msra.mxu0 %v1115
    %2216 = vmatmul.f32.gmra.mxu0 %v1503
    %v2217 = vpop.f32.mrf.mxu0
    %v2218 = vadd.f32 %v2198, %v2217
    %2219 = vdwg.mxu0
    %2220 = vmatpush.msra.mxu0 %v1177
    %2221 = vmatpush.msra.mxu0 %v1175
    %2222 = vmatpush.msra.mxu0 %v1173
    %2223 = vmatpush.msra.mxu0 %v1171
    %2224 = vmatpush.msra.mxu0 %v1169
    %2225 = vmatpush.msra.mxu0 %v1167
    %2226 = vmatpush.msra.mxu0 %v1165
    %2227 = vmatpush.msra.mxu0 %v1163
    %2228 = vmatpush.msra.mxu0 %v1161
    %2229 = vmatpush.msra.mxu0 %v1159
    %2230 = vmatpush.msra.mxu0 %v1157
    %2231 = vmatpush.msra.mxu0 %v1155
    %2232 = vmatpush.msra.mxu0 %v1153
    %2233 = vmatpush.msra.mxu0 %v1151
    %2234 = vmatpush.msra.mxu0 %v1149
    %2235 = vmatpush.msra.mxu0 %v1147
    %2236 = vmatmul.f32.gmra.mxu0 %v1504
    %v2237 = vpop.f32.mrf.mxu0
    %v2238 = vadd.f32 %v2218, %v2237
    %2239 = vdwg.mxu0
    %2240 = vmatpush.msra.mxu0 %v1209
    %2241 = vmatpush.msra.mxu0 %v1207
    %2242 = vmatpush.msra.mxu0 %v1205
    %2243 = vmatpush.msra.mxu0 %v1203
    %2244 = vmatpush.msra.mxu0 %v1201
    %2245 = vmatpush.msra.mxu0 %v1199
    %2246 = vmatpush.msra.mxu0 %v1197
    %2247 = vmatpush.msra.mxu0 %v1195
    %2248 = vmatpush.msra.mxu0 %v1193
    %2249 = vmatpush.msra.mxu0 %v1191
    %2250 = vmatpush.msra.mxu0 %v1189
    %2251 = vmatpush.msra.mxu0 %v1187
    %2252 = vmatpush.msra.mxu0 %v1185
    %2253 = vmatpush.msra.mxu0 %v1183
    %2254 = vmatpush.msra.mxu0 %v1181
    %2255 = vmatpush.msra.mxu0 %v1179
    %2256 = vmatmul.f32.gmra.mxu0 %v1505
    %v2257 = vpop.f32.mrf.mxu0
    %v2258 = vadd.f32 %v2238, %v2257
    %2259 = vdwg.mxu0
    %2260 = vmatpush.msra.mxu0 %v1241
    %2261 = vmatpush.msra.mxu0 %v1239
    %2262 = vmatpush.msra.mxu0 %v1237
    %2263 = vmatpush.msra.mxu0 %v1235
    %2264 = vmatpush.msra.mxu0 %v1233
    %2265 = vmatpush.msra.mxu0 %v1231
    %2266 = vmatpush.msra.mxu0 %v1229
    %2267 = vmatpush.msra.mxu0 %v1227
    %2268 = vmatpush.msra.mxu0 %v1225
    %2269 = vmatpush.msra.mxu0 %v1223
    %2270 = vmatpush.msra.mxu0 %v1221
    %2271 = vmatpush.msra.mxu0 %v1219
    %2272 = vmatpush.msra.mxu0 %v1217
    %2273 = vmatpush.msra.mxu0 %v1215
    %2274 = vmatpush.msra.mxu0 %v1213
    %2275 = vmatpush.msra.mxu0 %v1211
    %2276 = vmatmul.f32.gmra.mxu0 %v1506
    %v2277 = vpop.f32.mrf.mxu0
    %v2278 = vadd.f32 %v2258, %v2277
    %2279 = vdwg.mxu0
    %2280 = vmatpush.msra.mxu0 %v1273
    %2281 = vmatpush.msra.mxu0 %v1271
    %2282 = vmatpush.msra.mxu0 %v1269
    %2283 = vmatpush.msra.mxu0 %v1267
    %2284 = vmatpush.msra.mxu0 %v1265
    %2285 = vmatpush.msra.mxu0 %v1263
    %2286 = vmatpush.msra.mxu0 %v1261
    %2287 = vmatpush.msra.mxu0 %v1259
    %2288 = vmatpush.msra.mxu0 %v1257
    %2289 = vmatpush.msra.mxu0 %v1255
    %2290 = vmatpush.msra.mxu0 %v1253
    %2291 = vmatpush.msra.mxu0 %v1251
    %2292 = vmatpush.msra.mxu0 %v1249
    %2293 = vmatpush.msra.mxu0 %v1247
    %2294 = vmatpush.msra.mxu0 %v1245
    %2295 = vmatpush.msra.mxu0 %v1243
    %2296 = vmatmul.f32.gmra.mxu0 %v1507
    %v2297 = vpop.f32.mrf.mxu0
    %v2298 = vadd.f32 %v2278, %v2297
    %2299 = vdwg.mxu0
    %2300 = vmatpush.msra.mxu0 %v1305
    %2301 = vmatpush.msra.mxu0 %v1303
    %2302 = vmatpush.msra.mxu0 %v1301
    %2303 = vmatpush.msra.mxu0 %v1299
    %2304 = vmatpush.msra.mxu0 %v1297
    %2305 = vmatpush.msra.mxu0 %v1295
    %2306 = vmatpush.msra.mxu0 %v1293
    %2307 = vmatpush.msra.mxu0 %v1291
    %2308 = vmatpush.msra.mxu0 %v1289
    %2309 = vmatpush.msra.mxu0 %v1287
    %2310 = vmatpush.msra.mxu0 %v1285
    %2311 = vmatpush.msra.mxu0 %v1283
    %2312 = vmatpush.msra.mxu0 %v1281
    %2313 = vmatpush.msra.mxu0 %v1279
    %2314 = vmatpush.msra.mxu0 %v1277
    %2315 = vmatpush.msra.mxu0 %v1275
    %2316 = vmatmul.f32.gmra.mxu0 %v1508
    %v2317 = vpop.f32.mrf.mxu0
    %v2318 = vadd.f32 %v2298, %v2317
    %2319 = vdwg.mxu0
    %2320 = vmatpush.msra.mxu0 %v1337
    %2321 = vmatpush.msra.mxu0 %v1335
    %2322 = vmatpush.msra.mxu0 %v1333
    %2323 = vmatpush.msra.mxu0 %v1331
    %2324 = vmatpush.msra.mxu0 %v1329
    %2325 = vmatpush.msra.mxu0 %v1327
    %2326 = vmatpush.msra.mxu0 %v1325
    %2327 = vmatpush.msra.mxu0 %v1323
    %2328 = vmatpush.msra.mxu0 %v1321
    %2329 = vmatpush.msra.mxu0 %v1319
    %2330 = vmatpush.msra.mxu0 %v1317
    %2331 = vmatpush.msra.mxu0 %v1315
    %2332 = vmatpush.msra.mxu0 %v1313
    %2333 = vmatpush.msra.mxu0 %v1311
    %2334 = vmatpush.msra.mxu0 %v1309
    %2335 = vmatpush.msra.mxu0 %v1307
    %2336 = vmatmul.f32.gmra.mxu0 %v1509
    %v2337 = vpop.f32.mrf.mxu0
    %v2338 = vadd.f32 %v2318, %v2337
    %2339 = vdwg.mxu0
    %2340 = vmatpush.msra.mxu0 %v1369
    %2341 = vmatpush.msra.mxu0 %v1367
    %2342 = vmatpush.msra.mxu0 %v1365
    %2343 = vmatpush.msra.mxu0 %v1363
    %2344 = vmatpush.msra.mxu0 %v1361
    %2345 = vmatpush.msra.mxu0 %v1359
    %2346 = vmatpush.msra.mxu0 %v1357
    %2347 = vmatpush.msra.mxu0 %v1355
    %2348 = vmatpush.msra.mxu0 %v1353
    %2349 = vmatpush.msra.mxu0 %v1351
    %2350 = vmatpush.msra.mxu0 %v1349
    %2351 = vmatpush.msra.mxu0 %v1347
    %2352 = vmatpush.msra.mxu0 %v1345
    %2353 = vmatpush.msra.mxu0 %v1343
    %2354 = vmatpush.msra.mxu0 %v1341
    %2355 = vmatpush.msra.mxu0 %v1339
    %2356 = vmatmul.f32.gmra.mxu0 %v1510
    %v2357 = vpop.f32.mrf.mxu0
    %v2358 = vadd.f32 %v2338, %v2357
    %2359 = vdwg.mxu0
    %2360 = vmatpush.msra.mxu0 %v1401
    %2361 = vmatpush.msra.mxu0 %v1399
    %2362 = vmatpush.msra.mxu0 %v1397
    %2363 = vmatpush.msra.mxu0 %v1395
    %2364 = vmatpush.msra.mxu0 %v1393
    %2365 = vmatpush.msra.mxu0 %v1391
    %2366 = vmatpush.msra.mxu0 %v1389
    %2367 = vmatpush.msra.mxu0 %v1387
    %2368 = vmatpush.msra.mxu0 %v1385
    %2369 = vmatpush.msra.mxu0 %v1383
    %2370 = vmatpush.msra.mxu0 %v1381
    %2371 = vmatpush.msra.mxu0 %v1379
    %2372 = vmatpush.msra.mxu0 %v1377
    %2373 = vmatpush.msra.mxu0 %v1375
    %2374 = vmatpush.msra.mxu0 %v1373
    %2375 = vmatpush.msra.mxu0 %v1371
    %2376 = vmatmul.f32.gmra.mxu0 %v1512
    %v2377 = vpop.f32.mrf.mxu0
    %v2378 = vadd.f32 %v2358, %v2377
    %2379 = vdwg.mxu0
    %2380 = vmatpush.msra.mxu0 %v1433
    %2381 = vmatpush.msra.mxu0 %v1431
    %2382 = vmatpush.msra.mxu0 %v1429
    %2383 = vmatpush.msra.mxu0 %v1427
    %2384 = vmatpush.msra.mxu0 %v1425
    %2385 = vmatpush.msra.mxu0 %v1423
    %2386 = vmatpush.msra.mxu0 %v1421
    %2387 = vmatpush.msra.mxu0 %v1419
    %2388 = vmatpush.msra.mxu0 %v1417
    %2389 = vmatpush.msra.mxu0 %v1415
    %2390 = vmatpush.msra.mxu0 %v1413
    %2391 = vmatpush.msra.mxu0 %v1411
    %2392 = vmatpush.msra.mxu0 %v1409
    %2393 = vmatpush.msra.mxu0 %v1407
    %2394 = vmatpush.msra.mxu0 %v1405
    %2395 = vmatpush.msra.mxu0 %v1403
    %2396 = vmatmul.f32.gmra.mxu0 %v1513
    %v2397 = vpop.f32.mrf.mxu0
    %v2398 = vadd.f32 %v2378, %v2397
    %2399 = vdwg.mxu0
    %2400 = vmatpush.msra.mxu0 0.0
    %2401 = vmatpush.msra.mxu0 0.0
    %2402 = vmatpush.msra.mxu0 0.0
    %2403 = vmatpush.msra.mxu0 0.0
    %2404 = vmatpush.msra.mxu0 0.0
    %2405 = vmatpush.msra.mxu0 0.0
    %2406 = vmatpush.msra.mxu0 0.0
    %2407 = vmatpush.msra.mxu0 0.0
    %2408 = vmatpush.msra.mxu0 0.0
    %2409 = vmatpush.msra.mxu0 0.0
    %2410 = vmatpush.msra.mxu0 0.0
    %2411 = vmatpush.msra.mxu0 0.0
    %2412 = vmatpush.msra.mxu0 %v1441
    %2413 = vmatpush.msra.mxu0 %v1439
    %2414 = vmatpush.msra.mxu0 %v1437
    %2415 = vmatpush.msra.mxu0 %v1435
    %2416 = vmatmul.f32.gmra.mxu0 %v1558
    %v2417 = vpop.f32.mrf.mxu0
    %v2418 = vadd.f32 %v2398, %v2417
    %2419 = vdwg.mxu0
    %2420 = vmatpush.msra.mxu0 %v122
    %2421 = vmatpush.msra.mxu0 %v120
    %2422 = vmatpush.msra.mxu0 %v118
    %2423 = vmatpush.msra.mxu0 %v116
    %2424 = vmatpush.msra.mxu0 %v114
    %2425 = vmatpush.msra.mxu0 %v112
    %2426 = vmatpush.msra.mxu0 %v110
    %2427 = vmatpush.msra.mxu0 %v108
    %2428 = vmatpush.msra.mxu0 %v106
    %2429 = vmatpush.msra.mxu0 %v104
    %2430 = vmatpush.msra.mxu0 %v102
    %2431 = vmatpush.msra.mxu0 %v100
    %2432 = vmatpush.msra.mxu0 %v98
    %2433 = vmatpush.msra.mxu0 %v96
    %2434 = vmatpush.msra.mxu0 %v94
    %2435 = vmatpush.msra.mxu0 %v92
    %2436 = vmatmul.f32.gmra.mxu0 %v1463
    %v2437 = vpop.f32.mrf.mxu0
    %v2438 = vadd.f32 %v1446, %v2437
    %2439 = vdwg.mxu0
    %2440 = vmatpush.msra.mxu0 %v154
    %2441 = vmatpush.msra.mxu0 %v152
    %2442 = vmatpush.msra.mxu0 %v150
    %2443 = vmatpush.msra.mxu0 %v148
    %2444 = vmatpush.msra.mxu0 %v146
    %2445 = vmatpush.msra.mxu0 %v144
    %2446 = vmatpush.msra.mxu0 %v142
    %2447 = vmatpush.msra.mxu0 %v140
    %2448 = vmatpush.msra.mxu0 %v138
    %2449 = vmatpush.msra.mxu0 %v136
    %2450 = vmatpush.msra.mxu0 %v134
    %2451 = vmatpush.msra.mxu0 %v132
    %2452 = vmatpush.msra.mxu0 %v130
    %2453 = vmatpush.msra.mxu0 %v128
    %2454 = vmatpush.msra.mxu0 %v126
    %2455 = vmatpush.msra.mxu0 %v124
    %2456 = vmatmul.f32.gmra.mxu0 %v1464
    %v2457 = vpop.f32.mrf.mxu0
    %v2458 = vadd.f32 %v2438, %v2457
    %2459 = vdwg.mxu0
    %2460 = vmatpush.msra.mxu0 %v186
    %2461 = vmatpush.msra.mxu0 %v184
    %2462 = vmatpush.msra.mxu0 %v182
    %2463 = vmatpush.msra.mxu0 %v180
    %2464 = vmatpush.msra.mxu0 %v178
    %2465 = vmatpush.msra.mxu0 %v176
    %2466 = vmatpush.msra.mxu0 %v174
    %2467 = vmatpush.msra.mxu0 %v172
    %2468 = vmatpush.msra.mxu0 %v170
    %2469 = vmatpush.msra.mxu0 %v168
    %2470 = vmatpush.msra.mxu0 %v166
    %2471 = vmatpush.msra.mxu0 %v164
    %2472 = vmatpush.msra.mxu0 %v162
    %2473 = vmatpush.msra.mxu0 %v160
    %2474 = vmatpush.msra.mxu0 %v158
    %2475 = vmatpush.msra.mxu0 %v156
    %2476 = vmatmul.f32.gmra.mxu0 %v1465
    %v2477 = vpop.f32.mrf.mxu0
    %v2478 = vadd.f32 %v2458, %v2477
    %2479 = vdwg.mxu0
    %2480 = vmatpush.msra.mxu0 %v218
    %2481 = vmatpush.msra.mxu0 %v216
    %2482 = vmatpush.msra.mxu0 %v214
    %2483 = vmatpush.msra.mxu0 %v212
    %2484 = vmatpush.msra.mxu0 %v210
    %2485 = vmatpush.msra.mxu0 %v208
    %2486 = vmatpush.msra.mxu0 %v206
    %2487 = vmatpush.msra.mxu0 %v204
    %2488 = vmatpush.msra.mxu0 %v202
    %2489 = vmatpush.msra.mxu0 %v200
    %2490 = vmatpush.msra.mxu0 %v198
    %2491 = vmatpush.msra.mxu0 %v196
    %2492 = vmatpush.msra.mxu0 %v194
    %2493 = vmatpush.msra.mxu0 %v192
    %2494 = vmatpush.msra.mxu0 %v190
    %2495 = vmatpush.msra.mxu0 %v188
    %2496 = vmatmul.f32.gmra.mxu0 %v1466
    %v2497 = vpop.f32.mrf.mxu0
    %v2498 = vadd.f32 %v2478, %v2497
    %2499 = vdwg.mxu0
    %2500 = vmatpush.msra.mxu0 %v250
    %2501 = vmatpush.msra.mxu0 %v248
    %2502 = vmatpush.msra.mxu0 %v246
    %2503 = vmatpush.msra.mxu0 %v244
    %2504 = vmatpush.msra.mxu0 %v242
    %2505 = vmatpush.msra.mxu0 %v240
    %2506 = vmatpush.msra.mxu0 %v238
    %2507 = vmatpush.msra.mxu0 %v236
    %2508 = vmatpush.msra.mxu0 %v234
    %2509 = vmatpush.msra.mxu0 %v232
    %2510 = vmatpush.msra.mxu0 %v230
    %2511 = vmatpush.msra.mxu0 %v228
    %2512 = vmatpush.msra.mxu0 %v226
    %2513 = vmatpush.msra.mxu0 %v224
    %2514 = vmatpush.msra.mxu0 %v222
    %2515 = vmatpush.msra.mxu0 %v220
    %2516 = vmatmul.f32.gmra.mxu0 %v1467
    %v2517 = vpop.f32.mrf.mxu0
    %v2518 = vadd.f32 %v2498, %v2517
    %2519 = vdwg.mxu0
    %2520 = vmatpush.msra.mxu0 %v282
    %2521 = vmatpush.msra.mxu0 %v280
    %2522 = vmatpush.msra.mxu0 %v278
    %2523 = vmatpush.msra.mxu0 %v276
    %2524 = vmatpush.msra.mxu0 %v274
    %2525 = vmatpush.msra.mxu0 %v272
    %2526 = vmatpush.msra.mxu0 %v270
    %2527 = vmatpush.msra.mxu0 %v268
    %2528 = vmatpush.msra.mxu0 %v266
    %2529 = vmatpush.msra.mxu0 %v264
    %2530 = vmatpush.msra.mxu0 %v262
    %2531 = vmatpush.msra.mxu0 %v260
    %2532 = vmatpush.msra.mxu0 %v258
    %2533 = vmatpush.msra.mxu0 %v256
    %2534 = vmatpush.msra.mxu0 %v254
    %2535 = vmatpush.msra.mxu0 %v252
    %2536 = vmatmul.f32.gmra.mxu0 %v1468
    %v2537 = vpop.f32.mrf.mxu0
    %v2538 = vadd.f32 %v2518, %v2537
    %2539 = vdwg.mxu0
    %2540 = vmatpush.msra.mxu0 %v314
    %2541 = vmatpush.msra.mxu0 %v312
    %2542 = vmatpush.msra.mxu0 %v310
    %2543 = vmatpush.msra.mxu0 %v308
    %2544 = vmatpush.msra.mxu0 %v306
    %2545 = vmatpush.msra.mxu0 %v304
    %2546 = vmatpush.msra.mxu0 %v302
    %2547 = vmatpush.msra.mxu0 %v300
    %2548 = vmatpush.msra.mxu0 %v298
    %2549 = vmatpush.msra.mxu0 %v296
    %2550 = vmatpush.msra.mxu0 %v294
    %2551 = vmatpush.msra.mxu0 %v292
    %2552 = vmatpush.msra.mxu0 %v290
    %2553 = vmatpush.msra.mxu0 %v288
    %2554 = vmatpush.msra.mxu0 %v286
    %2555 = vmatpush.msra.mxu0 %v284
    %2556 = vmatmul.f32.gmra.mxu0 %v1469
    %v2557 = vpop.f32.mrf.mxu0
    %v2558 = vadd.f32 %v2538, %v2557
    %2559 = vdwg.mxu0
    %2560 = vmatpush.msra.mxu0 %v346
    %2561 = vmatpush.msra.mxu0 %v344
    %2562 = vmatpush.msra.mxu0 %v342
    %2563 = vmatpush.msra.mxu0 %v340
    %2564 = vmatpush.msra.mxu0 %v338
    %2565 = vmatpush.msra.mxu0 %v336
    %2566 = vmatpush.msra.mxu0 %v334
    %2567 = vmatpush.msra.mxu0 %v332
    %2568 = vmatpush.msra.mxu0 %v330
    %2569 = vmatpush.msra.mxu0 %v328
    %2570 = vmatpush.msra.mxu0 %v326
    %2571 = vmatpush.msra.mxu0 %v324
    %2572 = vmatpush.msra.mxu0 %v322
    %2573 = vmatpush.msra.mxu0 %v320
    %2574 = vmatpush.msra.mxu0 %v318
    %2575 = vmatpush.msra.mxu0 %v316
    %2576 = vmatmul.f32.gmra.mxu0 %v1470
    %v2577 = vpop.f32.mrf.mxu0
    %v2578 = vadd.f32 %v2558, %v2577
    %2579 = vdwg.mxu0
    %2580 = vmatpush.msra.mxu0 %v378
    %2581 = vmatpush.msra.mxu0 %v376
    %2582 = vmatpush.msra.mxu0 %v374
    %2583 = vmatpush.msra.mxu0 %v372
    %2584 = vmatpush.msra.mxu0 %v370
    %2585 = vmatpush.msra.mxu0 %v368
    %2586 = vmatpush.msra.mxu0 %v366
    %2587 = vmatpush.msra.mxu0 %v364
    %2588 = vmatpush.msra.mxu0 %v362
    %2589 = vmatpush.msra.mxu0 %v360
    %2590 = vmatpush.msra.mxu0 %v358
    %2591 = vmatpush.msra.mxu0 %v356
    %2592 = vmatpush.msra.mxu0 %v354
    %2593 = vmatpush.msra.mxu0 %v352
    %2594 = vmatpush.msra.mxu0 %v350
    %2595 = vmatpush.msra.mxu0 %v348
    %2596 = vmatmul.f32.gmra.mxu0 %v1473
    %v2597 = vpop.f32.mrf.mxu0
    %v2598 = vadd.f32 %v2578, %v2597
    %2599 = vdwg.mxu0
    %2600 = vmatpush.msra.mxu0 %v410
    %2601 = vmatpush.msra.mxu0 %v408
    %2602 = vmatpush.msra.mxu0 %v406
    %2603 = vmatpush.msra.mxu0 %v404
    %2604 = vmatpush.msra.mxu0 %v402
    %2605 = vmatpush.msra.mxu0 %v400
    %2606 = vmatpush.msra.mxu0 %v398
    %2607 = vmatpush.msra.mxu0 %v396
    %2608 = vmatpush.msra.mxu0 %v394
    %2609 = vmatpush.msra.mxu0 %v392
    %2610 = vmatpush.msra.mxu0 %v390
    %2611 = vmatpush.msra.mxu0 %v388
    %2612 = vmatpush.msra.mxu0 %v386
    %2613 = vmatpush.msra.mxu0 %v384
    %2614 = vmatpush.msra.mxu0 %v382
    %2615 = vmatpush.msra.mxu0 %v380
    %2616 = vmatmul.f32.gmra.mxu0 %v1474
    %v2617 = vpop.f32.mrf.mxu0
    %v2618 = vadd.f32 %v2598, %v2617
    %2619 = vdwg.mxu0
    %2620 = vmatpush.msra.mxu0 %v442
    %2621 = vmatpush.msra.mxu0 %v440
    %2622 = vmatpush.msra.mxu0 %v438
    %2623 = vmatpush.msra.mxu0 %v436
    %2624 = vmatpush.msra.mxu0 %v434
    %2625 = vmatpush.msra.mxu0 %v432
    %2626 = vmatpush.msra.mxu0 %v430
    %2627 = vmatpush.msra.mxu0 %v428
    %2628 = vmatpush.msra.mxu0 %v426
    %2629 = vmatpush.msra.mxu0 %v424
    %2630 = vmatpush.msra.mxu0 %v422
    %2631 = vmatpush.msra.mxu0 %v420
    %2632 = vmatpush.msra.mxu0 %v418
    %2633 = vmatpush.msra.mxu0 %v416
    %2634 = vmatpush.msra.mxu0 %v414
    %2635 = vmatpush.msra.mxu0 %v412
    %2636 = vmatmul.f32.gmra.mxu0 %v1475
    %v2637 = vpop.f32.mrf.mxu0
    %v2638 = vadd.f32 %v2618, %v2637
    %2639 = vdwg.mxu0
    %2640 = vmatpush.msra.mxu0 %v474
    %2641 = vmatpush.msra.mxu0 %v472
    %2642 = vmatpush.msra.mxu0 %v470
    %2643 = vmatpush.msra.mxu0 %v468
    %2644 = vmatpush.msra.mxu0 %v466
    %2645 = vmatpush.msra.mxu0 %v464
    %2646 = vmatpush.msra.mxu0 %v462
    %2647 = vmatpush.msra.mxu0 %v460
    %2648 = vmatpush.msra.mxu0 %v458
    %2649 = vmatpush.msra.mxu0 %v456
    %2650 = vmatpush.msra.mxu0 %v454
    %2651 = vmatpush.msra.mxu0 %v452
    %2652 = vmatpush.msra.mxu0 %v450
    %2653 = vmatpush.msra.mxu0 %v448
    %2654 = vmatpush.msra.mxu0 %v446
    %2655 = vmatpush.msra.mxu0 %v444
    %2656 = vmatmul.f32.gmra.mxu0 %v1476
    %v2657 = vpop.f32.mrf.mxu0
    %v2658 = vadd.f32 %v2638, %v2657
    %2659 = vdwg.mxu0
    %2660 = vmatpush.msra.mxu0 %v506
    %2661 = vmatpush.msra.mxu0 %v504
    %2662 = vmatpush.msra.mxu0 %v502
    %2663 = vmatpush.msra.mxu0 %v500
    %2664 = vmatpush.msra.mxu0 %v498
    %2665 = vmatpush.msra.mxu0 %v496
    %2666 = vmatpush.msra.mxu0 %v494
    %2667 = vmatpush.msra.mxu0 %v492
    %2668 = vmatpush.msra.mxu0 %v490
    %2669 = vmatpush.msra.mxu0 %v488
    %2670 = vmatpush.msra.mxu0 %v486
    %2671 = vmatpush.msra.mxu0 %v484
    %2672 = vmatpush.msra.mxu0 %v482
    %2673 = vmatpush.msra.mxu0 %v480
    %2674 = vmatpush.msra.mxu0 %v478
    %2675 = vmatpush.msra.mxu0 %v476
    %2676 = vmatmul.f32.gmra.mxu0 %v1477
    %v2677 = vpop.f32.mrf.mxu0
    %v2678 = vadd.f32 %v2658, %v2677
    %2679 = vdwg.mxu0
    %2680 = vmatpush.msra.mxu0 %v538
    %2681 = vmatpush.msra.mxu0 %v536
    %2682 = vmatpush.msra.mxu0 %v534
    %2683 = vmatpush.msra.mxu0 %v532
    %2684 = vmatpush.msra.mxu0 %v530
    %2685 = vmatpush.msra.mxu0 %v528
    %2686 = vmatpush.msra.mxu0 %v526
    %2687 = vmatpush.msra.mxu0 %v524
    %2688 = vmatpush.msra.mxu0 %v522
    %2689 = vmatpush.msra.mxu0 %v520
    %2690 = vmatpush.msra.mxu0 %v518
    %2691 = vmatpush.msra.mxu0 %v516
    %2692 = vmatpush.msra.mxu0 %v514
    %2693 = vmatpush.msra.mxu0 %v512
    %2694 = vmatpush.msra.mxu0 %v510
    %2695 = vmatpush.msra.mxu0 %v508
    %2696 = vmatmul.f32.gmra.mxu0 %v1478
    %v2697 = vpop.f32.mrf.mxu0
    %v2698 = vadd.f32 %v2678, %v2697
    %2699 = vdwg.mxu0
    %2700 = vmatpush.msra.mxu0 %v570
    %2701 = vmatpush.msra.mxu0 %v568
    %2702 = vmatpush.msra.mxu0 %v566
    %2703 = vmatpush.msra.mxu0 %v564
    %2704 = vmatpush.msra.mxu0 %v562
    %2705 = vmatpush.msra.mxu0 %v560
    %2706 = vmatpush.msra.mxu0 %v558
    %2707 = vmatpush.msra.mxu0 %v556
    %2708 = vmatpush.msra.mxu0 %v554
    %2709 = vmatpush.msra.mxu0 %v552
    %2710 = vmatpush.msra.mxu0 %v550
    %2711 = vmatpush.msra.mxu0 %v548
    %2712 = vmatpush.msra.mxu0 %v546
    %2713 = vmatpush.msra.mxu0 %v544
    %2714 = vmatpush.msra.mxu0 %v542
    %2715 = vmatpush.msra.mxu0 %v540
    %2716 = vmatmul.f32.gmra.mxu0 %v1479
    %v2717 = vpop.f32.mrf.mxu0
    %v2718 = vadd.f32 %v2698, %v2717
    %2719 = vdwg.mxu0
    %2720 = vmatpush.msra.mxu0 %v602
    %2721 = vmatpush.msra.mxu0 %v600
    %2722 = vmatpush.msra.mxu0 %v598
    %2723 = vmatpush.msra.mxu0 %v596
    %2724 = vmatpush.msra.mxu0 %v594
    %2725 = vmatpush.msra.mxu0 %v592
    %2726 = vmatpush.msra.mxu0 %v590
    %2727 = vmatpush.msra.mxu0 %v588
    %2728 = vmatpush.msra.mxu0 %v586
    %2729 = vmatpush.msra.mxu0 %v584
    %2730 = vmatpush.msra.mxu0 %v582
    %2731 = vmatpush.msra.mxu0 %v580
    %2732 = vmatpush.msra.mxu0 %v578
    %2733 = vmatpush.msra.mxu0 %v576
    %2734 = vmatpush.msra.mxu0 %v574
    %2735 = vmatpush.msra.mxu0 %v572
    %2736 = vmatmul.f32.gmra.mxu0 %v1480
    %v2737 = vpop.f32.mrf.mxu0
    %v2738 = vadd.f32 %v2718, %v2737
    %2739 = vdwg.mxu0
    %2740 = vmatpush.msra.mxu0 %v634
    %2741 = vmatpush.msra.mxu0 %v632
    %2742 = vmatpush.msra.mxu0 %v630
    %2743 = vmatpush.msra.mxu0 %v628
    %2744 = vmatpush.msra.mxu0 %v626
    %2745 = vmatpush.msra.mxu0 %v624
    %2746 = vmatpush.msra.mxu0 %v622
    %2747 = vmatpush.msra.mxu0 %v620
    %2748 = vmatpush.msra.mxu0 %v618
    %2749 = vmatpush.msra.mxu0 %v616
    %2750 = vmatpush.msra.mxu0 %v614
    %2751 = vmatpush.msra.mxu0 %v612
    %2752 = vmatpush.msra.mxu0 %v610
    %2753 = vmatpush.msra.mxu0 %v608
    %2754 = vmatpush.msra.mxu0 %v606
    %2755 = vmatpush.msra.mxu0 %v604
    %2756 = vmatmul.f32.gmra.mxu0 %v1483
    %v2757 = vpop.f32.mrf.mxu0
    %v2758 = vadd.f32 %v2738, %v2757
    %2759 = vdwg.mxu0
    %2760 = vmatpush.msra.mxu0 %v666
    %2761 = vmatpush.msra.mxu0 %v664
    %2762 = vmatpush.msra.mxu0 %v662
    %2763 = vmatpush.msra.mxu0 %v660
    %2764 = vmatpush.msra.mxu0 %v658
    %2765 = vmatpush.msra.mxu0 %v656
    %2766 = vmatpush.msra.mxu0 %v654
    %2767 = vmatpush.msra.mxu0 %v652
    %2768 = vmatpush.msra.mxu0 %v650
    %2769 = vmatpush.msra.mxu0 %v648
    %2770 = vmatpush.msra.mxu0 %v646
    %2771 = vmatpush.msra.mxu0 %v644
    %2772 = vmatpush.msra.mxu0 %v642
    %2773 = vmatpush.msra.mxu0 %v640
    %2774 = vmatpush.msra.mxu0 %v638
    %2775 = vmatpush.msra.mxu0 %v636
    %2776 = vmatmul.f32.gmra.mxu0 %v1484
    %v2777 = vpop.f32.mrf.mxu0
    %v2778 = vadd.f32 %v2758, %v2777
    %2779 = vdwg.mxu0
    %2780 = vmatpush.msra.mxu0 %v698
    %2781 = vmatpush.msra.mxu0 %v696
    %2782 = vmatpush.msra.mxu0 %v694
    %2783 = vmatpush.msra.mxu0 %v692
    %2784 = vmatpush.msra.mxu0 %v690
    %2785 = vmatpush.msra.mxu0 %v688
    %2786 = vmatpush.msra.mxu0 %v686
    %2787 = vmatpush.msra.mxu0 %v684
    %2788 = vmatpush.msra.mxu0 %v682
    %2789 = vmatpush.msra.mxu0 %v680
    %2790 = vmatpush.msra.mxu0 %v678
    %2791 = vmatpush.msra.mxu0 %v676
    %2792 = vmatpush.msra.mxu0 %v674
    %2793 = vmatpush.msra.mxu0 %v672
    %2794 = vmatpush.msra.mxu0 %v670
    %2795 = vmatpush.msra.mxu0 %v668
    %2796 = vmatmul.f32.gmra.mxu0 %v1485
    %v2797 = vpop.f32.mrf.mxu0
    %v2798 = vadd.f32 %v2778, %v2797
    %2799 = vdwg.mxu0
    %2800 = vmatpush.msra.mxu0 %v730
    %2801 = vmatpush.msra.mxu0 %v728
    %2802 = vmatpush.msra.mxu0 %v726
    %2803 = vmatpush.msra.mxu0 %v724
    %2804 = vmatpush.msra.mxu0 %v722
    %2805 = vmatpush.msra.mxu0 %v720
    %2806 = vmatpush.msra.mxu0 %v718
    %2807 = vmatpush.msra.mxu0 %v716
    %2808 = vmatpush.msra.mxu0 %v714
    %2809 = vmatpush.msra.mxu0 %v712
    %2810 = vmatpush.msra.mxu0 %v710
    %2811 = vmatpush.msra.mxu0 %v708
    %2812 = vmatpush.msra.mxu0 %v706
    %2813 = vmatpush.msra.mxu0 %v704
    %2814 = vmatpush.msra.mxu0 %v702
    %2815 = vmatpush.msra.mxu0 %v700
    %2816 = vmatmul.f32.gmra.mxu0 %v1486
    %v2817 = vpop.f32.mrf.mxu0
    %v2818 = vadd.f32 %v2798, %v2817
    %2819 = vdwg.mxu0
    %2820 = vmatpush.msra.mxu0 %v762
    %2821 = vmatpush.msra.mxu0 %v760
    %2822 = vmatpush.msra.mxu0 %v758
    %2823 = vmatpush.msra.mxu0 %v756
    %2824 = vmatpush.msra.mxu0 %v754
    %2825 = vmatpush.msra.mxu0 %v752
    %2826 = vmatpush.msra.mxu0 %v750
    %2827 = vmatpush.msra.mxu0 %v748
    %2828 = vmatpush.msra.mxu0 %v746
    %2829 = vmatpush.msra.mxu0 %v744
    %2830 = vmatpush.msra.mxu0 %v742
    %2831 = vmatpush.msra.mxu0 %v740
    %2832 = vmatpush.msra.mxu0 %v738
    %2833 = vmatpush.msra.mxu0 %v736
    %2834 = vmatpush.msra.mxu0 %v734
    %2835 = vmatpush.msra.mxu0 %v732
    %2836 = vmatmul.f32.gmra.mxu0 %v1487
    %v2837 = vpop.f32.mrf.mxu0
    %v2838 = vadd.f32 %v2818, %v2837
    %2839 = vdwg.mxu0
    %2840 = vmatpush.msra.mxu0 %v794
    %2841 = vmatpush.msra.mxu0 %v792
    %2842 = vmatpush.msra.mxu0 %v790
    %2843 = vmatpush.msra.mxu0 %v788
    %2844 = vmatpush.msra.mxu0 %v786
    %2845 = vmatpush.msra.mxu0 %v784
    %2846 = vmatpush.msra.mxu0 %v782
    %2847 = vmatpush.msra.mxu0 %v780
    %2848 = vmatpush.msra.mxu0 %v778
    %2849 = vmatpush.msra.mxu0 %v776
    %2850 = vmatpush.msra.mxu0 %v774
    %2851 = vmatpush.msra.mxu0 %v772
    %2852 = vmatpush.msra.mxu0 %v770
    %2853 = vmatpush.msra.mxu0 %v768
    %2854 = vmatpush.msra.mxu0 %v766
    %2855 = vmatpush.msra.mxu0 %v764
    %2856 = vmatmul.f32.gmra.mxu0 %v1488
    %v2857 = vpop.f32.mrf.mxu0
    %v2858 = vadd.f32 %v2838, %v2857
    %2859 = vdwg.mxu0
    %2860 = vmatpush.msra.mxu0 %v826
    %2861 = vmatpush.msra.mxu0 %v824
    %2862 = vmatpush.msra.mxu0 %v822
    %2863 = vmatpush.msra.mxu0 %v820
    %2864 = vmatpush.msra.mxu0 %v818
    %2865 = vmatpush.msra.mxu0 %v816
    %2866 = vmatpush.msra.mxu0 %v814
    %2867 = vmatpush.msra.mxu0 %v812
    %2868 = vmatpush.msra.mxu0 %v810
    %2869 = vmatpush.msra.mxu0 %v808
    %2870 = vmatpush.msra.mxu0 %v806
    %2871 = vmatpush.msra.mxu0 %v804
    %2872 = vmatpush.msra.mxu0 %v802
    %2873 = vmatpush.msra.mxu0 %v800
    %2874 = vmatpush.msra.mxu0 %v798
    %2875 = vmatpush.msra.mxu0 %v796
    %2876 = vmatmul.f32.gmra.mxu0 %v1489
    %v2877 = vpop.f32.mrf.mxu0
    %v2878 = vadd.f32 %v2858, %v2877
    %2879 = vdwg.mxu0
    %2880 = vmatpush.msra.mxu0 %v858
    %2881 = vmatpush.msra.mxu0 %v856
    %2882 = vmatpush.msra.mxu0 %v854
    %2883 = vmatpush.msra.mxu0 %v852
    %2884 = vmatpush.msra.mxu0 %v850
    %2885 = vmatpush.msra.mxu0 %v848
    %2886 = vmatpush.msra.mxu0 %v846
    %2887 = vmatpush.msra.mxu0 %v844
    %2888 = vmatpush.msra.mxu0 %v842
    %2889 = vmatpush.msra.mxu0 %v840
    %2890 = vmatpush.msra.mxu0 %v838
    %2891 = vmatpush.msra.mxu0 %v836
    %2892 = vmatpush.msra.mxu0 %v834
    %2893 = vmatpush.msra.mxu0 %v832
    %2894 = vmatpush.msra.mxu0 %v830
    %2895 = vmatpush.msra.mxu0 %v828
    %2896 = vmatmul.f32.gmra.mxu0 %v1490
    %v2897 = vpop.f32.mrf.mxu0
    %v2898 = vadd.f32 %v2878, %v2897
    %2899 = vdwg.mxu0
    %2900 = vmatpush.msra.mxu0 %v890
    %2901 = vmatpush.msra.mxu0 %v888
    %2902 = vmatpush.msra.mxu0 %v886
    %2903 = vmatpush.msra.mxu0 %v884
    %2904 = vmatpush.msra.mxu0 %v882
    %2905 = vmatpush.msra.mxu0 %v880
    %2906 = vmatpush.msra.mxu0 %v878
    %2907 = vmatpush.msra.mxu0 %v876
    %2908 = vmatpush.msra.mxu0 %v874
    %2909 = vmatpush.msra.mxu0 %v872
    %2910 = vmatpush.msra.mxu0 %v870
    %2911 = vmatpush.msra.mxu0 %v868
    %2912 = vmatpush.msra.mxu0 %v866
    %2913 = vmatpush.msra.mxu0 %v864
    %2914 = vmatpush.msra.mxu0 %v862
    %2915 = vmatpush.msra.mxu0 %v860
    %2916 = vmatmul.f32.gmra.mxu0 %v1493
    %v2917 = vpop.f32.mrf.mxu0
    %v2918 = vadd.f32 %v2898, %v2917
    %2919 = vdwg.mxu0
    %2920 = vmatpush.msra.mxu0 %v922
    %2921 = vmatpush.msra.mxu0 %v920
    %2922 = vmatpush.msra.mxu0 %v918
    %2923 = vmatpush.msra.mxu0 %v916
    %2924 = vmatpush.msra.mxu0 %v914
    %2925 = vmatpush.msra.mxu0 %v912
    %2926 = vmatpush.msra.mxu0 %v910
    %2927 = vmatpush.msra.mxu0 %v908
    %2928 = vmatpush.msra.mxu0 %v906
    %2929 = vmatpush.msra.mxu0 %v904
    %2930 = vmatpush.msra.mxu0 %v902
    %2931 = vmatpush.msra.mxu0 %v900
    %2932 = vmatpush.msra.mxu0 %v898
    %2933 = vmatpush.msra.mxu0 %v896
    %2934 = vmatpush.msra.mxu0 %v894
    %2935 = vmatpush.msra.mxu0 %v892
    %2936 = vmatmul.f32.gmra.mxu0 %v1494
    %v2937 = vpop.f32.mrf.mxu0
    %v2938 = vadd.f32 %v2918, %v2937
    %2939 = vdwg.mxu0
    %2940 = vmatpush.msra.mxu0 %v954
    %2941 = vmatpush.msra.mxu0 %v952
    %2942 = vmatpush.msra.mxu0 %v950
    %2943 = vmatpush.msra.mxu0 %v948
    %2944 = vmatpush.msra.mxu0 %v946
    %2945 = vmatpush.msra.mxu0 %v944
    %2946 = vmatpush.msra.mxu0 %v942
    %2947 = vmatpush.msra.mxu0 %v940
    %2948 = vmatpush.msra.mxu0 %v938
    %2949 = vmatpush.msra.mxu0 %v936
    %2950 = vmatpush.msra.mxu0 %v934
    %2951 = vmatpush.msra.mxu0 %v932
    %2952 = vmatpush.msra.mxu0 %v930
    %2953 = vmatpush.msra.mxu0 %v928
    %2954 = vmatpush.msra.mxu0 %v926
    %2955 = vmatpush.msra.mxu0 %v924
    %2956 = vmatmul.f32.gmra.mxu0 %v1495
    %v2957 = vpop.f32.mrf.mxu0
    %v2958 = vadd.f32 %v2938, %v2957
    %2959 = vdwg.mxu0
    %2960 = vmatpush.msra.mxu0 %v986
    %2961 = vmatpush.msra.mxu0 %v984
    %2962 = vmatpush.msra.mxu0 %v982
    %2963 = vmatpush.msra.mxu0 %v980
    %2964 = vmatpush.msra.mxu0 %v978
    %2965 = vmatpush.msra.mxu0 %v976
    %2966 = vmatpush.msra.mxu0 %v974
    %2967 = vmatpush.msra.mxu0 %v972
    %2968 = vmatpush.msra.mxu0 %v970
    %2969 = vmatpush.msra.mxu0 %v968
    %2970 = vmatpush.msra.mxu0 %v966
    %2971 = vmatpush.msra.mxu0 %v964
    %2972 = vmatpush.msra.mxu0 %v962
    %2973 = vmatpush.msra.mxu0 %v960
    %2974 = vmatpush.msra.mxu0 %v958
    %2975 = vmatpush.msra.mxu0 %v956
    %2976 = vmatmul.f32.gmra.mxu0 %v1496
    %v2977 = vpop.f32.mrf.mxu0
    %v2978 = vadd.f32 %v2958, %v2977
    %2979 = vdwg.mxu0
    %2980 = vmatpush.msra.mxu0 %v1018
    %2981 = vmatpush.msra.mxu0 %v1016
    %2982 = vmatpush.msra.mxu0 %v1014
    %2983 = vmatpush.msra.mxu0 %v1012
    %2984 = vmatpush.msra.mxu0 %v1010
    %2985 = vmatpush.msra.mxu0 %v1008
    %2986 = vmatpush.msra.mxu0 %v1006
    %2987 = vmatpush.msra.mxu0 %v1004
    %2988 = vmatpush.msra.mxu0 %v1002
    %2989 = vmatpush.msra.mxu0 %v1000
    %2990 = vmatpush.msra.mxu0 %v998
    %2991 = vmatpush.msra.mxu0 %v996
    %2992 = vmatpush.msra.mxu0 %v994
    %2993 = vmatpush.msra.mxu0 %v992
    %2994 = vmatpush.msra.mxu0 %v990
    %2995 = vmatpush.msra.mxu0 %v988
    %2996 = vmatmul.f32.gmra.mxu0 %v1497
    %v2997 = vpop.f32.mrf.mxu0
    %v2998 = vadd.f32 %v2978, %v2997
    %2999 = vdwg.mxu0
    %3000 = vmatpush.msra.mxu0 %v1050
    %3001 = vmatpush.msra.mxu0 %v1048
    %3002 = vmatpush.msra.mxu0 %v1046
    %3003 = vmatpush.msra.mxu0 %v1044
    %3004 = vmatpush.msra.mxu0 %v1042
    %3005 = vmatpush.msra.mxu0 %v1040
    %3006 = vmatpush.msra.mxu0 %v1038
    %3007 = vmatpush.msra.mxu0 %v1036
    %3008 = vmatpush.msra.mxu0 %v1034
    %3009 = vmatpush.msra.mxu0 %v1032
    %3010 = vmatpush.msra.mxu0 %v1030
    %3011 = vmatpush.msra.mxu0 %v1028
    %3012 = vmatpush.msra.mxu0 %v1026
    %3013 = vmatpush.msra.mxu0 %v1024
    %3014 = vmatpush.msra.mxu0 %v1022
    %3015 = vmatpush.msra.mxu0 %v1020
    %3016 = vmatmul.f32.gmra.mxu0 %v1498
    %v3017 = vpop.f32.mrf.mxu0
    %v3018 = vadd.f32 %v2998, %v3017
    %3019 = vdwg.mxu0
    %3020 = vmatpush.msra.mxu0 %v1082
    %3021 = vmatpush.msra.mxu0 %v1080
    %3022 = vmatpush.msra.mxu0 %v1078
    %3023 = vmatpush.msra.mxu0 %v1076
    %3024 = vmatpush.msra.mxu0 %v1074
    %3025 = vmatpush.msra.mxu0 %v1072
    %3026 = vmatpush.msra.mxu0 %v1070
    %3027 = vmatpush.msra.mxu0 %v1068
    %3028 = vmatpush.msra.mxu0 %v1066
    %3029 = vmatpush.msra.mxu0 %v1064
    %3030 = vmatpush.msra.mxu0 %v1062
    %3031 = vmatpush.msra.mxu0 %v1060
    %3032 = vmatpush.msra.mxu0 %v1058
    %3033 = vmatpush.msra.mxu0 %v1056
    %3034 = vmatpush.msra.mxu0 %v1054
    %3035 = vmatpush.msra.mxu0 %v1052
    %3036 = vmatmul.f32.gmra.mxu0 %v1499
    %v3037 = vpop.f32.mrf.mxu0
    %v3038 = vadd.f32 %v3018, %v3037
    %3039 = vdwg.mxu0
    %3040 = vmatpush.msra.mxu0 %v1114
    %3041 = vmatpush.msra.mxu0 %v1112
    %3042 = vmatpush.msra.mxu0 %v1110
    %3043 = vmatpush.msra.mxu0 %v1108
    %3044 = vmatpush.msra.mxu0 %v1106
    %3045 = vmatpush.msra.mxu0 %v1104
    %3046 = vmatpush.msra.mxu0 %v1102
    %3047 = vmatpush.msra.mxu0 %v1100
    %3048 = vmatpush.msra.mxu0 %v1098
    %3049 = vmatpush.msra.mxu0 %v1096
    %3050 = vmatpush.msra.mxu0 %v1094
    %3051 = vmatpush.msra.mxu0 %v1092
    %3052 = vmatpush.msra.mxu0 %v1090
    %3053 = vmatpush.msra.mxu0 %v1088
    %3054 = vmatpush.msra.mxu0 %v1086
    %3055 = vmatpush.msra.mxu0 %v1084
    %3056 = vmatmul.f32.gmra.mxu0 %v1500
    %v3057 = vpop.f32.mrf.mxu0
    %v3058 = vadd.f32 %v3038, %v3057
    %3059 = vdwg.mxu0
    %3060 = vmatpush.msra.mxu0 %v1146
    %3061 = vmatpush.msra.mxu0 %v1144
    %3062 = vmatpush.msra.mxu0 %v1142
    %3063 = vmatpush.msra.mxu0 %v1140
    %3064 = vmatpush.msra.mxu0 %v1138
    %3065 = vmatpush.msra.mxu0 %v1136
    %3066 = vmatpush.msra.mxu0 %v1134
    %3067 = vmatpush.msra.mxu0 %v1132
    %3068 = vmatpush.msra.mxu0 %v1130
    %3069 = vmatpush.msra.mxu0 %v1128
    %3070 = vmatpush.msra.mxu0 %v1126
    %3071 = vmatpush.msra.mxu0 %v1124
    %3072 = vmatpush.msra.mxu0 %v1122
    %3073 = vmatpush.msra.mxu0 %v1120
    %3074 = vmatpush.msra.mxu0 %v1118
    %3075 = vmatpush.msra.mxu0 %v1116
    %3076 = vmatmul.f32.gmra.mxu0 %v1503
    %v3077 = vpop.f32.mrf.mxu0
    %v3078 = vadd.f32 %v3058, %v3077
    %3079 = vdwg.mxu0
    %3080 = vmatpush.msra.mxu0 %v1178
    %3081 = vmatpush.msra.mxu0 %v1176
    %3082 = vmatpush.msra.mxu0 %v1174
    %3083 = vmatpush.msra.mxu0 %v1172
    %3084 = vmatpush.msra.mxu0 %v1170
    %3085 = vmatpush.msra.mxu0 %v1168
    %3086 = vmatpush.msra.mxu0 %v1166
    %3087 = vmatpush.msra.mxu0 %v1164
    %3088 = vmatpush.msra.mxu0 %v1162
    %3089 = vmatpush.msra.mxu0 %v1160
    %3090 = vmatpush.msra.mxu0 %v1158
    %3091 = vmatpush.msra.mxu0 %v1156
    %3092 = vmatpush.msra.mxu0 %v1154
    %3093 = vmatpush.msra.mxu0 %v1152
    %3094 = vmatpush.msra.mxu0 %v1150
    %3095 = vmatpush.msra.mxu0 %v1148
    %3096 = vmatmul.f32.gmra.mxu0 %v1504
    %v3097 = vpop.f32.mrf.mxu0
    %v3098 = vadd.f32 %v3078, %v3097
    %3099 = vdwg.mxu0
    %3100 = vmatpush.msra.mxu0 %v1210
    %3101 = vmatpush.msra.mxu0 %v1208
    %3102 = vmatpush.msra.mxu0 %v1206
    %3103 = vmatpush.msra.mxu0 %v1204
    %3104 = vmatpush.msra.mxu0 %v1202
    %3105 = vmatpush.msra.mxu0 %v1200
    %3106 = vmatpush.msra.mxu0 %v1198
    %3107 = vmatpush.msra.mxu0 %v1196
    %3108 = vmatpush.msra.mxu0 %v1194
    %3109 = vmatpush.msra.mxu0 %v1192
    %3110 = vmatpush.msra.mxu0 %v1190
    %3111 = vmatpush.msra.mxu0 %v1188
    %3112 = vmatpush.msra.mxu0 %v1186
    %3113 = vmatpush.msra.mxu0 %v1184
    %3114 = vmatpush.msra.mxu0 %v1182
    %3115 = vmatpush.msra.mxu0 %v1180
    %3116 = vmatmul.f32.gmra.mxu0 %v1505
    %v3117 = vpop.f32.mrf.mxu0
    %v3118 = vadd.f32 %v3098, %v3117
    %3119 = vdwg.mxu0
    %3120 = vmatpush.msra.mxu0 %v1242
    %3121 = vmatpush.msra.mxu0 %v1240
    %3122 = vmatpush.msra.mxu0 %v1238
    %3123 = vmatpush.msra.mxu0 %v1236
    %3124 = vmatpush.msra.mxu0 %v1234
    %3125 = vmatpush.msra.mxu0 %v1232
    %3126 = vmatpush.msra.mxu0 %v1230
    %3127 = vmatpush.msra.mxu0 %v1228
    %3128 = vmatpush.msra.mxu0 %v1226
    %3129 = vmatpush.msra.mxu0 %v1224
    %3130 = vmatpush.msra.mxu0 %v1222
    %3131 = vmatpush.msra.mxu0 %v1220
    %3132 = vmatpush.msra.mxu0 %v1218
    %3133 = vmatpush.msra.mxu0 %v1216
    %3134 = vmatpush.msra.mxu0 %v1214
    %3135 = vmatpush.msra.mxu0 %v1212
    %3136 = vmatmul.f32.gmra.mxu0 %v1506
    %v3137 = vpop.f32.mrf.mxu0
    %v3138 = vadd.f32 %v3118, %v3137
    %3139 = vdwg.mxu0
    %3140 = vmatpush.msra.mxu0 %v1274
    %3141 = vmatpush.msra.mxu0 %v1272
    %3142 = vmatpush.msra.mxu0 %v1270
    %3143 = vmatpush.msra.mxu0 %v1268
    %3144 = vmatpush.msra.mxu0 %v1266
    %3145 = vmatpush.msra.mxu0 %v1264
    %3146 = vmatpush.msra.mxu0 %v1262
    %3147 = vmatpush.msra.mxu0 %v1260
    %3148 = vmatpush.msra.mxu0 %v1258
    %3149 = vmatpush.msra.mxu0 %v1256
    %3150 = vmatpush.msra.mxu0 %v1254
    %3151 = vmatpush.msra.mxu0 %v1252
    %3152 = vmatpush.msra.mxu0 %v1250
    %3153 = vmatpush.msra.mxu0 %v1248
    %3154 = vmatpush.msra.mxu0 %v1246
    %3155 = vmatpush.msra.mxu0 %v1244
    %3156 = vmatmul.f32.gmra.mxu0 %v1507
    %v3157 = vpop.f32.mrf.mxu0
    %v3158 = vadd.f32 %v3138, %v3157
    %3159 = vdwg.mxu0
    %3160 = vmatpush.msra.mxu0 %v1306
    %3161 = vmatpush.msra.mxu0 %v1304
    %3162 = vmatpush.msra.mxu0 %v1302
    %3163 = vmatpush.msra.mxu0 %v1300
    %3164 = vmatpush.msra.mxu0 %v1298
    %3165 = vmatpush.msra.mxu0 %v1296
    %3166 = vmatpush.msra.mxu0 %v1294
    %3167 = vmatpush.msra.mxu0 %v1292
    %3168 = vmatpush.msra.mxu0 %v1290
    %3169 = vmatpush.msra.mxu0 %v1288
    %3170 = vmatpush.msra.mxu0 %v1286
    %3171 = vmatpush.msra.mxu0 %v1284
    %3172 = vmatpush.msra.mxu0 %v1282
    %3173 = vmatpush.msra.mxu0 %v1280
    %3174 = vmatpush.msra.mxu0 %v1278
    %3175 = vmatpush.msra.mxu0 %v1276
    %3176 = vmatmul.f32.gmra.mxu0 %v1508
    %v3177 = vpop.f32.mrf.mxu0
    %v3178 = vadd.f32 %v3158, %v3177
    %3179 = vdwg.mxu0
    %3180 = vmatpush.msra.mxu0 %v1338
    %3181 = vmatpush.msra.mxu0 %v1336
    %3182 = vmatpush.msra.mxu0 %v1334
    %3183 = vmatpush.msra.mxu0 %v1332
    %3184 = vmatpush.msra.mxu0 %v1330
    %3185 = vmatpush.msra.mxu0 %v1328
    %3186 = vmatpush.msra.mxu0 %v1326
    %3187 = vmatpush.msra.mxu0 %v1324
    %3188 = vmatpush.msra.mxu0 %v1322
    %3189 = vmatpush.msra.mxu0 %v1320
    %3190 = vmatpush.msra.mxu0 %v1318
    %3191 = vmatpush.msra.mxu0 %v1316
    %3192 = vmatpush.msra.mxu0 %v1314
    %3193 = vmatpush.msra.mxu0 %v1312
    %3194 = vmatpush.msra.mxu0 %v1310
    %3195 = vmatpush.msra.mxu0 %v1308
    %3196 = vmatmul.f32.gmra.mxu0 %v1509
    %v3197 = vpop.f32.mrf.mxu0
    %v3198 = vadd.f32 %v3178, %v3197
    %3199 = vdwg.mxu0
    %3200 = vmatpush.msra.mxu0 %v1370
    %3201 = vmatpush.msra.mxu0 %v1368
    %3202 = vmatpush.msra.mxu0 %v1366
    %3203 = vmatpush.msra.mxu0 %v1364
    %3204 = vmatpush.msra.mxu0 %v1362
    %3205 = vmatpush.msra.mxu0 %v1360
    %3206 = vmatpush.msra.mxu0 %v1358
    %3207 = vmatpush.msra.mxu0 %v1356
    %3208 = vmatpush.msra.mxu0 %v1354
    %3209 = vmatpush.msra.mxu0 %v1352
    %3210 = vmatpush.msra.mxu0 %v1350
    %3211 = vmatpush.msra.mxu0 %v1348
    %3212 = vmatpush.msra.mxu0 %v1346
    %3213 = vmatpush.msra.mxu0 %v1344
    %3214 = vmatpush.msra.mxu0 %v1342
    %3215 = vmatpush.msra.mxu0 %v1340
    %3216 = vmatmul.f32.gmra.mxu0 %v1510
    %v3217 = vpop.f32.mrf.mxu0
    %v3218 = vadd.f32 %v3198, %v3217
    %3219 = vdwg.mxu0
    %3220 = vmatpush.msra.mxu0 %v1402
    %3221 = vmatpush.msra.mxu0 %v1400
    %3222 = vmatpush.msra.mxu0 %v1398
    %3223 = vmatpush.msra.mxu0 %v1396
    %3224 = vmatpush.msra.mxu0 %v1394
    %3225 = vmatpush.msra.mxu0 %v1392
    %3226 = vmatpush.msra.mxu0 %v1390
    %3227 = vmatpush.msra.mxu0 %v1388
    %3228 = vmatpush.msra.mxu0 %v1386
    %3229 = vmatpush.msra.mxu0 %v1384
    %3230 = vmatpush.msra.mxu0 %v1382
    %3231 = vmatpush.msra.mxu0 %v1380
    %3232 = vmatpush.msra.mxu0 %v1378
    %3233 = vmatpush.msra.mxu0 %v1376
    %3234 = vmatpush.msra.mxu0 %v1374
    %3235 = vmatpush.msra.mxu0 %v1372
    %3236 = vmatmul.f32.gmra.mxu0 %v1512
    %v3237 = vpop.f32.mrf.mxu0
    %v3238 = vadd.f32 %v3218, %v3237
    %3239 = vdwg.mxu0
    %3240 = vmatpush.msra.mxu0 %v1434
    %3241 = vmatpush.msra.mxu0 %v1432
    %3242 = vmatpush.msra.mxu0 %v1430
    %3243 = vmatpush.msra.mxu0 %v1428
    %3244 = vmatpush.msra.mxu0 %v1426
    %3245 = vmatpush.msra.mxu0 %v1424
    %3246 = vmatpush.msra.mxu0 %v1422
    %3247 = vmatpush.msra.mxu0 %v1420
    %3248 = vmatpush.msra.mxu0 %v1418
    %3249 = vmatpush.msra.mxu0 %v1416
    %3250 = vmatpush.msra.mxu0 %v1414
    %3251 = vmatpush.msra.mxu0 %v1412
    %3252 = vmatpush.msra.mxu0 %v1410
    %3253 = vmatpush.msra.mxu0 %v1408
    %3254 = vmatpush.msra.mxu0 %v1406
    %3255 = vmatpush.msra.mxu0 %v1404
    %3256 = vmatmul.f32.gmra.mxu0 %v1513
    %v3257 = vpop.f32.mrf.mxu0
    %v3258 = vadd.f32 %v3238, %v3257
    %3259 = vdwg.mxu0
    %3260 = vmatpush.msra.mxu0 0.0
    %3261 = vmatpush.msra.mxu0 0.0
    %3262 = vmatpush.msra.mxu0 0.0
    %3263 = vmatpush.msra.mxu0 0.0
    %3264 = vmatpush.msra.mxu0 0.0
    %3265 = vmatpush.msra.mxu0 0.0
    %3266 = vmatpush.msra.mxu0 0.0
    %3267 = vmatpush.msra.mxu0 0.0
    %3268 = vmatpush.msra.mxu0 0.0
    %3269 = vmatpush.msra.mxu0 0.0
    %3270 = vmatpush.msra.mxu0 0.0
    %3271 = vmatpush.msra.mxu0 0.0
    %3272 = vmatpush.msra.mxu0 %v1442
    %3273 = vmatpush.msra.mxu0 %v1440
    %3274 = vmatpush.msra.mxu0 %v1438
    %3275 = vmatpush.msra.mxu0 %v1436
    %3276 = vmatmul.f32.gmra.mxu0 %v1558
    %v3277 = vpop.f32.mrf.mxu0
    %v3278 = vadd.f32 %v3258, %v3277
    %3279 = vdwg.mxu0
    %v3280 = vmax.f32 %v2418, 0.0
    %v3281 = vmax.f32 %v3278, 0.0
    %v3282 = vld [vmem:[#allocation7] sm:$0xff]
    %v3283 = vld [vmem:[#allocation7 + $0x8] sm:$0xff]
    %v3284 = vld [vmem:[#allocation7 + $0x10] sm:$0xff]
    %v3285 = vld [vmem:[#allocation7 + $0x18] sm:$0xff]
    %v3286 = vld [vmem:[#allocation7 + $0x20] sm:$0xff]
    %v3287 = vld [vmem:[#allocation7 + $0x28] sm:$0xff]
    %v3288 = vld [vmem:[#allocation7 + $0x30] sm:$0xff]
    %v3289 = vld [vmem:[#allocation7 + $0x38] sm:$0xff]
    %v3290 = vld [vmem:[#allocation7 + $0x40] sm:$0xff]
    %v3291 = vld [vmem:[#allocation7 + $0x48] sm:$0xff]
    %v3292 = vld [vmem:[#allocation7 + $0x50] sm:$0xff]
    %v3293 = vld [vmem:[#allocation7 + $0x58] sm:$0xff]
    %v3294 = vld [vmem:[#allocation7 + $0x60] sm:$0xff]
    %v3295 = vld [vmem:[#allocation7 + $0x68] sm:$0xff]
    %v3296 = vld [vmem:[#allocation7 + $0x70] sm:$0xff]
    %v3297 = vld [vmem:[#allocation7 + $0x78] sm:$0xff]
    %v3298 = vld [vmem:[#allocation7 + $0x80] sm:$0xff]
    %v3299 = vld [vmem:[#allocation7 + $0x88] sm:$0xff]
    %v3300 = vld [vmem:[#allocation7 + $0x90] sm:$0xff]
    %v3301 = vld [vmem:[#allocation7 + $0x98] sm:$0xff]
    %v3302 = vld [vmem:[#allocation7 + $0xa0] sm:$0xff]
    %v3303 = vld [vmem:[#allocation7 + $0xa8] sm:$0xff]
    %v3304 = vld [vmem:[#allocation7 + $0xb0] sm:$0xff]
    %v3305 = vld [vmem:[#allocation7 + $0xb8] sm:$0xff]
    %v3306 = vld [vmem:[#allocation7 + $0xc0] sm:$0xff]
    %v3307 = vld [vmem:[#allocation8] sm:$0x1]
    %v3309 = vperm.slane %v3307, 0
    %vm3311 = vcmask 588800
    %v3313 = vsel %vm3311, %v3281, 0
    %3315 = vmatpush.msra.mxu0 %v3297
    %3316 = vmatpush.msra.mxu0 %v3296
    %3317 = vmatpush.msra.mxu0 %v3295
    %3318 = vmatpush.msra.mxu0 %v3294
    %3319 = vmatpush.msra.mxu0 %v3293
    %3320 = vmatpush.msra.mxu0 %v3292
    %3321 = vmatpush.msra.mxu0 %v3291
    %3322 = vmatpush.msra.mxu0 %v3290
    %3323 = vmatpush.msra.mxu0 %v3289
    %3324 = vmatpush.msra.mxu0 %v3288
    %3325 = vmatpush.msra.mxu0 %v3287
    %3326 = vmatpush.msra.mxu0 %v3286
    %3327 = vmatpush.msra.mxu0 %v3285
    %3328 = vmatpush.msra.mxu0 %v3284
    %3329 = vmatpush.msra.mxu0 %v3283
    %3330 = vmatpush.msra.mxu0 %v3282
    %3331 = vmatmul.f32.gmra.mxu0 %v3280
    %v3332 = vpop.f32.mrf.mxu0
    %v3333 = vadd.f32 %v3309, %v3332
    %3334 = vdwg.mxu0
    %3335 = vmatpush.msra.mxu0 0.0
    %3336 = vmatpush.msra.mxu0 0.0
    %3337 = vmatpush.msra.mxu0 0.0
    %3338 = vmatpush.msra.mxu0 0.0
    %3339 = vmatpush.msra.mxu0 0.0
    %3340 = vmatpush.msra.mxu0 0.0
    %3341 = vmatpush.msra.mxu0 0.0
    %3342 = vmatpush.msra.mxu0 %v3306
    %3343 = vmatpush.msra.mxu0 %v3305
    %3344 = vmatpush.msra.mxu0 %v3304
    %3345 = vmatpush.msra.mxu0 %v3303
    %3346 = vmatpush.msra.mxu0 %v3302
    %3347 = vmatpush.msra.mxu0 %v3301
    %3348 = vmatpush.msra.mxu0 %v3300
    %3349 = vmatpush.msra.mxu0 %v3299
    %3350 = vmatpush.msra.mxu0 %v3298
    %3351 = vmatmul.f32.gmra.mxu0 %v3313
    %v3352 = vpop.f32.mrf.mxu0
    %v3353 = vadd.f32 %v3333, %v3352
    %3354 = vdwg.mxu0
    %vm3355 = vcmask 74752
    %3356 = vst.msk [vmem:[#allocation10] sm:$0x3] %vm3355, %v3353
    // Predicated region
    $region38: #{_forward.3} parent=1 // pred_check
      _
    $region39: #{_forward.3} parent=1 // pred_check_branch
      %3358 = sbr.rel (0) target = $region41
    $region40: #{_forward.3} parent=1 // pred_region
      %3360 = vsyncadd [#allocation4], 0
      %s3362 = sshll.u32 [#allocation10], 4
      %s3363 = int_to_ptr.vmem [resolvable:$true] %s3362
      %s3364 = sshll.u32 %s5, 4
      %s3365 = int_to_ptr.hbm [resolvable:$true] %s3364
      %3367 = dma.vmem_to_hbm [thread:$0]  %s3363, 32, %s3365, [#allocation4]
    $region41: #{_forward.3} parent=1 // pred_fallthru
      _
    // Predicated region
    $region42: #{_forward.3} parent=1 // pred_check
      _
    $region43: #{_forward.3} parent=1 // pred_check_branch
      %3369 = sbr.rel (0) target = $region45
    $region44: #{_forward.3} parent=1 // pred_region
      %3371 = dma.done [#allocation4], 32
    $region45: #{_forward.3} parent=1 // pred_fallthru
      _
    %3372 = vsyncpa [#allocation3], 1
    %3373 = vsyncpa [#allocation6], 1
    %3374 = vsyncpa [#allocation9], 1
    %3375 = vsyncpa [#allocation4], 1

</llo_original>
